<compile_context>
chip_gen: v7x
topology: tpu7x:2x2x1
jax: 0.10.0
libtpu: 0.0.40
codegen_flags: <defaults>
</compile_context>

<pallas_src>
import jax
import jax.numpy as jnp
from jax.experimental import pallas as pl
from jax.experimental.pallas import tpu as pltpu

IMG = 784       # flattened MNIST image
HIDDEN = 400    # encoder/decoder hidden width
ZS = 20         # latent size

# Padded, lane/MXU-friendly on-device layout.
H_PAD = 512         # hidden 400 -> 512 (multiple of 128)
ZP = 128            # latent 20 -> 128 (one full lane group)
HEADS = 2 * ZP      # fused [mu | var] head width -> lane-dense [TB, 256] store


def _round_up(x, m):
    return (x + m - 1) // m * m


def _vae_kernel(x_ref, eps_ref, w1_ref, b1_ref, wh_ref, bh_ref,
                wd1_ref, bd1_ref, wd2_ref, bd2_ref,
                xdash_ref, heads_ref):
    # ---- Encoder fc1 + ReLU: bf16 MXU inputs, f32 accumulate, fused f32 epilogue.
    h = jnp.dot(x_ref[...].astype(jnp.bfloat16), w1_ref[...],
                preferred_element_type=jnp.float32)
    h = jnp.maximum(h + b1_ref[...], 0.0)

    # ---- Fused mu|var heads: one [H_PAD, 256] matmul, lane-dense output store.
    heads = jnp.dot(h.astype(jnp.bfloat16), wh_ref[...],
                    preferred_element_type=jnp.float32) + bh_ref[...]
    heads_ref[...] = heads

    mu = heads[:, :ZP]          # padded mu  (cols >= 20 are exactly 0)
    logvar = heads[:, ZP:]      # padded var (cols >= 20 are exactly 0)

    # ---- Reparameterization: z = mu + eps * exp(var / 2)   (exp on the EUP).
    z = mu + eps_ref[...] * jnp.exp(logvar * 0.5)

    # ---- Decoder fc1 + ReLU.
    h2 = jnp.dot(z.astype(jnp.bfloat16), wd1_ref[...],
                 preferred_element_type=jnp.float32)
    h2 = jnp.maximum(h2 + bd1_ref[...], 0.0)

    # ---- Decoder fc2 + Sigmoid.
    logits = jnp.dot(h2.astype(jnp.bfloat16), wd2_ref[...],
                     preferred_element_type=jnp.float32) + bd2_ref[...]
    xdash_ref[...] = jax.nn.sigmoid(logits)


def vae_forward(x, eps, packed, *, max_tile=256):
    """x: [B, 784] f32, eps: [B, 20] f32, packed: tuple from pack_params()."""
    B = x.shape[0]
    TB = min(max_tile, _round_up(B, 8))     # batch tile, multiple of 8 sublanes
    B_pad = _round_up(B, TB)
    nb = B_pad // TB

    x_p = jnp.zeros((B_pad, IMG), jnp.float32).at[:B].set(x.astype(jnp.float32))
    eps_p = jnp.zeros((B_pad, ZP), jnp.float32).at[:B, :ZS].set(
        eps.astype(jnp.float32))

    w1, b1, wh, bh, wd1, bd1, wd2, bd2 = packed

    in_specs = [
        pl.BlockSpec((TB, IMG), lambda i: (i, 0)),        # x tile (pipelined)
        pl.BlockSpec((TB, ZP), lambda i: (i, 0)),         # eps tile (pipelined)
        pl.BlockSpec((IMG, H_PAD), lambda i: (0, 0)),     # enc fc1 W (resident)
        pl.BlockSpec((1, H_PAD), lambda i: (0, 0)),       # enc fc1 b
        pl.BlockSpec((H_PAD, HEADS), lambda i: (0, 0)),   # fused mu|var W
        pl.BlockSpec((1, HEADS), lambda i: (0, 0)),       # fused mu|var b
        pl.BlockSpec((ZP, H_PAD), lambda i: (0, 0)),      # dec fc1 W
        pl.BlockSpec((1, H_PAD), lambda i: (0, 0)),       # dec fc1 b
        pl.BlockSpec((H_PAD, IMG), lambda i: (0, 0)),     # dec fc2 W
        pl.BlockSpec((1, IMG), lambda i: (0, 0)),         # dec fc2 b
    ]
    out_specs = (
        pl.BlockSpec((TB, IMG), lambda i: (i, 0)),        # x_dash
        pl.BlockSpec((TB, HEADS), lambda i: (i, 0)),      # [mu | var] padded slab
    )
    out_shape = (
        jax.ShapeDtypeStruct((B_pad, IMG), jnp.float32),
        jax.ShapeDtypeStruct((B_pad, HEADS), jnp.float32),
    )

    weight_bytes = sum(int(a.size) * a.dtype.itemsize for a in packed)
    cost = pl.CostEstimate(
        flops=2 * B_pad * (IMG * H_PAD + H_PAD * HEADS + ZP * H_PAD + H_PAD * IMG),
        transcendentals=B_pad * (ZP + IMG),
        bytes_accessed=(int(x_p.size) * 4 + int(eps_p.size) * 4 + weight_bytes
                        + B_pad * (IMG + HEADS) * 4),
    )

    x_dash, heads = pl.pallas_call(
        _vae_kernel,
        out_shape=out_shape,
        grid_spec=pltpu.PrefetchScalarGridSpec(
            num_scalar_prefetch=0,
            grid=(nb,),
            in_specs=in_specs,
            out_specs=out_specs,
        ),
        compiler_params=pltpu.CompilerParams(
            dimension_semantics=("parallel",)),
        cost_estimate=cost,
    )(x_p, eps_p, w1, b1, wh, bh, wd1, bd1, wd2, bd2)

    z_mu = heads[:B, :ZS]
    z_var = heads[:B, ZP:ZP + ZS]
    return x_dash[:B], z_mu, z_var


def init_params(key):
    """PyTorch-style uniform init; weights stored [in, out], cast to bf16."""
    def linear(k, fan_in, fan_out):
        kw, kb = jax.random.split(k)
        bound = 1.0 / (fan_in ** 0.5)
        w = jax.random.uniform(kw, (fan_in, fan_out), jnp.float32, -bound, bound)
        b = jax.random.uniform(kb, (fan_out,), jnp.float32, -bound, bound)
        return w.astype(jnp.bfloat16), b   # bf16 weights, f32 biases

    k1, k2, k3, k4, k5 = jax.random.split(key, 5)
    w_e1, b_e1 = linear(k1, IMG, HIDDEN)
    w_mu, b_mu = linear(k2, HIDDEN, ZS)
    w_var, b_var = linear(k3, HIDDEN, ZS)
    w_d1, b_d1 = linear(k4, ZS, HIDDEN)
    w_d2, b_d2 = linear(k5, HIDDEN, IMG)
    return dict(w_e1=w_e1, b_e1=b_e1, w_mu=w_mu, b_mu=b_mu,
                w_var=w_var, b_var=b_var,
                w_d1=w_d1, b_d1=b_d1, w_d2=w_d2, b_d2=b_d2)


def pack_params(p):
    """Pad / concatenate logical weights into bf16, lane-dense kernel blocks."""
    w1 = jnp.zeros((IMG, H_PAD), jnp.bfloat16).at[:, :HIDDEN].set(p["w_e1"])
    b1 = jnp.zeros((1, H_PAD), jnp.float32).at[0, :HIDDEN].set(p["b_e1"])
    wh = (jnp.zeros((H_PAD, HEADS), jnp.bfloat16)
          .at[:HIDDEN, :ZS].set(p["w_mu"])
          .at[:HIDDEN, ZP:ZP + ZS].set(p["w_var"]))
    bh = (jnp.zeros((1, HEADS), jnp.float32)
          .at[0, :ZS].set(p["b_mu"])
          .at[0, ZP:ZP + ZS].set(p["b_var"]))
    wd1 = jnp.zeros((ZP, H_PAD), jnp.bfloat16).at[:ZS, :HIDDEN].set(p["w_d1"])
    bd1 = jnp.zeros((1, H_PAD), jnp.float32).at[0, :HIDDEN].set(p["b_d1"])
    wd2 = jnp.zeros((H_PAD, IMG), jnp.bfloat16).at[:HIDDEN, :].set(p["w_d2"])
    bd2 = p["b_d2"].reshape(1, IMG).astype(jnp.float32)
    return (w1, b1, wh, bh, wd1, bd1, wd2, bd2)


def vae_ref(x, eps, p):
    """Pure-JAX reference (same bf16-stored weights, f32 math)."""
    f = lambda w: w.astype(jnp.float32)
    h = jnp.maximum(x @ f(p["w_e1"]) + p["b_e1"], 0.0)
    z_mu = h @ f(p["w_mu"]) + p["b_mu"]
    z_var = h @ f(p["w_var"]) + p["b_var"]
    z = z_mu + eps * jnp.exp(z_var * 0.5)
    h2 = jnp.maximum(z @ f(p["w_d1"]) + p["b_d1"], 0.0)
    x_dash = jax.nn.sigmoid(h2 @ f(p["w_d2"]) + p["b_d2"])
    return x_dash, z_mu, z_var


if __name__ == "__main__":
    key = jax.random.PRNGKey(0)
    k_params, k_x, k_eps = jax.random.split(key, 3)
    params = init_params(k_params)
    packed = pack_params(params)

    batch = 16
    x = jax.random.normal(k_x, (batch, IMG), jnp.float32)
    eps = jax.random.normal(k_eps, (batch, ZS), jnp.float32)

    x_dash, z_mu, z_var = vae_forward(x, eps, packed)
    jax.block_until_ready((x_dash, z_mu, z_var))

    ref_xd, ref_mu, ref_var = vae_ref(x, eps, params)
    assert x_dash.shape == (batch, IMG)
    assert z_mu.shape == (batch, ZS) and z_var.shape == (batch, ZS)
    assert jnp.allclose(z_mu, ref_mu, atol=2e-2, rtol=2e-2)
    assert jnp.allclose(z_var, ref_var, atol=2e-2, rtol=2e-2)
    assert jnp.allclose(x_dash, ref_xd, atol=2e-2, rtol=2e-2)

    print("KERNEL_OK")
</pallas_src>

<mosaic_0001>
module attributes {stable_mosaic.version = 11 : i64} {
  func.func @_vae_kernel(%arg0: i32, %arg1: memref<16x784xf32, #tpu.memory_space<vmem>>, %arg2: memref<16x128xf32, #tpu.memory_space<vmem>>, %arg3: memref<784x512xbf16, #tpu.memory_space<vmem>>, %arg4: memref<1x512xf32, #tpu.memory_space<vmem>>, %arg5: memref<512x256xbf16, #tpu.memory_space<vmem>>, %arg6: memref<1x256xf32, #tpu.memory_space<vmem>>, %arg7: memref<128x512xbf16, #tpu.memory_space<vmem>>, %arg8: memref<1x512xf32, #tpu.memory_space<vmem>>, %arg9: memref<512x784xbf16, #tpu.memory_space<vmem>>, %arg10: memref<1x784xf32, #tpu.memory_space<vmem>>, %arg11: memref<16x784xf32, #tpu.memory_space<vmem>>, %arg12: memref<16x256xf32, #tpu.memory_space<vmem>>) attributes {dimension_semantics = [#tpu.dimension_semantics<parallel>], iteration_bounds = array<i64: 1>, scalar_prefetch = 0 : i64, scratch_operands = 0 : i64, tpu.core_type = #tpu.core_type<tc>, window_params = [{transform_indices = @transform_0, window_bounds = array<i64: 16, 784>}, {transform_indices = @transform_1, window_bounds = array<i64: 16, 128>}, {pipeline_mode = #tpu.pipeline_mode<synchronous>, transform_indices = @transform_2, window_bounds = array<i64: 784, 512>}, {pipeline_mode = #tpu.pipeline_mode<synchronous>, transform_indices = @transform_3, window_bounds = array<i64: 1, 512>}, {pipeline_mode = #tpu.pipeline_mode<synchronous>, transform_indices = @transform_4, window_bounds = array<i64: 512, 256>}, {pipeline_mode = #tpu.pipeline_mode<synchronous>, transform_indices = @transform_5, window_bounds = array<i64: 1, 256>}, {pipeline_mode = #tpu.pipeline_mode<synchronous>, transform_indices = @transform_6, window_bounds = array<i64: 128, 512>}, {pipeline_mode = #tpu.pipeline_mode<synchronous>, transform_indices = @transform_7, window_bounds = array<i64: 1, 512>}, {pipeline_mode = #tpu.pipeline_mode<synchronous>, transform_indices = @transform_8, window_bounds = array<i64: 512, 784>}, {pipeline_mode = #tpu.pipeline_mode<synchronous>, transform_indices = @transform_9, window_bounds = array<i64: 1, 784>}, {transform_indices = @transform_10, window_bounds = array<i64: 16, 784>}, {transform_indices = @transform_11, window_bounds = array<i64: 16, 256>}]} {
    %c0 = arith.constant 0 : index
    %c0_0 = arith.constant 0 : index
    %0 = vector.load %arg1[%c0, %c0_0] : memref<16x784xf32, #tpu.memory_space<vmem>>, vector<16x784xf32>
    %1 = arith.truncf %0 : vector<16x784xf32> to vector<16x784xbf16>
    %c0_1 = arith.constant 0 : index
    %c0_2 = arith.constant 0 : index
    %2 = vector.load %arg3[%c0_1, %c0_2] : memref<784x512xbf16, #tpu.memory_space<vmem>>, vector<784x512xbf16>
    %cst = arith.constant dense<0.000000e+00> : vector<16x512xf32>
    %3 = tpu.matmul %1, %2, %cst {dimension_numbers = #tpu.dot_dimension_numbers<[1], [0], [0], [1], [0, 0, 1, 1], [], []>} : vector<16x784xbf16>, vector<784x512xbf16>, vector<16x512xf32> -> vector<16x512xf32>
    %c0_3 = arith.constant 0 : index
    %c0_4 = arith.constant 0 : index
    %4 = vector.load %arg4[%c0_3, %c0_4] : memref<1x512xf32, #tpu.memory_space<vmem>>, vector<1x512xf32>
    %5 = vector.broadcast %4 : vector<1x512xf32> to vector<16x512xf32>
    %6 = arith.addf %3, %5 : vector<16x512xf32>
    %cst_5 = arith.constant 0.000000e+00 : f32
    %7 = vector.broadcast %cst_5 : f32 to vector<16x512xf32>
    %8 = arith.maximumf %6, %7 : vector<16x512xf32>
    %9 = arith.truncf %8 : vector<16x512xf32> to vector<16x512xbf16>
    %c0_6 = arith.constant 0 : index
    %c0_7 = arith.constant 0 : index
    %10 = vector.load %arg5[%c0_6, %c0_7] : memref<512x256xbf16, #tpu.memory_space<vmem>>, vector<512x256xbf16>
    %cst_8 = arith.constant dense<0.000000e+00> : vector<16x256xf32>
    %11 = tpu.matmul %9, %10, %cst_8 {dimension_numbers = #tpu.dot_dimension_numbers<[1], [0], [0], [1], [0, 0, 1, 1], [], []>} : vector<16x512xbf16>, vector<512x256xbf16>, vector<16x256xf32> -> vector<16x256xf32>
    %c0_9 = arith.constant 0 : index
    %c0_10 = arith.constant 0 : index
    %12 = vector.load %arg6[%c0_9, %c0_10] : memref<1x256xf32, #tpu.memory_space<vmem>>, vector<1x256xf32>
    %13 = vector.broadcast %12 : vector<1x256xf32> to vector<16x256xf32>
    %14 = arith.addf %11, %13 : vector<16x256xf32>
    %c0_11 = arith.constant 0 : index
    %c0_12 = arith.constant 0 : index
    %15 = vector.load %arg12[%c0_11, %c0_12] : memref<16x256xf32, #tpu.memory_space<vmem>>, vector<16x256xf32>
    tpu.vector_store %arg12[%c0_11, %c0_12], %14 {strides = array<i32>} : memref<16x256xf32, #tpu.memory_space<vmem>>, vector<16x256xf32>,
    %16 = vector.extract_strided_slice %14 {offsets = [0, 0], sizes = [16, 128], strides = [1, 1]} : vector<16x256xf32> to vector<16x128xf32>
    %17 = vector.extract_strided_slice %14 {offsets = [0, 128], sizes = [16, 128], strides = [1, 1]} : vector<16x256xf32> to vector<16x128xf32>
    %c0_13 = arith.constant 0 : index
    %c0_14 = arith.constant 0 : index
    %18 = vector.load %arg2[%c0_13, %c0_14] : memref<16x128xf32, #tpu.memory_space<vmem>>, vector<16x128xf32>
    %cst_15 = arith.constant 5.000000e-01 : f32
    %19 = vector.broadcast %cst_15 : f32 to vector<16x128xf32>
    %20 = arith.mulf %17, %19 : vector<16x128xf32>
    %21 = math.exp %20 : vector<16x128xf32>
    %22 = arith.mulf %18, %21 : vector<16x128xf32>
    %23 = arith.addf %16, %22 : vector<16x128xf32>
    %24 = arith.truncf %23 : vector<16x128xf32> to vector<16x128xbf16>
    %c0_16 = arith.constant 0 : index
    %c0_17 = arith.constant 0 : index
    %25 = vector.load %arg7[%c0_16, %c0_17] : memref<128x512xbf16, #tpu.memory_space<vmem>>, vector<128x512xbf16>
    %cst_18 = arith.constant dense<0.000000e+00> : vector<16x512xf32>
    %26 = tpu.matmul %24, %25, %cst_18 {dimension_numbers = #tpu.dot_dimension_numbers<[1], [0], [0], [1], [0, 0, 1, 1], [], []>} : vector<16x128xbf16>, vector<128x512xbf16>, vector<16x512xf32> -> vector<16x512xf32>
    %c0_19 = arith.constant 0 : index
    %c0_20 = arith.constant 0 : index
    %27 = vector.load %arg8[%c0_19, %c0_20] : memref<1x512xf32, #tpu.memory_space<vmem>>, vector<1x512xf32>
    %28 = vector.broadcast %27 : vector<1x512xf32> to vector<16x512xf32>
    %29 = arith.addf %26, %28 : vector<16x512xf32>
    %cst_21 = arith.constant 0.000000e+00 : f32
    %30 = vector.broadcast %cst_21 : f32 to vector<16x512xf32>
    %31 = arith.maximumf %29, %30 : vector<16x512xf32>
    %32 = arith.truncf %31 : vector<16x512xf32> to vector<16x512xbf16>
    %c0_22 = arith.constant 0 : index
    %c0_23 = arith.constant 0 : index
    %33 = vector.load %arg9[%c0_22, %c0_23] : memref<512x784xbf16, #tpu.memory_space<vmem>>, vector<512x784xbf16>
    %cst_24 = arith.constant dense<0.000000e+00> : vector<16x784xf32>
    %34 = tpu.matmul %32, %33, %cst_24 {dimension_numbers = #tpu.dot_dimension_numbers<[1], [0], [0], [1], [0, 0, 1, 1], [], []>} : vector<16x512xbf16>, vector<512x784xbf16>, vector<16x784xf32> -> vector<16x784xf32>
    %c0_25 = arith.constant 0 : index
    %c0_26 = arith.constant 0 : index
    %35 = vector.load %arg10[%c0_25, %c0_26] : memref<1x784xf32, #tpu.memory_space<vmem>>, vector<1x784xf32>
    %36 = vector.broadcast %35 : vector<1x784xf32> to vector<16x784xf32>
    %37 = arith.addf %34, %36 : vector<16x784xf32>
    %38 = arith.negf %37 : vector<16x784xf32>
    %39 = math.exp %38 : vector<16x784xf32>
    %cst_27 = arith.constant 1.000000e+00 : f32
    %40 = vector.broadcast %cst_27 : f32 to vector<16x784xf32>
    %41 = arith.addf %40, %39 : vector<16x784xf32>
    %42 = arith.divf %40, %41 : vector<16x784xf32>
    %c0_28 = arith.constant 0 : index
    %c0_29 = arith.constant 0 : index
    %43 = vector.load %arg11[%c0_28, %c0_29] : memref<16x784xf32, #tpu.memory_space<vmem>>, vector<16x784xf32>
    tpu.vector_store %arg11[%c0_28, %c0_29], %42 {strides = array<i32>} : memref<16x784xf32, #tpu.memory_space<vmem>>, vector<16x784xf32>,
    return
  }
  func.func @transform_0(%arg0: i32) -> (i32, i32) {
    %c0_i32 = arith.constant 0 : i32
    %c0_i32_0 = arith.constant 0 : i32
    return %arg0, %c0_i32 : i32, i32
  }
  func.func @transform_1(%arg0: i32) -> (i32, i32) {
    %c0_i32 = arith.constant 0 : i32
    %c0_i32_0 = arith.constant 0 : i32
    return %arg0, %c0_i32 : i32, i32
  }
  func.func @transform_2(%arg0: i32) -> (i32, i32) {
    %c0_i32 = arith.constant 0 : i32
    %c0_i32_0 = arith.constant 0 : i32
    %c0_i32_1 = arith.constant 0 : i32
    return %c0_i32, %c0_i32_0 : i32, i32
  }
  func.func @transform_3(%arg0: i32) -> (i32, i32) {
    %c0_i32 = arith.constant 0 : i32
    %c0_i32_0 = arith.constant 0 : i32
    %c0_i32_1 = arith.constant 0 : i32
    return %c0_i32, %c0_i32_0 : i32, i32
  }
  func.func @transform_4(%arg0: i32) -> (i32, i32) {
    %c0_i32 = arith.constant 0 : i32
    %c0_i32_0 = arith.constant 0 : i32
    %c0_i32_1 = arith.constant 0 : i32
    return %c0_i32, %c0_i32_0 : i32, i32
  }
  func.func @transform_5(%arg0: i32) -> (i32, i32) {
    %c0_i32 = arith.constant 0 : i32
    %c0_i32_0 = arith.constant 0 : i32
    %c0_i32_1 = arith.constant 0 : i32
    return %c0_i32, %c0_i32_0 : i32, i32
  }
  func.func @transform_6(%arg0: i32) -> (i32, i32) {
    %c0_i32 = arith.constant 0 : i32
    %c0_i32_0 = arith.constant 0 : i32
    %c0_i32_1 = arith.constant 0 : i32
    return %c0_i32, %c0_i32_0 : i32, i32
  }
  func.func @transform_7(%arg0: i32) -> (i32, i32) {
    %c0_i32 = arith.constant 0 : i32
    %c0_i32_0 = arith.constant 0 : i32
    %c0_i32_1 = arith.constant 0 : i32
    return %c0_i32, %c0_i32_0 : i32, i32
  }
  func.func @transform_8(%arg0: i32) -> (i32, i32) {
    %c0_i32 = arith.constant 0 : i32
    %c0_i32_0 = arith.constant 0 : i32
    %c0_i32_1 = arith.constant 0 : i32
    return %c0_i32, %c0_i32_0 : i32, i32
  }
  func.func @transform_9(%arg0: i32) -> (i32, i32) {
    %c0_i32 = arith.constant 0 : i32
    %c0_i32_0 = arith.constant 0 : i32
    %c0_i32_1 = arith.constant 0 : i32
    return %c0_i32, %c0_i32_0 : i32, i32
  }
  func.func @transform_10(%arg0: i32) -> (i32, i32) {
    %c0_i32 = arith.constant 0 : i32
    %c0_i32_0 = arith.constant 0 : i32
    return %arg0, %c0_i32 : i32, i32
  }
  func.func @transform_11(%arg0: i32) -> (i32, i32) {
    %c0_i32 = arith.constant 0 : i32
    %c0_i32_0 = arith.constant 0 : i32
    return %arg0, %c0_i32 : i32, i32
  }
}

</mosaic_0001>

<llo_original>
// kernel: tpu_custom_call.1
$region0: #{tpu_custom_call.1}
  #allocation0 [shape = 'u32[]', space=smem, size = 0x4, offset = 0x4, fixed_abs, tag = 'smem constant byte address 0x4 - core index']
  #allocation1 [shape = 'u32[144,128]{1,0:T(1,128)}', space=vmem, size = 0x12000, scoped, tag = 'internal scratch']
  %s0 = inlined_call_operand.vmem [shape: f32[16,784], index: 0, kind: input, shape index: {}]
  %s1 = inlined_call_operand.vmem [shape: f32[16,128], index: 1, kind: input, shape index: {}]
  %s2 = inlined_call_operand.vmem [shape: bf16[784,512], index: 2, kind: input, shape index: {}]
  %s3 = inlined_call_operand.vmem [shape: f32[1,512], index: 3, kind: input, shape index: {}]
  %s4 = inlined_call_operand.vmem [shape: bf16[512,256], index: 4, kind: input, shape index: {}]
  %s5 = inlined_call_operand.vmem [shape: f32[1,256], index: 5, kind: input, shape index: {}]
  %s6 = inlined_call_operand.vmem [shape: bf16[128,512], index: 6, kind: input, shape index: {}]
  %s7 = inlined_call_operand.vmem [shape: f32[1,512], index: 7, kind: input, shape index: {}]
  %s8 = inlined_call_operand.vmem [shape: bf16[512,784], index: 8, kind: input, shape index: {}]
  %s9 = inlined_call_operand.vmem [shape: f32[1,784], index: 9, kind: input, shape index: {}]
  %s10 = inlined_call_operand.hbm [shape: f32[16,784], index: 10, kind: output, shape index: {0}]
  %s11 = inlined_call_operand.hbm [shape: f32[16,256], index: 11, kind: output, shape index: {1}]
  %12 = xla_tuple %s10, %s11
  %s13 = sld [smem:[#allocation0]]
  $region58: #{tpu_custom_call.1} parent=0
    _
  %s15 = ssub.s32 1, %s13
  %s16 = scalar_select 0, %s15, %s13
  $region1: #{tpu_custom_call.1} parent=0
    #allocation2 [shape = 'u8[57344]{0}', space=vmem, size = 0xe000, scoped, tag = 'output window, operand 0, single buffered']
    #allocation3 [shape = 's32[1]{0}', space=sflag, size = 0x4, scoped, tag = 'scoped memory for tpu_custom_call.1']
    #allocation4 [shape = 'u8[16384]{0}', space=vmem, size = 0x4000, scoped, tag = 'output window, operand 1, single buffered']
    #allocation5 [shape = 's32[1]{0}', space=sflag, size = 0x4, scoped, tag = 'scoped memory for tpu_custom_call.1']
    %17 = vsyncpa [#allocation3], 0
    %18 = vsyncpa [#allocation5], 0
    // Predicated region
    $region2: #{tpu_custom_call.1} parent=1 // pred_check
      _
    $region3: #{tpu_custom_call.1} parent=1 // pred_check_branch
      %20 = sbr.rel (0) target = $region5
    $region4: #{tpu_custom_call.1} parent=1 // pred_region
      _
    $region5: #{tpu_custom_call.1} parent=1 // pred_fallthru
      _
    // Predicated region
    $region6: #{tpu_custom_call.1} parent=1 // pred_check
      _
    $region7: #{tpu_custom_call.1} parent=1 // pred_check_branch
      %22 = sbr.rel (0) target = $region9
    $region8: #{tpu_custom_call.1} parent=1 // pred_region
      _
    $region9: #{tpu_custom_call.1} parent=1 // pred_fallthru
      _
    // Predicated region
    $region10: #{tpu_custom_call.1} parent=1 // pred_check
      _
    $region11: #{tpu_custom_call.1} parent=1 // pred_check_branch
      %24 = sbr.rel (0) target = $region13
    $region12: #{tpu_custom_call.1} parent=1 // pred_region
      _
    $region13: #{tpu_custom_call.1} parent=1 // pred_fallthru
      _
    // Predicated region
    $region14: #{tpu_custom_call.1} parent=1 // pred_check
      _
    $region15: #{tpu_custom_call.1} parent=1 // pred_check_branch
      %26 = sbr.rel (0) target = $region17
    $region16: #{tpu_custom_call.1} parent=1 // pred_region
      _
    $region17: #{tpu_custom_call.1} parent=1 // pred_fallthru
      _
    // Predicated region
    $region18: #{tpu_custom_call.1} parent=1 // pred_check
      _
    $region19: #{tpu_custom_call.1} parent=1 // pred_check_branch
      %28 = sbr.rel (0) target = $region21
    $region20: #{tpu_custom_call.1} parent=1 // pred_region
      _
    $region21: #{tpu_custom_call.1} parent=1 // pred_fallthru
      _
    // Predicated region
    $region22: #{tpu_custom_call.1} parent=1 // pred_check
      _
    $region23: #{tpu_custom_call.1} parent=1 // pred_check_branch
      %30 = sbr.rel (0) target = $region25
    $region24: #{tpu_custom_call.1} parent=1 // pred_region
      _
    $region25: #{tpu_custom_call.1} parent=1 // pred_fallthru
      _
    // Predicated region
    $region26: #{tpu_custom_call.1} parent=1 // pred_check
      _
    $region27: #{tpu_custom_call.1} parent=1 // pred_check_branch
      %32 = sbr.rel (0) target = $region29
    $region28: #{tpu_custom_call.1} parent=1 // pred_region
      _
    $region29: #{tpu_custom_call.1} parent=1 // pred_fallthru
      _
    // Predicated region
    $region30: #{tpu_custom_call.1} parent=1 // pred_check
      _
    $region31: #{tpu_custom_call.1} parent=1 // pred_check_branch
      %34 = sbr.rel (0) target = $region33
    $region32: #{tpu_custom_call.1} parent=1 // pred_region
      _
    $region33: #{tpu_custom_call.1} parent=1 // pred_fallthru
      _
    // Predicated region
    $region34: #{tpu_custom_call.1} parent=1 // pred_check
      _
    $region35: #{tpu_custom_call.1} parent=1 // pred_check_branch
      %36 = sbr.rel (0) target = $region37
    $region36: #{tpu_custom_call.1} parent=1 // pred_region
      _
    $region37: #{tpu_custom_call.1} parent=1 // pred_fallthru
      _
    // Predicated region
    $region38: #{tpu_custom_call.1} parent=1 // pred_check
      _
    $region39: #{tpu_custom_call.1} parent=1 // pred_check_branch
      %38 = sbr.rel (0) target = $region41
    $region40: #{tpu_custom_call.1} parent=1 // pred_region
      _
    $region41: #{tpu_custom_call.1} parent=1 // pred_fallthru
      _
    %v40 = vld [vmem:[%s0] sm:$0xff]
    %v41 = vld [vmem:[%s0 + $0x8] sm:$0xff]
    %v42 = vld [vmem:[%s0 + $0x10] sm:$0xff]
    %v43 = vld [vmem:[%s0 + $0x18] sm:$0xff]
    %v44 = vld [vmem:[%s0 + $0x20] sm:$0xff]
    %v45 = vld [vmem:[%s0 + $0x28] sm:$0xff]
    %v46 = vld [vmem:[%s0 + $0x30] sm:$0xff]
    %v47 = vld [vmem:[%s0 + $0x38] sm:$0xff]
    %v48 = vld [vmem:[%s0 + $0x40] sm:$0xff]
    %v49 = vld [vmem:[%s0 + $0x48] sm:$0xff]
    %v50 = vld [vmem:[%s0 + $0x50] sm:$0xff]
    %v51 = vld [vmem:[%s0 + $0x58] sm:$0xff]
    %v52 = vld [vmem:[%s0 + $0x60] sm:$0xff]
    %v53 = vld [vmem:[%s0 + $0x68] sm:$0xff]
    %v54 = vpack.c.bf16 %v47, %v40
    %v55 = vpack.c.bf16 %v48, %v41
    %v56 = vpack.c.bf16 %v49, %v42
    %v57 = vpack.c.bf16 %v50, %v43
    %v58 = vpack.c.bf16 %v51, %v44
    %v59 = vpack.c.bf16 %v52, %v45
    %v60 = vpack.c.bf16 %v53, %v46
    %v61 = vld [vmem:[%s2] sm:$0xff]
    %v62 = vld [vmem:[%s2 + $0x8] sm:$0xff]
    %v63 = vld [vmem:[%s2 + $0x10] sm:$0xff]
    %v64 = vld [vmem:[%s2 + $0x18] sm:$0xff]
    %v65 = vld [vmem:[%s2 + $0x20] sm:$0xff]
    %v66 = vld [vmem:[%s2 + $0x28] sm:$0xff]
    %v67 = vld [vmem:[%s2 + $0x30] sm:$0xff]
    %v68 = vld [vmem:[%s2 + $0x38] sm:$0xff]
    %v69 = vld [vmem:[%s2 + $0x40] sm:$0xff]
    %v70 = vld [vmem:[%s2 + $0x48] sm:$0xff]
    %v71 = vld [vmem:[%s2 + $0x50] sm:$0xff]
    %v72 = vld [vmem:[%s2 + $0x58] sm:$0xff]
    %v73 = vld [vmem:[%s2 + $0x60] sm:$0xff]
    %v74 = vld [vmem:[%s2 + $0x68] sm:$0xff]
    %v75 = vld [vmem:[%s2 + $0x70] sm:$0xff]
    %v76 = vld [vmem:[%s2 + $0x78] sm:$0xff]
    %v77 = vld [vmem:[%s2 + $0x80] sm:$0xff]
    %v78 = vld [vmem:[%s2 + $0x88] sm:$0xff]
    %v79 = vld [vmem:[%s2 + $0x90] sm:$0xff]
    %v80 = vld [vmem:[%s2 + $0x98] sm:$0xff]
    %v81 = vld [vmem:[%s2 + $0xa0] sm:$0xff]
    %v82 = vld [vmem:[%s2 + $0xa8] sm:$0xff]
    %v83 = vld [vmem:[%s2 + $0xb0] sm:$0xff]
    %v84 = vld [vmem:[%s2 + $0xb8] sm:$0xff]
    %v85 = vld [vmem:[%s2 + $0xc0] sm:$0xff]
    %v86 = vld [vmem:[%s2 + $0xc8] sm:$0xff]
    %v87 = vld [vmem:[%s2 + $0xd0] sm:$0xff]
    %v88 = vld [vmem:[%s2 + $0xd8] sm:$0xff]
    %v89 = vld [vmem:[%s2 + $0xe0] sm:$0xff]
    %v90 = vld [vmem:[%s2 + $0xe8] sm:$0xff]
    %v91 = vld [vmem:[%s2 + $0xf0] sm:$0xff]
    %v92 = vld [vmem:[%s2 + $0xf8] sm:$0xff]
    %v93 = vld [vmem:[%s2 + $0x100] sm:$0xff]
    %v94 = vld [vmem:[%s2 + $0x108] sm:$0xff]
    %v95 = vld [vmem:[%s2 + $0x110] sm:$0xff]
    %v96 = vld [vmem:[%s2 + $0x118] sm:$0xff]
    %v97 = vld [vmem:[%s2 + $0x120] sm:$0xff]
    %v98 = vld [vmem:[%s2 + $0x128] sm:$0xff]
    %v99 = vld [vmem:[%s2 + $0x130] sm:$0xff]
    %v100 = vld [vmem:[%s2 + $0x138] sm:$0xff]
    %v101 = vld [vmem:[%s2 + $0x140] sm:$0xff]
    %v102 = vld [vmem:[%s2 + $0x148] sm:$0xff]
    %v103 = vld [vmem:[%s2 + $0x150] sm:$0xff]
    %v104 = vld [vmem:[%s2 + $0x158] sm:$0xff]
    %v105 = vld [vmem:[%s2 + $0x160] sm:$0xff]
    %v106 = vld [vmem:[%s2 + $0x168] sm:$0xff]
    %v107 = vld [vmem:[%s2 + $0x170] sm:$0xff]
    %v108 = vld [vmem:[%s2 + $0x178] sm:$0xff]
    %v109 = vld [vmem:[%s2 + $0x180] sm:$0xff]
    %v110 = vld [vmem:[%s2 + $0x188] sm:$0xff]
    %v111 = vld [vmem:[%s2 + $0x190] sm:$0xff]
    %v112 = vld [vmem:[%s2 + $0x198] sm:$0xff]
    %v113 = vld [vmem:[%s2 + $0x1a0] sm:$0xff]
    %v114 = vld [vmem:[%s2 + $0x1a8] sm:$0xff]
    %v115 = vld [vmem:[%s2 + $0x1b0] sm:$0xff]
    %v116 = vld [vmem:[%s2 + $0x1b8] sm:$0xff]
    %v117 = vld [vmem:[%s2 + $0x1c0] sm:$0xff]
    %v118 = vld [vmem:[%s2 + $0x1c8] sm:$0xff]
    %v119 = vld [vmem:[%s2 + $0x1d0] sm:$0xff]
    %v120 = vld [vmem:[%s2 + $0x1d8] sm:$0xff]
    %v121 = vld [vmem:[%s2 + $0x1e0] sm:$0xff]
    %v122 = vld [vmem:[%s2 + $0x1e8] sm:$0xff]
    %v123 = vld [vmem:[%s2 + $0x1f0] sm:$0xff]
    %v124 = vld [vmem:[%s2 + $0x1f8] sm:$0xff]
    %v125 = vld [vmem:[%s2 + $0x200] sm:$0xff]
    %v126 = vld [vmem:[%s2 + $0x208] sm:$0xff]
    %v127 = vld [vmem:[%s2 + $0x210] sm:$0xff]
    %v128 = vld [vmem:[%s2 + $0x218] sm:$0xff]
    %v129 = vld [vmem:[%s2 + $0x220] sm:$0xff]
    %v130 = vld [vmem:[%s2 + $0x228] sm:$0xff]
    %v131 = vld [vmem:[%s2 + $0x230] sm:$0xff]
    %v132 = vld [vmem:[%s2 + $0x238] sm:$0xff]
    %v133 = vld [vmem:[%s2 + $0x240] sm:$0xff]
    %v134 = vld [vmem:[%s2 + $0x248] sm:$0xff]
    %v135 = vld [vmem:[%s2 + $0x250] sm:$0xff]
    %v136 = vld [vmem:[%s2 + $0x258] sm:$0xff]
    %v137 = vld [vmem:[%s2 + $0x260] sm:$0xff]
    %v138 = vld [vmem:[%s2 + $0x268] sm:$0xff]
    %v139 = vld [vmem:[%s2 + $0x270] sm:$0xff]
    %v140 = vld [vmem:[%s2 + $0x278] sm:$0xff]
    %v141 = vld [vmem:[%s2 + $0x280] sm:$0xff]
    %v142 = vld [vmem:[%s2 + $0x288] sm:$0xff]
    %v143 = vld [vmem:[%s2 + $0x290] sm:$0xff]
    %v144 = vld [vmem:[%s2 + $0x298] sm:$0xff]
    %v145 = vld [vmem:[%s2 + $0x2a0] sm:$0xff]
    %v146 = vld [vmem:[%s2 + $0x2a8] sm:$0xff]
    %v147 = vld [vmem:[%s2 + $0x2b0] sm:$0xff]
    %v148 = vld [vmem:[%s2 + $0x2b8] sm:$0xff]
    %v149 = vld [vmem:[%s2 + $0x2c0] sm:$0xff]
    %v150 = vld [vmem:[%s2 + $0x2c8] sm:$0xff]
    %v151 = vld [vmem:[%s2 + $0x2d0] sm:$0xff]
    %v152 = vld [vmem:[%s2 + $0x2d8] sm:$0xff]
    %v153 = vld [vmem:[%s2 + $0x2e0] sm:$0xff]
    %v154 = vld [vmem:[%s2 + $0x2e8] sm:$0xff]
    %v155 = vld [vmem:[%s2 + $0x2f0] sm:$0xff]
    %v156 = vld [vmem:[%s2 + $0x2f8] sm:$0xff]
    %v157 = vld [vmem:[%s2 + $0x300] sm:$0xff]
    %v158 = vld [vmem:[%s2 + $0x308] sm:$0xff]
    %v159 = vld [vmem:[%s2 + $0x310] sm:$0xff]
    %v160 = vld [vmem:[%s2 + $0x318] sm:$0xff]
    %v161 = vld [vmem:[%s2 + $0x320] sm:$0xff]
    %v162 = vld [vmem:[%s2 + $0x328] sm:$0xff]
    %v163 = vld [vmem:[%s2 + $0x330] sm:$0xff]
    %v164 = vld [vmem:[%s2 + $0x338] sm:$0xff]
    %v165 = vld [vmem:[%s2 + $0x340] sm:$0xff]
    %v166 = vld [vmem:[%s2 + $0x348] sm:$0xff]
    %v167 = vld [vmem:[%s2 + $0x350] sm:$0xff]
    %v168 = vld [vmem:[%s2 + $0x358] sm:$0xff]
    %v169 = vld [vmem:[%s2 + $0x360] sm:$0xff]
    %v170 = vld [vmem:[%s2 + $0x368] sm:$0xff]
    %v171 = vld [vmem:[%s2 + $0x370] sm:$0xff]
    %v172 = vld [vmem:[%s2 + $0x378] sm:$0xff]
    %v173 = vld [vmem:[%s2 + $0x380] sm:$0xff]
    %v174 = vld [vmem:[%s2 + $0x388] sm:$0xff]
    %v175 = vld [vmem:[%s2 + $0x390] sm:$0xff]
    %v176 = vld [vmem:[%s2 + $0x398] sm:$0xff]
    %v177 = vld [vmem:[%s2 + $0x3a0] sm:$0xff]
    %v178 = vld [vmem:[%s2 + $0x3a8] sm:$0xff]
    %v179 = vld [vmem:[%s2 + $0x3b0] sm:$0xff]
    %v180 = vld [vmem:[%s2 + $0x3b8] sm:$0xff]
    %v181 = vld [vmem:[%s2 + $0x3c0] sm:$0xff]
    %v182 = vld [vmem:[%s2 + $0x3c8] sm:$0xff]
    %v183 = vld [vmem:[%s2 + $0x3d0] sm:$0xff]
    %v184 = vld [vmem:[%s2 + $0x3d8] sm:$0xff]
    %v185 = vld [vmem:[%s2 + $0x3e0] sm:$0xff]
    %v186 = vld [vmem:[%s2 + $0x3e8] sm:$0xff]
    %v187 = vld [vmem:[%s2 + $0x3f0] sm:$0xff]
    %v188 = vld [vmem:[%s2 + $0x3f8] sm:$0xff]
    %v189 = vld [vmem:[%s2 + $0x400] sm:$0xff]
    %v190 = vld [vmem:[%s2 + $0x408] sm:$0xff]
    %v191 = vld [vmem:[%s2 + $0x410] sm:$0xff]
    %v192 = vld [vmem:[%s2 + $0x418] sm:$0xff]
    %v193 = vld [vmem:[%s2 + $0x420] sm:$0xff]
    %v194 = vld [vmem:[%s2 + $0x428] sm:$0xff]
    %v195 = vld [vmem:[%s2 + $0x430] sm:$0xff]
    %v196 = vld [vmem:[%s2 + $0x438] sm:$0xff]
    %v197 = vld [vmem:[%s2 + $0x440] sm:$0xff]
    %v198 = vld [vmem:[%s2 + $0x448] sm:$0xff]
    %v199 = vld [vmem:[%s2 + $0x450] sm:$0xff]
    %v200 = vld [vmem:[%s2 + $0x458] sm:$0xff]
    %v201 = vld [vmem:[%s2 + $0x460] sm:$0xff]
    %v202 = vld [vmem:[%s2 + $0x468] sm:$0xff]
    %v203 = vld [vmem:[%s2 + $0x470] sm:$0xff]
    %v204 = vld [vmem:[%s2 + $0x478] sm:$0xff]
    %v205 = vld [vmem:[%s2 + $0x480] sm:$0xff]
    %v206 = vld [vmem:[%s2 + $0x488] sm:$0xff]
    %v207 = vld [vmem:[%s2 + $0x490] sm:$0xff]
    %v208 = vld [vmem:[%s2 + $0x498] sm:$0xff]
    %v209 = vld [vmem:[%s2 + $0x4a0] sm:$0xff]
    %v210 = vld [vmem:[%s2 + $0x4a8] sm:$0xff]
    %v211 = vld [vmem:[%s2 + $0x4b0] sm:$0xff]
    %v212 = vld [vmem:[%s2 + $0x4b8] sm:$0xff]
    %v213 = vld [vmem:[%s2 + $0x4c0] sm:$0xff]
    %v214 = vld [vmem:[%s2 + $0x4c8] sm:$0xff]
    %v215 = vld [vmem:[%s2 + $0x4d0] sm:$0xff]
    %v216 = vld [vmem:[%s2 + $0x4d8] sm:$0xff]
    %v217 = vld [vmem:[%s2 + $0x4e0] sm:$0xff]
    %v218 = vld [vmem:[%s2 + $0x4e8] sm:$0xff]
    %v219 = vld [vmem:[%s2 + $0x4f0] sm:$0xff]
    %v220 = vld [vmem:[%s2 + $0x4f8] sm:$0xff]
    %v221 = vld [vmem:[%s2 + $0x500] sm:$0xff]
    %v222 = vld [vmem:[%s2 + $0x508] sm:$0xff]
    %v223 = vld [vmem:[%s2 + $0x510] sm:$0xff]
    %v224 = vld [vmem:[%s2 + $0x518] sm:$0xff]
    %v225 = vld [vmem:[%s2 + $0x520] sm:$0xff]
    %v226 = vld [vmem:[%s2 + $0x528] sm:$0xff]
    %v227 = vld [vmem:[%s2 + $0x530] sm:$0xff]
    %v228 = vld [vmem:[%s2 + $0x538] sm:$0xff]
    %v229 = vld [vmem:[%s2 + $0x540] sm:$0xff]
    %v230 = vld [vmem:[%s2 + $0x548] sm:$0xff]
    %v231 = vld [vmem:[%s2 + $0x550] sm:$0xff]
    %v232 = vld [vmem:[%s2 + $0x558] sm:$0xff]
    %v233 = vld [vmem:[%s2 + $0x560] sm:$0xff]
    %v234 = vld [vmem:[%s2 + $0x568] sm:$0xff]
    %v235 = vld [vmem:[%s2 + $0x570] sm:$0xff]
    %v236 = vld [vmem:[%s2 + $0x578] sm:$0xff]
    %v237 = vld [vmem:[%s2 + $0x580] sm:$0xff]
    %v238 = vld [vmem:[%s2 + $0x588] sm:$0xff]
    %v239 = vld [vmem:[%s2 + $0x590] sm:$0xff]
    %v240 = vld [vmem:[%s2 + $0x598] sm:$0xff]
    %v241 = vld [vmem:[%s2 + $0x5a0] sm:$0xff]
    %v242 = vld [vmem:[%s2 + $0x5a8] sm:$0xff]
    %v243 = vld [vmem:[%s2 + $0x5b0] sm:$0xff]
    %v244 = vld [vmem:[%s2 + $0x5b8] sm:$0xff]
    %v245 = vld [vmem:[%s2 + $0x5c0] sm:$0xff]
    %v246 = vld [vmem:[%s2 + $0x5c8] sm:$0xff]
    %v247 = vld [vmem:[%s2 + $0x5d0] sm:$0xff]
    %v248 = vld [vmem:[%s2 + $0x5d8] sm:$0xff]
    %v249 = vld [vmem:[%s2 + $0x5e0] sm:$0xff]
    %v250 = vld [vmem:[%s2 + $0x5e8] sm:$0xff]
    %v251 = vld [vmem:[%s2 + $0x5f0] sm:$0xff]
    %v252 = vld [vmem:[%s2 + $0x5f8] sm:$0xff]
    %v253 = vld [vmem:[%s2 + $0x600] sm:$0xff]
    %v254 = vld [vmem:[%s2 + $0x608] sm:$0xff]
    %v255 = vld [vmem:[%s2 + $0x610] sm:$0xff]
    %v256 = vld [vmem:[%s2 + $0x618] sm:$0xff]
    %v257 = vld [vmem:[%s3] sm:$0xf]
    %v259 = vlaneseq
    %v260 = vshrl.u32 %v259, 7
    %v261 = vsub.s32 0, %v260
    %v262 = vrot.slane %v257, %v261
    %v263 = vlaneseq
    %v264 = vshrl.u32 %v263, 7
    %v265 = vsub.s32 1, %v264
    %v266 = vrot.slane %v257, %v265
    %v267 = vlaneseq
    %v268 = vshrl.u32 %v267, 7
    %v269 = vsub.s32 2, %v268
    %v270 = vrot.slane %v257, %v269
    %v271 = vlaneseq
    %v272 = vshrl.u32 %v271, 7
    %v273 = vsub.s32 3, %v272
    %v274 = vrot.slane %v257, %v273
    %v475 = vunpack.c.l.b16 %v61
    %v476 = vunpack.c.h.b16 %v61
    %v477 = vunpack.c.l.b16 %v62
    %v478 = vunpack.c.h.b16 %v62
    %v479 = vunpack.c.l.b16 %v63
    %v480 = vunpack.c.h.b16 %v63
    %v481 = vunpack.c.l.b16 %v64
    %v482 = vunpack.c.h.b16 %v64
    %v483 = vunpack.c.l.b16 %v65
    %v484 = vunpack.c.h.b16 %v65
    %v485 = vunpack.c.l.b16 %v66
    %v486 = vunpack.c.h.b16 %v66
    %v487 = vunpack.c.l.b16 %v67
    %v488 = vunpack.c.h.b16 %v67
    %v489 = vunpack.c.l.b16 %v68
    %v490 = vunpack.c.h.b16 %v68
    %v491 = vunpack.c.l.b16 %v69
    %v492 = vunpack.c.h.b16 %v69
    %v493 = vunpack.c.l.b16 %v70
    %v494 = vunpack.c.h.b16 %v70
    %v495 = vunpack.c.l.b16 %v71
    %v496 = vunpack.c.h.b16 %v71
    %v497 = vunpack.c.l.b16 %v72
    %v498 = vunpack.c.h.b16 %v72
    %v499 = vunpack.c.l.b16 %v73
    %v500 = vunpack.c.h.b16 %v73
    %v501 = vunpack.c.l.b16 %v74
    %v502 = vunpack.c.h.b16 %v74
    %v503 = vunpack.c.l.b16 %v75
    %v504 = vunpack.c.h.b16 %v75
    %v505 = vunpack.c.l.b16 %v76
    %v506 = vunpack.c.h.b16 %v76
    %v507 = vunpack.c.l.b16 %v77
    %v508 = vunpack.c.h.b16 %v77
    %v509 = vunpack.c.l.b16 %v78
    %v510 = vunpack.c.h.b16 %v78
    %v511 = vunpack.c.l.b16 %v79
    %v512 = vunpack.c.h.b16 %v79
    %v513 = vunpack.c.l.b16 %v80
    %v514 = vunpack.c.h.b16 %v80
    %v515 = vunpack.c.l.b16 %v81
    %v516 = vunpack.c.h.b16 %v81
    %v517 = vunpack.c.l.b16 %v82
    %v518 = vunpack.c.h.b16 %v82
    %v519 = vunpack.c.l.b16 %v83
    %v520 = vunpack.c.h.b16 %v83
    %v521 = vunpack.c.l.b16 %v84
    %v522 = vunpack.c.h.b16 %v84
    %v523 = vunpack.c.l.b16 %v85
    %v524 = vunpack.c.h.b16 %v85
    %v525 = vunpack.c.l.b16 %v86
    %v526 = vunpack.c.h.b16 %v86
    %v527 = vunpack.c.l.b16 %v87
    %v528 = vunpack.c.h.b16 %v87
    %v529 = vunpack.c.l.b16 %v88
    %v530 = vunpack.c.h.b16 %v88
    %v531 = vunpack.c.l.b16 %v89
    %v532 = vunpack.c.h.b16 %v89
    %v533 = vunpack.c.l.b16 %v90
    %v534 = vunpack.c.h.b16 %v90
    %v535 = vunpack.c.l.b16 %v91
    %v536 = vunpack.c.h.b16 %v91
    %v537 = vunpack.c.l.b16 %v92
    %v538 = vunpack.c.h.b16 %v92
    %v539 = vunpack.c.l.b16 %v93
    %v540 = vunpack.c.h.b16 %v93
    %v541 = vunpack.c.l.b16 %v94
    %v542 = vunpack.c.h.b16 %v94
    %v543 = vunpack.c.l.b16 %v95
    %v544 = vunpack.c.h.b16 %v95
    %v545 = vunpack.c.l.b16 %v96
    %v546 = vunpack.c.h.b16 %v96
    %v547 = vunpack.c.l.b16 %v97
    %v548 = vunpack.c.h.b16 %v97
    %v549 = vunpack.c.l.b16 %v98
    %v550 = vunpack.c.h.b16 %v98
    %v551 = vunpack.c.l.b16 %v99
    %v552 = vunpack.c.h.b16 %v99
    %v553 = vunpack.c.l.b16 %v100
    %v554 = vunpack.c.h.b16 %v100
    %v555 = vunpack.c.l.b16 %v101
    %v556 = vunpack.c.h.b16 %v101
    %v557 = vunpack.c.l.b16 %v102
    %v558 = vunpack.c.h.b16 %v102
    %v559 = vunpack.c.l.b16 %v103
    %v560 = vunpack.c.h.b16 %v103
    %v561 = vunpack.c.l.b16 %v104
    %v562 = vunpack.c.h.b16 %v104
    %v563 = vunpack.c.l.b16 %v105
    %v564 = vunpack.c.h.b16 %v105
    %v565 = vunpack.c.l.b16 %v106
    %v566 = vunpack.c.h.b16 %v106
    %v567 = vunpack.c.l.b16 %v107
    %v568 = vunpack.c.h.b16 %v107
    %v569 = vunpack.c.l.b16 %v108
    %v570 = vunpack.c.h.b16 %v108
    %v571 = vunpack.c.l.b16 %v109
    %v572 = vunpack.c.h.b16 %v109
    %v573 = vunpack.c.l.b16 %v110
    %v574 = vunpack.c.h.b16 %v110
    %v575 = vunpack.c.l.b16 %v111
    %v576 = vunpack.c.h.b16 %v111
    %v577 = vunpack.c.l.b16 %v112
    %v578 = vunpack.c.h.b16 %v112
    %v579 = vunpack.c.l.b16 %v113
    %v580 = vunpack.c.h.b16 %v113
    %v581 = vunpack.c.l.b16 %v114
    %v582 = vunpack.c.h.b16 %v114
    %v583 = vunpack.c.l.b16 %v115
    %v584 = vunpack.c.h.b16 %v115
    %v585 = vunpack.c.l.b16 %v116
    %v586 = vunpack.c.h.b16 %v116
    %v587 = vunpack.c.l.b16 %v117
    %v588 = vunpack.c.h.b16 %v117
    %v589 = vunpack.c.l.b16 %v118
    %v590 = vunpack.c.h.b16 %v118
    %v591 = vunpack.c.l.b16 %v119
    %v592 = vunpack.c.h.b16 %v119
    %v593 = vunpack.c.l.b16 %v120
    %v594 = vunpack.c.h.b16 %v120
    %v595 = vunpack.c.l.b16 %v121
    %v596 = vunpack.c.h.b16 %v121
    %v597 = vunpack.c.l.b16 %v122
    %v598 = vunpack.c.h.b16 %v122
    %v599 = vunpack.c.l.b16 %v123
    %v600 = vunpack.c.h.b16 %v123
    %v601 = vunpack.c.l.b16 %v124
    %v602 = vunpack.c.h.b16 %v124
    %v603 = vunpack.c.l.b16 %v125
    %v604 = vunpack.c.h.b16 %v125
    %v605 = vunpack.c.l.b16 %v126
    %v606 = vunpack.c.h.b16 %v126
    %v607 = vunpack.c.l.b16 %v127
    %v608 = vunpack.c.h.b16 %v127
    %v609 = vunpack.c.l.b16 %v128
    %v610 = vunpack.c.h.b16 %v128
    %v611 = vunpack.c.l.b16 %v129
    %v612 = vunpack.c.h.b16 %v129
    %v613 = vunpack.c.l.b16 %v130
    %v614 = vunpack.c.h.b16 %v130
    %v615 = vunpack.c.l.b16 %v131
    %v616 = vunpack.c.h.b16 %v131
    %v617 = vunpack.c.l.b16 %v132
    %v618 = vunpack.c.h.b16 %v132
    %v619 = vunpack.c.l.b16 %v133
    %v620 = vunpack.c.h.b16 %v133
    %v621 = vunpack.c.l.b16 %v134
    %v622 = vunpack.c.h.b16 %v134
    %v623 = vunpack.c.l.b16 %v135
    %v624 = vunpack.c.h.b16 %v135
    %v625 = vunpack.c.l.b16 %v136
    %v626 = vunpack.c.h.b16 %v136
    %v627 = vunpack.c.l.b16 %v137
    %v628 = vunpack.c.h.b16 %v137
    %v629 = vunpack.c.l.b16 %v138
    %v630 = vunpack.c.h.b16 %v138
    %v631 = vunpack.c.l.b16 %v139
    %v632 = vunpack.c.h.b16 %v139
    %v633 = vunpack.c.l.b16 %v140
    %v634 = vunpack.c.h.b16 %v140
    %v635 = vunpack.c.l.b16 %v141
    %v636 = vunpack.c.h.b16 %v141
    %v637 = vunpack.c.l.b16 %v142
    %v638 = vunpack.c.h.b16 %v142
    %v639 = vunpack.c.l.b16 %v143
    %v640 = vunpack.c.h.b16 %v143
    %v641 = vunpack.c.l.b16 %v144
    %v642 = vunpack.c.h.b16 %v144
    %v643 = vunpack.c.l.b16 %v145
    %v644 = vunpack.c.h.b16 %v145
    %v645 = vunpack.c.l.b16 %v146
    %v646 = vunpack.c.h.b16 %v146
    %v647 = vunpack.c.l.b16 %v147
    %v648 = vunpack.c.h.b16 %v147
    %v649 = vunpack.c.l.b16 %v148
    %v650 = vunpack.c.h.b16 %v148
    %v651 = vunpack.c.l.b16 %v149
    %v652 = vunpack.c.h.b16 %v149
    %v653 = vunpack.c.l.b16 %v150
    %v654 = vunpack.c.h.b16 %v150
    %v655 = vunpack.c.l.b16 %v151
    %v656 = vunpack.c.h.b16 %v151
    %v657 = vunpack.c.l.b16 %v152
    %v658 = vunpack.c.h.b16 %v152
    %v659 = vunpack.c.l.b16 %v153
    %v660 = vunpack.c.h.b16 %v153
    %v661 = vunpack.c.l.b16 %v154
    %v662 = vunpack.c.h.b16 %v154
    %v663 = vunpack.c.l.b16 %v155
    %v664 = vunpack.c.h.b16 %v155
    %v665 = vunpack.c.l.b16 %v156
    %v666 = vunpack.c.h.b16 %v156
    %v667 = vunpack.c.l.b16 %v157
    %v668 = vunpack.c.h.b16 %v157
    %v669 = vunpack.c.l.b16 %v158
    %v670 = vunpack.c.h.b16 %v158
    %v671 = vunpack.c.l.b16 %v159
    %v672 = vunpack.c.h.b16 %v159
    %v673 = vunpack.c.l.b16 %v160
    %v674 = vunpack.c.h.b16 %v160
    %v675 = vunpack.c.l.b16 %v161
    %v676 = vunpack.c.h.b16 %v161
    %v677 = vunpack.c.l.b16 %v162
    %v678 = vunpack.c.h.b16 %v162
    %v679 = vunpack.c.l.b16 %v163
    %v680 = vunpack.c.h.b16 %v163
    %v681 = vunpack.c.l.b16 %v164
    %v682 = vunpack.c.h.b16 %v164
    %v683 = vunpack.c.l.b16 %v165
    %v684 = vunpack.c.h.b16 %v165
    %v685 = vunpack.c.l.b16 %v166
    %v686 = vunpack.c.h.b16 %v166
    %v687 = vunpack.c.l.b16 %v167
    %v688 = vunpack.c.h.b16 %v167
    %v689 = vunpack.c.l.b16 %v168
    %v690 = vunpack.c.h.b16 %v168
    %v691 = vunpack.c.l.b16 %v169
    %v692 = vunpack.c.h.b16 %v169
    %v693 = vunpack.c.l.b16 %v170
    %v694 = vunpack.c.h.b16 %v170
    %v695 = vunpack.c.l.b16 %v171
    %v696 = vunpack.c.h.b16 %v171
    %v697 = vunpack.c.l.b16 %v172
    %v698 = vunpack.c.h.b16 %v172
    %v699 = vunpack.c.l.b16 %v173
    %v700 = vunpack.c.h.b16 %v173
    %v701 = vunpack.c.l.b16 %v174
    %v702 = vunpack.c.h.b16 %v174
    %v703 = vunpack.c.l.b16 %v175
    %v704 = vunpack.c.h.b16 %v175
    %v705 = vunpack.c.l.b16 %v176
    %v706 = vunpack.c.h.b16 %v176
    %v707 = vunpack.c.l.b16 %v177
    %v708 = vunpack.c.h.b16 %v177
    %v709 = vunpack.c.l.b16 %v178
    %v710 = vunpack.c.h.b16 %v178
    %v711 = vunpack.c.l.b16 %v179
    %v712 = vunpack.c.h.b16 %v179
    %v713 = vunpack.c.l.b16 %v180
    %v714 = vunpack.c.h.b16 %v180
    %v715 = vunpack.c.l.b16 %v181
    %v716 = vunpack.c.h.b16 %v181
    %v717 = vunpack.c.l.b16 %v182
    %v718 = vunpack.c.h.b16 %v182
    %v719 = vunpack.c.l.b16 %v183
    %v720 = vunpack.c.h.b16 %v183
    %v721 = vunpack.c.l.b16 %v184
    %v722 = vunpack.c.h.b16 %v184
    %v723 = vunpack.c.l.b16 %v185
    %v724 = vunpack.c.h.b16 %v185
    %v725 = vunpack.c.l.b16 %v186
    %v726 = vunpack.c.h.b16 %v186
    %v727 = vunpack.c.l.b16 %v187
    %v728 = vunpack.c.h.b16 %v187
    %v729 = vunpack.c.l.b16 %v188
    %v730 = vunpack.c.h.b16 %v188
    %v731 = vunpack.c.l.b16 %v189
    %v732 = vunpack.c.h.b16 %v189
    %v733 = vunpack.c.l.b16 %v190
    %v734 = vunpack.c.h.b16 %v190
    %v735 = vunpack.c.l.b16 %v191
    %v736 = vunpack.c.h.b16 %v191
    %v737 = vunpack.c.l.b16 %v192
    %v738 = vunpack.c.h.b16 %v192
    %v739 = vunpack.c.l.b16 %v193
    %v740 = vunpack.c.h.b16 %v193
    %v741 = vunpack.c.l.b16 %v194
    %v742 = vunpack.c.h.b16 %v194
    %v743 = vunpack.c.l.b16 %v195
    %v744 = vunpack.c.h.b16 %v195
    %v745 = vunpack.c.l.b16 %v196
    %v746 = vunpack.c.h.b16 %v196
    %v747 = vunpack.c.l.b16 %v197
    %v748 = vunpack.c.h.b16 %v197
    %v749 = vunpack.c.l.b16 %v198
    %v750 = vunpack.c.h.b16 %v198
    %v751 = vunpack.c.l.b16 %v199
    %v752 = vunpack.c.h.b16 %v199
    %v753 = vunpack.c.l.b16 %v200
    %v754 = vunpack.c.h.b16 %v200
    %v755 = vunpack.c.l.b16 %v201
    %v756 = vunpack.c.h.b16 %v201
    %v757 = vunpack.c.l.b16 %v202
    %v758 = vunpack.c.h.b16 %v202
    %v759 = vunpack.c.l.b16 %v203
    %v760 = vunpack.c.h.b16 %v203
    %v761 = vunpack.c.l.b16 %v204
    %v762 = vunpack.c.h.b16 %v204
    %v763 = vunpack.c.l.b16 %v205
    %v764 = vunpack.c.h.b16 %v205
    %v765 = vunpack.c.l.b16 %v206
    %v766 = vunpack.c.h.b16 %v206
    %v767 = vunpack.c.l.b16 %v207
    %v768 = vunpack.c.h.b16 %v207
    %v769 = vunpack.c.l.b16 %v208
    %v770 = vunpack.c.h.b16 %v208
    %v771 = vunpack.c.l.b16 %v209
    %v772 = vunpack.c.h.b16 %v209
    %v773 = vunpack.c.l.b16 %v210
    %v774 = vunpack.c.h.b16 %v210
    %v775 = vunpack.c.l.b16 %v211
    %v776 = vunpack.c.h.b16 %v211
    %v777 = vunpack.c.l.b16 %v212
    %v778 = vunpack.c.h.b16 %v212
    %v779 = vunpack.c.l.b16 %v213
    %v780 = vunpack.c.h.b16 %v213
    %v781 = vunpack.c.l.b16 %v214
    %v782 = vunpack.c.h.b16 %v214
    %v783 = vunpack.c.l.b16 %v215
    %v784 = vunpack.c.h.b16 %v215
    %v785 = vunpack.c.l.b16 %v216
    %v786 = vunpack.c.h.b16 %v216
    %v787 = vunpack.c.l.b16 %v217
    %v788 = vunpack.c.h.b16 %v217
    %v789 = vunpack.c.l.b16 %v218
    %v790 = vunpack.c.h.b16 %v218
    %v791 = vunpack.c.l.b16 %v219
    %v792 = vunpack.c.h.b16 %v219
    %v793 = vunpack.c.l.b16 %v220
    %v794 = vunpack.c.h.b16 %v220
    %v795 = vunpack.c.l.b16 %v221
    %v796 = vunpack.c.h.b16 %v221
    %v797 = vunpack.c.l.b16 %v222
    %v798 = vunpack.c.h.b16 %v222
    %v799 = vunpack.c.l.b16 %v223
    %v800 = vunpack.c.h.b16 %v223
    %v801 = vunpack.c.l.b16 %v224
    %v802 = vunpack.c.h.b16 %v224
    %v803 = vunpack.c.l.b16 %v225
    %v804 = vunpack.c.h.b16 %v225
    %v805 = vunpack.c.l.b16 %v226
    %v806 = vunpack.c.h.b16 %v226
    %v807 = vunpack.c.l.b16 %v227
    %v808 = vunpack.c.h.b16 %v227
    %v809 = vunpack.c.l.b16 %v228
    %v810 = vunpack.c.h.b16 %v228
    %v811 = vunpack.c.l.b16 %v229
    %v812 = vunpack.c.h.b16 %v229
    %v813 = vunpack.c.l.b16 %v230
    %v814 = vunpack.c.h.b16 %v230
    %v815 = vunpack.c.l.b16 %v231
    %v816 = vunpack.c.h.b16 %v231
    %v817 = vunpack.c.l.b16 %v232
    %v818 = vunpack.c.h.b16 %v232
    %v819 = vunpack.c.l.b16 %v233
    %v820 = vunpack.c.h.b16 %v233
    %v821 = vunpack.c.l.b16 %v234
    %v822 = vunpack.c.h.b16 %v234
    %v823 = vunpack.c.l.b16 %v235
    %v824 = vunpack.c.h.b16 %v235
    %v825 = vunpack.c.l.b16 %v236
    %v826 = vunpack.c.h.b16 %v236
    %v827 = vunpack.c.l.b16 %v237
    %v828 = vunpack.c.h.b16 %v237
    %v829 = vunpack.c.l.b16 %v238
    %v830 = vunpack.c.h.b16 %v238
    %v831 = vunpack.c.l.b16 %v239
    %v832 = vunpack.c.h.b16 %v239
    %v833 = vunpack.c.l.b16 %v240
    %v834 = vunpack.c.h.b16 %v240
    %v835 = vunpack.c.l.b16 %v241
    %v836 = vunpack.c.h.b16 %v241
    %v837 = vunpack.c.l.b16 %v242
    %v838 = vunpack.c.h.b16 %v242
    %v839 = vunpack.c.l.b16 %v243
    %v840 = vunpack.c.h.b16 %v243
    %v841 = vunpack.c.l.b16 %v244
    %v842 = vunpack.c.h.b16 %v244
    %v843 = vunpack.c.l.b16 %v245
    %v844 = vunpack.c.h.b16 %v245
    %v845 = vunpack.c.l.b16 %v246
    %v846 = vunpack.c.h.b16 %v246
    %v847 = vunpack.c.l.b16 %v247
    %v848 = vunpack.c.h.b16 %v247
    %v849 = vunpack.c.l.b16 %v248
    %v850 = vunpack.c.h.b16 %v248
    %v851 = vunpack.c.l.b16 %v249
    %v852 = vunpack.c.h.b16 %v249
    %v853 = vunpack.c.l.b16 %v250
    %v854 = vunpack.c.h.b16 %v250
    %v855 = vunpack.c.l.b16 %v251
    %v856 = vunpack.c.h.b16 %v251
    %v857 = vunpack.c.l.b16 %v252
    %v858 = vunpack.c.h.b16 %v252
    %v859 = vunpack.c.l.b16 %v253
    %v860 = vunpack.c.h.b16 %v253
    %v861 = vunpack.c.l.b16 %v254
    %v862 = vunpack.c.h.b16 %v254
    %v863 = vunpack.c.l.b16 %v255
    %v864 = vunpack.c.h.b16 %v255
    %v865 = vunpack.c.l.b16 %v256
    %v866 = vunpack.c.h.b16 %v256
    %v867 = vpack.c.b16 %v479, %v475
    %v868 = vpack.c.b16 %v480, %v476
    %v869 = vpack.c.b16 %v481, %v477
    %v870 = vpack.c.b16 %v482, %v478
    %v871 = vpack.c.b16 %v487, %v483
    %v872 = vpack.c.b16 %v488, %v484
    %v873 = vpack.c.b16 %v489, %v485
    %v874 = vpack.c.b16 %v490, %v486
    %v875 = vpack.c.b16 %v495, %v491
    %v876 = vpack.c.b16 %v496, %v492
    %v877 = vpack.c.b16 %v497, %v493
    %v878 = vpack.c.b16 %v498, %v494
    %v879 = vpack.c.b16 %v503, %v499
    %v880 = vpack.c.b16 %v504, %v500
    %v881 = vpack.c.b16 %v505, %v501
    %v882 = vpack.c.b16 %v506, %v502
    %v883 = vpack.c.b16 %v511, %v507
    %v884 = vpack.c.b16 %v512, %v508
    %v885 = vpack.c.b16 %v513, %v509
    %v886 = vpack.c.b16 %v514, %v510
    %v887 = vpack.c.b16 %v519, %v515
    %v888 = vpack.c.b16 %v520, %v516
    %v889 = vpack.c.b16 %v521, %v517
    %v890 = vpack.c.b16 %v522, %v518
    %v891 = vpack.c.b16 %v527, %v523
    %v892 = vpack.c.b16 %v528, %v524
    %v893 = vpack.c.b16 %v529, %v525
    %v894 = vpack.c.b16 %v530, %v526
    %v895 = vpack.c.b16 %v535, %v531
    %v896 = vpack.c.b16 %v536, %v532
    %v897 = vpack.c.b16 %v537, %v533
    %v898 = vpack.c.b16 %v538, %v534
    %v899 = vpack.c.b16 %v543, %v539
    %v900 = vpack.c.b16 %v544, %v540
    %v901 = vpack.c.b16 %v545, %v541
    %v902 = vpack.c.b16 %v546, %v542
    %v903 = vpack.c.b16 %v551, %v547
    %v904 = vpack.c.b16 %v552, %v548
    %v905 = vpack.c.b16 %v553, %v549
    %v906 = vpack.c.b16 %v554, %v550
    %v907 = vpack.c.b16 %v559, %v555
    %v908 = vpack.c.b16 %v560, %v556
    %v909 = vpack.c.b16 %v561, %v557
    %v910 = vpack.c.b16 %v562, %v558
    %v911 = vpack.c.b16 %v567, %v563
    %v912 = vpack.c.b16 %v568, %v564
    %v913 = vpack.c.b16 %v569, %v565
    %v914 = vpack.c.b16 %v570, %v566
    %v915 = vpack.c.b16 %v575, %v571
    %v916 = vpack.c.b16 %v576, %v572
    %v917 = vpack.c.b16 %v577, %v573
    %v918 = vpack.c.b16 %v578, %v574
    %v919 = vpack.c.b16 %v583, %v579
    %v920 = vpack.c.b16 %v584, %v580
    %v921 = vpack.c.b16 %v585, %v581
    %v922 = vpack.c.b16 %v586, %v582
    %v923 = vpack.c.b16 %v591, %v587
    %v924 = vpack.c.b16 %v592, %v588
    %v925 = vpack.c.b16 %v593, %v589
    %v926 = vpack.c.b16 %v594, %v590
    %v927 = vpack.c.b16 %v599, %v595
    %v928 = vpack.c.b16 %v600, %v596
    %v929 = vpack.c.b16 %v601, %v597
    %v930 = vpack.c.b16 %v602, %v598
    %v931 = vpack.c.b16 %v607, %v603
    %v932 = vpack.c.b16 %v608, %v604
    %v933 = vpack.c.b16 %v609, %v605
    %v934 = vpack.c.b16 %v610, %v606
    %v935 = vpack.c.b16 %v615, %v611
    %v936 = vpack.c.b16 %v616, %v612
    %v937 = vpack.c.b16 %v617, %v613
    %v938 = vpack.c.b16 %v618, %v614
    %v939 = vpack.c.b16 %v623, %v619
    %v940 = vpack.c.b16 %v624, %v620
    %v941 = vpack.c.b16 %v625, %v621
    %v942 = vpack.c.b16 %v626, %v622
    %v943 = vpack.c.b16 %v631, %v627
    %v944 = vpack.c.b16 %v632, %v628
    %v945 = vpack.c.b16 %v633, %v629
    %v946 = vpack.c.b16 %v634, %v630
    %v947 = vpack.c.b16 %v639, %v635
    %v948 = vpack.c.b16 %v640, %v636
    %v949 = vpack.c.b16 %v641, %v637
    %v950 = vpack.c.b16 %v642, %v638
    %v951 = vpack.c.b16 %v647, %v643
    %v952 = vpack.c.b16 %v648, %v644
    %v953 = vpack.c.b16 %v649, %v645
    %v954 = vpack.c.b16 %v650, %v646
    %v955 = vpack.c.b16 %v655, %v651
    %v956 = vpack.c.b16 %v656, %v652
    %v957 = vpack.c.b16 %v657, %v653
    %v958 = vpack.c.b16 %v658, %v654
    %v959 = vpack.c.b16 %v663, %v659
    %v960 = vpack.c.b16 %v664, %v660
    %v961 = vpack.c.b16 %v665, %v661
    %v962 = vpack.c.b16 %v666, %v662
    %v963 = vpack.c.b16 %v671, %v667
    %v964 = vpack.c.b16 %v672, %v668
    %v965 = vpack.c.b16 %v673, %v669
    %v966 = vpack.c.b16 %v674, %v670
    %v967 = vpack.c.b16 %v679, %v675
    %v968 = vpack.c.b16 %v680, %v676
    %v969 = vpack.c.b16 %v681, %v677
    %v970 = vpack.c.b16 %v682, %v678
    %v971 = vpack.c.b16 %v687, %v683
    %v972 = vpack.c.b16 %v688, %v684
    %v973 = vpack.c.b16 %v689, %v685
    %v974 = vpack.c.b16 %v690, %v686
    %v975 = vpack.c.b16 %v695, %v691
    %v976 = vpack.c.b16 %v696, %v692
    %v977 = vpack.c.b16 %v697, %v693
    %v978 = vpack.c.b16 %v698, %v694
    %v979 = vpack.c.b16 %v703, %v699
    %v980 = vpack.c.b16 %v704, %v700
    %v981 = vpack.c.b16 %v705, %v701
    %v982 = vpack.c.b16 %v706, %v702
    %v983 = vpack.c.b16 %v711, %v707
    %v984 = vpack.c.b16 %v712, %v708
    %v985 = vpack.c.b16 %v713, %v709
    %v986 = vpack.c.b16 %v714, %v710
    %v987 = vpack.c.b16 %v719, %v715
    %v988 = vpack.c.b16 %v720, %v716
    %v989 = vpack.c.b16 %v721, %v717
    %v990 = vpack.c.b16 %v722, %v718
    %v991 = vpack.c.b16 %v727, %v723
    %v992 = vpack.c.b16 %v728, %v724
    %v993 = vpack.c.b16 %v729, %v725
    %v994 = vpack.c.b16 %v730, %v726
    %v995 = vpack.c.b16 %v735, %v731
    %v996 = vpack.c.b16 %v736, %v732
    %v997 = vpack.c.b16 %v737, %v733
    %v998 = vpack.c.b16 %v738, %v734
    %v999 = vpack.c.b16 %v743, %v739
    %v1000 = vpack.c.b16 %v744, %v740
    %v1001 = vpack.c.b16 %v745, %v741
    %v1002 = vpack.c.b16 %v746, %v742
    %v1003 = vpack.c.b16 %v751, %v747
    %v1004 = vpack.c.b16 %v752, %v748
    %v1005 = vpack.c.b16 %v753, %v749
    %v1006 = vpack.c.b16 %v754, %v750
    %v1007 = vpack.c.b16 %v759, %v755
    %v1008 = vpack.c.b16 %v760, %v756
    %v1009 = vpack.c.b16 %v761, %v757
    %v1010 = vpack.c.b16 %v762, %v758
    %v1011 = vpack.c.b16 %v767, %v763
    %v1012 = vpack.c.b16 %v768, %v764
    %v1013 = vpack.c.b16 %v769, %v765
    %v1014 = vpack.c.b16 %v770, %v766
    %v1015 = vpack.c.b16 %v775, %v771
    %v1016 = vpack.c.b16 %v776, %v772
    %v1017 = vpack.c.b16 %v777, %v773
    %v1018 = vpack.c.b16 %v778, %v774
    %v1019 = vpack.c.b16 %v783, %v779
    %v1020 = vpack.c.b16 %v784, %v780
    %v1021 = vpack.c.b16 %v785, %v781
    %v1022 = vpack.c.b16 %v786, %v782
    %v1023 = vpack.c.b16 %v791, %v787
    %v1024 = vpack.c.b16 %v792, %v788
    %v1025 = vpack.c.b16 %v793, %v789
    %v1026 = vpack.c.b16 %v794, %v790
    %v1027 = vpack.c.b16 %v799, %v795
    %v1028 = vpack.c.b16 %v800, %v796
    %v1029 = vpack.c.b16 %v801, %v797
    %v1030 = vpack.c.b16 %v802, %v798
    %v1031 = vpack.c.b16 %v807, %v803
    %v1032 = vpack.c.b16 %v808, %v804
    %v1033 = vpack.c.b16 %v809, %v805
    %v1034 = vpack.c.b16 %v810, %v806
    %v1035 = vpack.c.b16 %v815, %v811
    %v1036 = vpack.c.b16 %v816, %v812
    %v1037 = vpack.c.b16 %v817, %v813
    %v1038 = vpack.c.b16 %v818, %v814
    %v1039 = vpack.c.b16 %v823, %v819
    %v1040 = vpack.c.b16 %v824, %v820
    %v1041 = vpack.c.b16 %v825, %v821
    %v1042 = vpack.c.b16 %v826, %v822
    %v1043 = vpack.c.b16 %v831, %v827
    %v1044 = vpack.c.b16 %v832, %v828
    %v1045 = vpack.c.b16 %v833, %v829
    %v1046 = vpack.c.b16 %v834, %v830
    %v1047 = vpack.c.b16 %v839, %v835
    %v1048 = vpack.c.b16 %v840, %v836
    %v1049 = vpack.c.b16 %v841, %v837
    %v1050 = vpack.c.b16 %v842, %v838
    %v1051 = vpack.c.b16 %v847, %v843
    %v1052 = vpack.c.b16 %v848, %v844
    %v1053 = vpack.c.b16 %v849, %v845
    %v1054 = vpack.c.b16 %v850, %v846
    %v1055 = vpack.c.b16 %v855, %v851
    %v1056 = vpack.c.b16 %v856, %v852
    %v1057 = vpack.c.b16 %v857, %v853
    %v1058 = vpack.c.b16 %v858, %v854
    %v1059 = vpack.c.b16 %v863, %v859
    %v1060 = vpack.c.b16 %v864, %v860
    %v1061 = vpack.c.b16 %v865, %v861
    %v1062 = vpack.c.b16 %v866, %v862
    %vm1259 = vcmask 130048
    %v1261 = vsel %vm1259, %v60, 0
    %1263 = vmatprep.subr.bf16.mxu0 %v868
    %1264 = vmatpush1.bf16.msra.mxu0 %v867
    %1265 = vmatprep.subr.bf16.mxu0 %v872
    %1266 = vmatpush1.bf16.msra.mxu0 %v871
    %1267 = vmatprep.subr.bf16.mxu0 %v876
    %1268 = vmatpush1.bf16.msra.mxu0 %v875
    %1269 = vmatprep.subr.bf16.mxu0 %v880
    %1270 = vmatpush1.bf16.msra.mxu0 %v879
    %1271 = vmatprep.subr.bf16.mxu0 %v884
    %1272 = vmatpush1.bf16.msra.mxu0 %v883
    %1273 = vmatprep.subr.bf16.mxu0 %v888
    %1274 = vmatpush1.bf16.msra.mxu0 %v887
    %1275 = vmatprep.subr.bf16.mxu0 %v892
    %1276 = vmatpush1.bf16.msra.mxu0 %v891
    %1277 = vmatprep.subr.bf16.mxu0 %v896
    %1278 = vmatpush1.bf16.msra.mxu0 %v895
    %1279 = vmatprep.subr.bf16.mxu0 %v900
    %1280 = vmatpush1.bf16.msra.mxu0 %v899
    %1281 = vmatprep.subr.bf16.mxu0 %v904
    %1282 = vmatpush1.bf16.msra.mxu0 %v903
    %1283 = vmatprep.subr.bf16.mxu0 %v908
    %1284 = vmatpush1.bf16.msra.mxu0 %v907
    %1285 = vmatprep.subr.bf16.mxu0 %v912
    %1286 = vmatpush1.bf16.msra.mxu0 %v911
    %1287 = vmatprep.subr.bf16.mxu0 %v916
    %1288 = vmatpush1.bf16.msra.mxu0 %v915
    %1289 = vmatprep.subr.bf16.mxu0 %v920
    %1290 = vmatpush1.bf16.msra.mxu0 %v919
    %1291 = vmatprep.subr.bf16.mxu0 %v924
    %1292 = vmatpush1.bf16.msra.mxu0 %v923
    %1293 = vmatprep.subr.bf16.mxu0 %v928
    %1294 = vmatpush1.bf16.msra.mxu0 %v927
    %1295 = vmatprep.mubr.bf16.mxu0 %v55
    %1296 = vmatmul.mubr.bf16.gmra.mrb[0].mxu0 %v54
    %v1297 = vpop.f32.mrb[0].mxu0
    %v1298 = vadd.f32 %v262, %v1297
    %v1299 = vpop.f32.mrb[0].mxu0
    %v1300 = vadd.f32 %v266, %v1299
    %v1301 = vpop.f32.mrb[0].mxu0
    %v1302 = vadd.f32 %v262, %v1301
    %v1303 = vpop.f32.mrb[0].mxu0
    %v1304 = vadd.f32 %v266, %v1303
    %1305 = vdwg.mxu0
    %1306 = vmatprep.subr.bf16.mxu0 %v932
    %1307 = vmatpush1.bf16.msra.mxu0 %v931
    %1308 = vmatprep.subr.bf16.mxu0 %v936
    %1309 = vmatpush1.bf16.msra.mxu0 %v935
    %1310 = vmatprep.subr.bf16.mxu0 %v940
    %1311 = vmatpush1.bf16.msra.mxu0 %v939
    %1312 = vmatprep.subr.bf16.mxu0 %v944
    %1313 = vmatpush1.bf16.msra.mxu0 %v943
    %1314 = vmatprep.subr.bf16.mxu0 %v948
    %1315 = vmatpush1.bf16.msra.mxu0 %v947
    %1316 = vmatprep.subr.bf16.mxu0 %v952
    %1317 = vmatpush1.bf16.msra.mxu0 %v951
    %1318 = vmatprep.subr.bf16.mxu0 %v956
    %1319 = vmatpush1.bf16.msra.mxu0 %v955
    %1320 = vmatprep.subr.bf16.mxu0 %v960
    %1321 = vmatpush1.bf16.msra.mxu0 %v959
    %1322 = vmatprep.subr.bf16.mxu0 %v964
    %1323 = vmatpush1.bf16.msra.mxu0 %v963
    %1324 = vmatprep.subr.bf16.mxu0 %v968
    %1325 = vmatpush1.bf16.msra.mxu0 %v967
    %1326 = vmatprep.subr.bf16.mxu0 %v972
    %1327 = vmatpush1.bf16.msra.mxu0 %v971
    %1328 = vmatprep.subr.bf16.mxu0 %v976
    %1329 = vmatpush1.bf16.msra.mxu0 %v975
    %1330 = vmatprep.subr.bf16.mxu0 %v980
    %1331 = vmatpush1.bf16.msra.mxu0 %v979
    %1332 = vmatprep.subr.bf16.mxu0 %v984
    %1333 = vmatpush1.bf16.msra.mxu0 %v983
    %1334 = vmatprep.subr.bf16.mxu0 %v988
    %1335 = vmatpush1.bf16.msra.mxu0 %v987
    %1336 = vmatprep.subr.bf16.mxu0 %v992
    %1337 = vmatpush1.bf16.msra.mxu0 %v991
    %1338 = vmatprep.mubr.bf16.mxu0 %v57
    %1339 = vmatmul.mubr.bf16.gmra.mrb[0].mxu0 %v56
    %v1340 = vpop.f32.mrb[0].mxu0
    %v1341 = vadd.f32 %v1298, %v1340
    %v1342 = vpop.f32.mrb[0].mxu0
    %v1343 = vadd.f32 %v1300, %v1342
    %v1344 = vpop.f32.mrb[0].mxu0
    %v1345 = vadd.f32 %v1302, %v1344
    %v1346 = vpop.f32.mrb[0].mxu0
    %v1347 = vadd.f32 %v1304, %v1346
    %1348 = vdwg.mxu0
    %1349 = vmatprep.subr.bf16.mxu0 %v996
    %1350 = vmatpush1.bf16.msra.mxu0 %v995
    %1351 = vmatprep.subr.bf16.mxu0 %v1000
    %1352 = vmatpush1.bf16.msra.mxu0 %v999
    %1353 = vmatprep.subr.bf16.mxu0 %v1004
    %1354 = vmatpush1.bf16.msra.mxu0 %v1003
    %1355 = vmatprep.subr.bf16.mxu0 %v1008
    %1356 = vmatpush1.bf16.msra.mxu0 %v1007
    %1357 = vmatprep.subr.bf16.mxu0 %v1012
    %1358 = vmatpush1.bf16.msra.mxu0 %v1011
    %1359 = vmatprep.subr.bf16.mxu0 %v1016
    %1360 = vmatpush1.bf16.msra.mxu0 %v1015
    %1361 = vmatprep.subr.bf16.mxu0 %v1020
    %1362 = vmatpush1.bf16.msra.mxu0 %v1019
    %1363 = vmatprep.subr.bf16.mxu0 %v1024
    %1364 = vmatpush1.bf16.msra.mxu0 %v1023
    %1365 = vmatprep.subr.bf16.mxu0 %v1028
    %1366 = vmatpush1.bf16.msra.mxu0 %v1027
    %1367 = vmatprep.subr.bf16.mxu0 %v1032
    %1368 = vmatpush1.bf16.msra.mxu0 %v1031
    %1369 = vmatprep.subr.bf16.mxu0 %v1036
    %1370 = vmatpush1.bf16.msra.mxu0 %v1035
    %1371 = vmatprep.subr.bf16.mxu0 %v1040
    %1372 = vmatpush1.bf16.msra.mxu0 %v1039
    %1373 = vmatprep.subr.bf16.mxu0 %v1044
    %1374 = vmatpush1.bf16.msra.mxu0 %v1043
    %1375 = vmatprep.subr.bf16.mxu0 %v1048
    %1376 = vmatpush1.bf16.msra.mxu0 %v1047
    %1377 = vmatprep.subr.bf16.mxu0 %v1052
    %1378 = vmatpush1.bf16.msra.mxu0 %v1051
    %1379 = vmatprep.subr.bf16.mxu0 %v1056
    %1380 = vmatpush1.bf16.msra.mxu0 %v1055
    %1381 = vmatprep.mubr.bf16.mxu0 %v59
    %1382 = vmatmul.mubr.bf16.gmra.mrb[0].mxu0 %v58
    %v1383 = vpop.f32.mrb[0].mxu0
    %v1384 = vadd.f32 %v1341, %v1383
    %v1385 = vpop.f32.mrb[0].mxu0
    %v1386 = vadd.f32 %v1343, %v1385
    %v1387 = vpop.f32.mrb[0].mxu0
    %v1388 = vadd.f32 %v1345, %v1387
    %v1389 = vpop.f32.mrb[0].mxu0
    %v1390 = vadd.f32 %v1347, %v1389
    %1391 = vdwg.mxu0
    %1392 = vmatprep.subr.bf16.mxu0 %v1060
    %1393 = vmatpush1.bf16.msra.mxu0 %v1059
    %1394 = vmatprep.subr.bf16.mxu0 0
    %1395 = vmatpush1.bf16.msra.mxu0 0
    %1396 = vmatprep.subr.bf16.mxu0 0
    %1397 = vmatpush1.bf16.msra.mxu0 0
    %1398 = vmatprep.subr.bf16.mxu0 0
    %1399 = vmatpush1.bf16.msra.mxu0 0
    %1400 = vmatprep.subr.bf16.mxu0 0
    %1401 = vmatpush1.bf16.msra.mxu0 0
    %1402 = vmatprep.subr.bf16.mxu0 0
    %1403 = vmatpush1.bf16.msra.mxu0 0
    %1404 = vmatprep.subr.bf16.mxu0 0
    %1405 = vmatpush1.bf16.msra.mxu0 0
    %1406 = vmatprep.subr.bf16.mxu0 0
    %1407 = vmatpush1.bf16.msra.mxu0 0
    %1408 = vmatprep.subr.bf16.mxu0 0
    %1409 = vmatpush1.bf16.msra.mxu0 0
    %1410 = vmatprep.subr.bf16.mxu0 0
    %1411 = vmatpush1.bf16.msra.mxu0 0
    %1412 = vmatprep.subr.bf16.mxu0 0
    %1413 = vmatpush1.bf16.msra.mxu0 0
    %1414 = vmatprep.subr.bf16.mxu0 0
    %1415 = vmatpush1.bf16.msra.mxu0 0
    %1416 = vmatprep.subr.bf16.mxu0 0
    %1417 = vmatpush1.bf16.msra.mxu0 0
    %1418 = vmatprep.subr.bf16.mxu0 0
    %1419 = vmatpush1.bf16.msra.mxu0 0
    %1420 = vmatprep.subr.bf16.mxu0 0
    %1421 = vmatpush1.bf16.msra.mxu0 0
    %1422 = vmatprep.subr.bf16.mxu0 0
    %1423 = vmatpush1.bf16.msra.mxu0 0
    %1424 = vmatprep.mubr.bf16.mxu0 0
    %1425 = vmatmul.mubr.bf16.gmra.mrb[0].mxu0 %v1261
    %v1426 = vpop.f32.mrb[0].mxu0
    %v1427 = vadd.f32 %v1384, %v1426
    %v1428 = vpop.f32.mrb[0].mxu0
    %v1429 = vadd.f32 %v1386, %v1428
    %v1430 = vpop.f32.mrb[0].mxu0
    %v1431 = vadd.f32 %v1388, %v1430
    %v1432 = vpop.f32.mrb[0].mxu0
    %v1433 = vadd.f32 %v1390, %v1432
    %1434 = vdwg.mxu0
    %1435 = vmatprep.subr.bf16.mxu0 %v870
    %1436 = vmatpush1.bf16.msra.mxu0 %v869
    %1437 = vmatprep.subr.bf16.mxu0 %v874
    %1438 = vmatpush1.bf16.msra.mxu0 %v873
    %1439 = vmatprep.subr.bf16.mxu0 %v878
    %1440 = vmatpush1.bf16.msra.mxu0 %v877
    %1441 = vmatprep.subr.bf16.mxu0 %v882
    %1442 = vmatpush1.bf16.msra.mxu0 %v881
    %1443 = vmatprep.subr.bf16.mxu0 %v886
    %1444 = vmatpush1.bf16.msra.mxu0 %v885
    %1445 = vmatprep.subr.bf16.mxu0 %v890
    %1446 = vmatpush1.bf16.msra.mxu0 %v889
    %1447 = vmatprep.subr.bf16.mxu0 %v894
    %1448 = vmatpush1.bf16.msra.mxu0 %v893
    %1449 = vmatprep.subr.bf16.mxu0 %v898
    %1450 = vmatpush1.bf16.msra.mxu0 %v897
    %1451 = vmatprep.subr.bf16.mxu0 %v902
    %1452 = vmatpush1.bf16.msra.mxu0 %v901
    %1453 = vmatprep.subr.bf16.mxu0 %v906
    %1454 = vmatpush1.bf16.msra.mxu0 %v905
    %1455 = vmatprep.subr.bf16.mxu0 %v910
    %1456 = vmatpush1.bf16.msra.mxu0 %v909
    %1457 = vmatprep.subr.bf16.mxu0 %v914
    %1458 = vmatpush1.bf16.msra.mxu0 %v913
    %1459 = vmatprep.subr.bf16.mxu0 %v918
    %1460 = vmatpush1.bf16.msra.mxu0 %v917
    %1461 = vmatprep.subr.bf16.mxu0 %v922
    %1462 = vmatpush1.bf16.msra.mxu0 %v921
    %1463 = vmatprep.subr.bf16.mxu0 %v926
    %1464 = vmatpush1.bf16.msra.mxu0 %v925
    %1465 = vmatprep.subr.bf16.mxu0 %v930
    %1466 = vmatpush1.bf16.msra.mxu0 %v929
    %1467 = vmatprep.mubr.bf16.mxu0 %v55
    %1468 = vmatmul.mubr.bf16.gmra.mrb[0].mxu0 %v54
    %v1469 = vpop.f32.mrb[0].mxu0
    %v1470 = vadd.f32 %v270, %v1469
    %v1471 = vpop.f32.mrb[0].mxu0
    %v1472 = vadd.f32 %v274, %v1471
    %v1473 = vpop.f32.mrb[0].mxu0
    %v1474 = vadd.f32 %v270, %v1473
    %v1475 = vpop.f32.mrb[0].mxu0
    %v1476 = vadd.f32 %v274, %v1475
    %1477 = vdwg.mxu0
    %1478 = vmatprep.subr.bf16.mxu0 %v934
    %1479 = vmatpush1.bf16.msra.mxu0 %v933
    %1480 = vmatprep.subr.bf16.mxu0 %v938
    %1481 = vmatpush1.bf16.msra.mxu0 %v937
    %1482 = vmatprep.subr.bf16.mxu0 %v942
    %1483 = vmatpush1.bf16.msra.mxu0 %v941
    %1484 = vmatprep.subr.bf16.mxu0 %v946
    %1485 = vmatpush1.bf16.msra.mxu0 %v945
    %1486 = vmatprep.subr.bf16.mxu0 %v950
    %1487 = vmatpush1.bf16.msra.mxu0 %v949
    %1488 = vmatprep.subr.bf16.mxu0 %v954
    %1489 = vmatpush1.bf16.msra.mxu0 %v953
    %1490 = vmatprep.subr.bf16.mxu0 %v958
    %1491 = vmatpush1.bf16.msra.mxu0 %v957
    %1492 = vmatprep.subr.bf16.mxu0 %v962
    %1493 = vmatpush1.bf16.msra.mxu0 %v961
    %1494 = vmatprep.subr.bf16.mxu0 %v966
    %1495 = vmatpush1.bf16.msra.mxu0 %v965
    %1496 = vmatprep.subr.bf16.mxu0 %v970
    %1497 = vmatpush1.bf16.msra.mxu0 %v969
    %1498 = vmatprep.subr.bf16.mxu0 %v974
    %1499 = vmatpush1.bf16.msra.mxu0 %v973
    %1500 = vmatprep.subr.bf16.mxu0 %v978
    %1501 = vmatpush1.bf16.msra.mxu0 %v977
    %1502 = vmatprep.subr.bf16.mxu0 %v982
    %1503 = vmatpush1.bf16.msra.mxu0 %v981
    %1504 = vmatprep.subr.bf16.mxu0 %v986
    %1505 = vmatpush1.bf16.msra.mxu0 %v985
    %1506 = vmatprep.subr.bf16.mxu0 %v990
    %1507 = vmatpush1.bf16.msra.mxu0 %v989
    %1508 = vmatprep.subr.bf16.mxu0 %v994
    %1509 = vmatpush1.bf16.msra.mxu0 %v993
    %1510 = vmatprep.mubr.bf16.mxu0 %v57
    %1511 = vmatmul.mubr.bf16.gmra.mrb[0].mxu0 %v56
    %v1512 = vpop.f32.mrb[0].mxu0
    %v1513 = vadd.f32 %v1470, %v1512
    %v1514 = vpop.f32.mrb[0].mxu0
    %v1515 = vadd.f32 %v1472, %v1514
    %v1516 = vpop.f32.mrb[0].mxu0
    %v1517 = vadd.f32 %v1474, %v1516
    %v1518 = vpop.f32.mrb[0].mxu0
    %v1519 = vadd.f32 %v1476, %v1518
    %1520 = vdwg.mxu0
    %1521 = vmatprep.subr.bf16.mxu0 %v998
    %1522 = vmatpush1.bf16.msra.mxu0 %v997
    %1523 = vmatprep.subr.bf16.mxu0 %v1002
    %1524 = vmatpush1.bf16.msra.mxu0 %v1001
    %1525 = vmatprep.subr.bf16.mxu0 %v1006
    %1526 = vmatpush1.bf16.msra.mxu0 %v1005
    %1527 = vmatprep.subr.bf16.mxu0 %v1010
    %1528 = vmatpush1.bf16.msra.mxu0 %v1009
    %1529 = vmatprep.subr.bf16.mxu0 %v1014
    %1530 = vmatpush1.bf16.msra.mxu0 %v1013
    %1531 = vmatprep.subr.bf16.mxu0 %v1018
    %1532 = vmatpush1.bf16.msra.mxu0 %v1017
    %1533 = vmatprep.subr.bf16.mxu0 %v1022
    %1534 = vmatpush1.bf16.msra.mxu0 %v1021
    %1535 = vmatprep.subr.bf16.mxu0 %v1026
    %1536 = vmatpush1.bf16.msra.mxu0 %v1025
    %1537 = vmatprep.subr.bf16.mxu0 %v1030
    %1538 = vmatpush1.bf16.msra.mxu0 %v1029
    %1539 = vmatprep.subr.bf16.mxu0 %v1034
    %1540 = vmatpush1.bf16.msra.mxu0 %v1033
    %1541 = vmatprep.subr.bf16.mxu0 %v1038
    %1542 = vmatpush1.bf16.msra.mxu0 %v1037
    %1543 = vmatprep.subr.bf16.mxu0 %v1042
    %1544 = vmatpush1.bf16.msra.mxu0 %v1041
    %1545 = vmatprep.subr.bf16.mxu0 %v1046
    %1546 = vmatpush1.bf16.msra.mxu0 %v1045
    %1547 = vmatprep.subr.bf16.mxu0 %v1050
    %1548 = vmatpush1.bf16.msra.mxu0 %v1049
    %1549 = vmatprep.subr.bf16.mxu0 %v1054
    %1550 = vmatpush1.bf16.msra.mxu0 %v1053
    %1551 = vmatprep.subr.bf16.mxu0 %v1058
    %1552 = vmatpush1.bf16.msra.mxu0 %v1057
    %1553 = vmatprep.mubr.bf16.mxu0 %v59
    %1554 = vmatmul.mubr.bf16.gmra.mrb[0].mxu0 %v58
    %v1555 = vpop.f32.mrb[0].mxu0
    %v1556 = vadd.f32 %v1513, %v1555
    %v1557 = vpop.f32.mrb[0].mxu0
    %v1558 = vadd.f32 %v1515, %v1557
    %v1559 = vpop.f32.mrb[0].mxu0
    %v1560 = vadd.f32 %v1517, %v1559
    %v1561 = vpop.f32.mrb[0].mxu0
    %v1562 = vadd.f32 %v1519, %v1561
    %1563 = vdwg.mxu0
    %1564 = vmatprep.subr.bf16.mxu0 %v1062
    %1565 = vmatpush1.bf16.msra.mxu0 %v1061
    %1566 = vmatprep.subr.bf16.mxu0 0
    %1567 = vmatpush1.bf16.msra.mxu0 0
    %1568 = vmatprep.subr.bf16.mxu0 0
    %1569 = vmatpush1.bf16.msra.mxu0 0
    %1570 = vmatprep.subr.bf16.mxu0 0
    %1571 = vmatpush1.bf16.msra.mxu0 0
    %1572 = vmatprep.subr.bf16.mxu0 0
    %1573 = vmatpush1.bf16.msra.mxu0 0
    %1574 = vmatprep.subr.bf16.mxu0 0
    %1575 = vmatpush1.bf16.msra.mxu0 0
    %1576 = vmatprep.subr.bf16.mxu0 0
    %1577 = vmatpush1.bf16.msra.mxu0 0
    %1578 = vmatprep.subr.bf16.mxu0 0
    %1579 = vmatpush1.bf16.msra.mxu0 0
    %1580 = vmatprep.subr.bf16.mxu0 0
    %1581 = vmatpush1.bf16.msra.mxu0 0
    %1582 = vmatprep.subr.bf16.mxu0 0
    %1583 = vmatpush1.bf16.msra.mxu0 0
    %1584 = vmatprep.subr.bf16.mxu0 0
    %1585 = vmatpush1.bf16.msra.mxu0 0
    %1586 = vmatprep.subr.bf16.mxu0 0
    %1587 = vmatpush1.bf16.msra.mxu0 0
    %1588 = vmatprep.subr.bf16.mxu0 0
    %1589 = vmatpush1.bf16.msra.mxu0 0
    %1590 = vmatprep.subr.bf16.mxu0 0
    %1591 = vmatpush1.bf16.msra.mxu0 0
    %1592 = vmatprep.subr.bf16.mxu0 0
    %1593 = vmatpush1.bf16.msra.mxu0 0
    %1594 = vmatprep.subr.bf16.mxu0 0
    %1595 = vmatpush1.bf16.msra.mxu0 0
    %1596 = vmatprep.mubr.bf16.mxu0 0
    %1597 = vmatmul.mubr.bf16.gmra.mrb[0].mxu0 %v1261
    %v1598 = vpop.f32.mrb[0].mxu0
    %v1599 = vadd.f32 %v1556, %v1598
    %v1600 = vpop.f32.mrb[0].mxu0
    %v1601 = vadd.f32 %v1558, %v1600
    %v1602 = vpop.f32.mrb[0].mxu0
    %v1603 = vadd.f32 %v1560, %v1602
    %v1604 = vpop.f32.mrb[0].mxu0
    %v1605 = vadd.f32 %v1562, %v1604
    %1606 = vdwg.mxu0
    %v1607 = vmax.f32 %v1427, 0.0
    %v1608 = vmax.f32 %v1429, 0.0
    %v1609 = vmax.f32 %v1599, 0.0
    %v1610 = vmax.f32 %v1601, 0.0
    %v1611 = vmax.f32 %v1431, 0.0
    %v1612 = vmax.f32 %v1433, 0.0
    %v1613 = vmax.f32 %v1603, 0.0
    %v1614 = vmax.f32 %v1605, 0.0
    %v1615 = vpack.c.bf16 %v1611, %v1607
    %v1616 = vpack.c.bf16 %v1612, %v1608
    %v1617 = vpack.c.bf16 %v1613, %v1609
    %v1618 = vpack.c.bf16 %v1614, %v1610
    %v1619 = vld [vmem:[%s4] sm:$0xff]
    %v1620 = vld [vmem:[%s4 + $0x8] sm:$0xff]
    %v1621 = vld [vmem:[%s4 + $0x10] sm:$0xff]
    %v1622 = vld [vmem:[%s4 + $0x18] sm:$0xff]
    %v1623 = vld [vmem:[%s4 + $0x20] sm:$0xff]
    %v1624 = vld [vmem:[%s4 + $0x28] sm:$0xff]
    %v1625 = vld [vmem:[%s4 + $0x30] sm:$0xff]
    %v1626 = vld [vmem:[%s4 + $0x38] sm:$0xff]
    %v1627 = vld [vmem:[%s4 + $0x40] sm:$0xff]
    %v1628 = vld [vmem:[%s4 + $0x48] sm:$0xff]
    %v1629 = vld [vmem:[%s4 + $0x50] sm:$0xff]
    %v1630 = vld [vmem:[%s4 + $0x58] sm:$0xff]
    %v1631 = vld [vmem:[%s4 + $0x60] sm:$0xff]
    %v1632 = vld [vmem:[%s4 + $0x68] sm:$0xff]
    %v1633 = vld [vmem:[%s4 + $0x70] sm:$0xff]
    %v1634 = vld [vmem:[%s4 + $0x78] sm:$0xff]
    %v1635 = vld [vmem:[%s4 + $0x80] sm:$0xff]
    %v1636 = vld [vmem:[%s4 + $0x88] sm:$0xff]
    %v1637 = vld [vmem:[%s4 + $0x90] sm:$0xff]
    %v1638 = vld [vmem:[%s4 + $0x98] sm:$0xff]
    %v1639 = vld [vmem:[%s4 + $0xa0] sm:$0xff]
    %v1640 = vld [vmem:[%s4 + $0xa8] sm:$0xff]
    %v1641 = vld [vmem:[%s4 + $0xb0] sm:$0xff]
    %v1642 = vld [vmem:[%s4 + $0xb8] sm:$0xff]
    %v1643 = vld [vmem:[%s4 + $0xc0] sm:$0xff]
    %v1644 = vld [vmem:[%s4 + $0xc8] sm:$0xff]
    %v1645 = vld [vmem:[%s4 + $0xd0] sm:$0xff]
    %v1646 = vld [vmem:[%s4 + $0xd8] sm:$0xff]
    %v1647 = vld [vmem:[%s4 + $0xe0] sm:$0xff]
    %v1648 = vld [vmem:[%s4 + $0xe8] sm:$0xff]
    %v1649 = vld [vmem:[%s4 + $0xf0] sm:$0xff]
    %v1650 = vld [vmem:[%s4 + $0xf8] sm:$0xff]
    %v1651 = vld [vmem:[%s4 + $0x100] sm:$0xff]
    %v1652 = vld [vmem:[%s4 + $0x108] sm:$0xff]
    %v1653 = vld [vmem:[%s4 + $0x110] sm:$0xff]
    %v1654 = vld [vmem:[%s4 + $0x118] sm:$0xff]
    %v1655 = vld [vmem:[%s4 + $0x120] sm:$0xff]
    %v1656 = vld [vmem:[%s4 + $0x128] sm:$0xff]
    %v1657 = vld [vmem:[%s4 + $0x130] sm:$0xff]
    %v1658 = vld [vmem:[%s4 + $0x138] sm:$0xff]
    %v1659 = vld [vmem:[%s4 + $0x140] sm:$0xff]
    %v1660 = vld [vmem:[%s4 + $0x148] sm:$0xff]
    %v1661 = vld [vmem:[%s4 + $0x150] sm:$0xff]
    %v1662 = vld [vmem:[%s4 + $0x158] sm:$0xff]
    %v1663 = vld [vmem:[%s4 + $0x160] sm:$0xff]
    %v1664 = vld [vmem:[%s4 + $0x168] sm:$0xff]
    %v1665 = vld [vmem:[%s4 + $0x170] sm:$0xff]
    %v1666 = vld [vmem:[%s4 + $0x178] sm:$0xff]
    %v1667 = vld [vmem:[%s4 + $0x180] sm:$0xff]
    %v1668 = vld [vmem:[%s4 + $0x188] sm:$0xff]
    %v1669 = vld [vmem:[%s4 + $0x190] sm:$0xff]
    %v1670 = vld [vmem:[%s4 + $0x198] sm:$0xff]
    %v1671 = vld [vmem:[%s4 + $0x1a0] sm:$0xff]
    %v1672 = vld [vmem:[%s4 + $0x1a8] sm:$0xff]
    %v1673 = vld [vmem:[%s4 + $0x1b0] sm:$0xff]
    %v1674 = vld [vmem:[%s4 + $0x1b8] sm:$0xff]
    %v1675 = vld [vmem:[%s4 + $0x1c0] sm:$0xff]
    %v1676 = vld [vmem:[%s4 + $0x1c8] sm:$0xff]
    %v1677 = vld [vmem:[%s4 + $0x1d0] sm:$0xff]
    %v1678 = vld [vmem:[%s4 + $0x1d8] sm:$0xff]
    %v1679 = vld [vmem:[%s4 + $0x1e0] sm:$0xff]
    %v1680 = vld [vmem:[%s4 + $0x1e8] sm:$0xff]
    %v1681 = vld [vmem:[%s4 + $0x1f0] sm:$0xff]
    %v1682 = vld [vmem:[%s4 + $0x1f8] sm:$0xff]
    %v1683 = vld [vmem:[%s5] sm:$0x3]
    %v1685 = vlaneseq
    %v1686 = vshrl.u32 %v1685, 7
    %v1687 = vsub.s32 0, %v1686
    %v1688 = vrot.slane %v1683, %v1687
    %v1689 = vlaneseq
    %v1690 = vshrl.u32 %v1689, 7
    %v1691 = vsub.s32 1, %v1690
    %v1692 = vrot.slane %v1683, %v1691
    %v1759 = vunpack.c.l.b16 %v1619
    %v1760 = vunpack.c.h.b16 %v1619
    %v1761 = vunpack.c.l.b16 %v1620
    %v1762 = vunpack.c.h.b16 %v1620
    %v1763 = vunpack.c.l.b16 %v1621
    %v1764 = vunpack.c.h.b16 %v1621
    %v1765 = vunpack.c.l.b16 %v1622
    %v1766 = vunpack.c.h.b16 %v1622
    %v1767 = vunpack.c.l.b16 %v1623
    %v1768 = vunpack.c.h.b16 %v1623
    %v1769 = vunpack.c.l.b16 %v1624
    %v1770 = vunpack.c.h.b16 %v1624
    %v1771 = vunpack.c.l.b16 %v1625
    %v1772 = vunpack.c.h.b16 %v1625
    %v1773 = vunpack.c.l.b16 %v1626
    %v1774 = vunpack.c.h.b16 %v1626
    %v1775 = vunpack.c.l.b16 %v1627
    %v1776 = vunpack.c.h.b16 %v1627
    %v1777 = vunpack.c.l.b16 %v1628
    %v1778 = vunpack.c.h.b16 %v1628
    %v1779 = vunpack.c.l.b16 %v1629
    %v1780 = vunpack.c.h.b16 %v1629
    %v1781 = vunpack.c.l.b16 %v1630
    %v1782 = vunpack.c.h.b16 %v1630
    %v1783 = vunpack.c.l.b16 %v1631
    %v1784 = vunpack.c.h.b16 %v1631
    %v1785 = vunpack.c.l.b16 %v1632
    %v1786 = vunpack.c.h.b16 %v1632
    %v1787 = vunpack.c.l.b16 %v1633
    %v1788 = vunpack.c.h.b16 %v1633
    %v1789 = vunpack.c.l.b16 %v1634
    %v1790 = vunpack.c.h.b16 %v1634
    %v1791 = vunpack.c.l.b16 %v1635
    %v1792 = vunpack.c.h.b16 %v1635
    %v1793 = vunpack.c.l.b16 %v1636
    %v1794 = vunpack.c.h.b16 %v1636
    %v1795 = vunpack.c.l.b16 %v1637
    %v1796 = vunpack.c.h.b16 %v1637
    %v1797 = vunpack.c.l.b16 %v1638
    %v1798 = vunpack.c.h.b16 %v1638
    %v1799 = vunpack.c.l.b16 %v1639
    %v1800 = vunpack.c.h.b16 %v1639
    %v1801 = vunpack.c.l.b16 %v1640
    %v1802 = vunpack.c.h.b16 %v1640
    %v1803 = vunpack.c.l.b16 %v1641
    %v1804 = vunpack.c.h.b16 %v1641
    %v1805 = vunpack.c.l.b16 %v1642
    %v1806 = vunpack.c.h.b16 %v1642
    %v1807 = vunpack.c.l.b16 %v1643
    %v1808 = vunpack.c.h.b16 %v1643
    %v1809 = vunpack.c.l.b16 %v1644
    %v1810 = vunpack.c.h.b16 %v1644
    %v1811 = vunpack.c.l.b16 %v1645
    %v1812 = vunpack.c.h.b16 %v1645
    %v1813 = vunpack.c.l.b16 %v1646
    %v1814 = vunpack.c.h.b16 %v1646
    %v1815 = vunpack.c.l.b16 %v1647
    %v1816 = vunpack.c.h.b16 %v1647
    %v1817 = vunpack.c.l.b16 %v1648
    %v1818 = vunpack.c.h.b16 %v1648
    %v1819 = vunpack.c.l.b16 %v1649
    %v1820 = vunpack.c.h.b16 %v1649
    %v1821 = vunpack.c.l.b16 %v1650
    %v1822 = vunpack.c.h.b16 %v1650
    %v1823 = vunpack.c.l.b16 %v1651
    %v1824 = vunpack.c.h.b16 %v1651
    %v1825 = vunpack.c.l.b16 %v1652
    %v1826 = vunpack.c.h.b16 %v1652
    %v1827 = vunpack.c.l.b16 %v1653
    %v1828 = vunpack.c.h.b16 %v1653
    %v1829 = vunpack.c.l.b16 %v1654
    %v1830 = vunpack.c.h.b16 %v1654
    %v1831 = vunpack.c.l.b16 %v1655
    %v1832 = vunpack.c.h.b16 %v1655
    %v1833 = vunpack.c.l.b16 %v1656
    %v1834 = vunpack.c.h.b16 %v1656
    %v1835 = vunpack.c.l.b16 %v1657
    %v1836 = vunpack.c.h.b16 %v1657
    %v1837 = vunpack.c.l.b16 %v1658
    %v1838 = vunpack.c.h.b16 %v1658
    %v1839 = vunpack.c.l.b16 %v1659
    %v1840 = vunpack.c.h.b16 %v1659
    %v1841 = vunpack.c.l.b16 %v1660
    %v1842 = vunpack.c.h.b16 %v1660
    %v1843 = vunpack.c.l.b16 %v1661
    %v1844 = vunpack.c.h.b16 %v1661
    %v1845 = vunpack.c.l.b16 %v1662
    %v1846 = vunpack.c.h.b16 %v1662
    %v1847 = vunpack.c.l.b16 %v1663
    %v1848 = vunpack.c.h.b16 %v1663
    %v1849 = vunpack.c.l.b16 %v1664
    %v1850 = vunpack.c.h.b16 %v1664
    %v1851 = vunpack.c.l.b16 %v1665
    %v1852 = vunpack.c.h.b16 %v1665
    %v1853 = vunpack.c.l.b16 %v1666
    %v1854 = vunpack.c.h.b16 %v1666
    %v1855 = vunpack.c.l.b16 %v1667
    %v1856 = vunpack.c.h.b16 %v1667
    %v1857 = vunpack.c.l.b16 %v1668
    %v1858 = vunpack.c.h.b16 %v1668
    %v1859 = vunpack.c.l.b16 %v1669
    %v1860 = vunpack.c.h.b16 %v1669
    %v1861 = vunpack.c.l.b16 %v1670
    %v1862 = vunpack.c.h.b16 %v1670
    %v1863 = vunpack.c.l.b16 %v1671
    %v1864 = vunpack.c.h.b16 %v1671
    %v1865 = vunpack.c.l.b16 %v1672
    %v1866 = vunpack.c.h.b16 %v1672
    %v1867 = vunpack.c.l.b16 %v1673
    %v1868 = vunpack.c.h.b16 %v1673
    %v1869 = vunpack.c.l.b16 %v1674
    %v1870 = vunpack.c.h.b16 %v1674
    %v1871 = vunpack.c.l.b16 %v1675
    %v1872 = vunpack.c.h.b16 %v1675
    %v1873 = vunpack.c.l.b16 %v1676
    %v1874 = vunpack.c.h.b16 %v1676
    %v1875 = vunpack.c.l.b16 %v1677
    %v1876 = vunpack.c.h.b16 %v1677
    %v1877 = vunpack.c.l.b16 %v1678
    %v1878 = vunpack.c.h.b16 %v1678
    %v1879 = vunpack.c.l.b16 %v1679
    %v1880 = vunpack.c.h.b16 %v1679
    %v1881 = vunpack.c.l.b16 %v1680
    %v1882 = vunpack.c.h.b16 %v1680
    %v1883 = vunpack.c.l.b16 %v1681
    %v1884 = vunpack.c.h.b16 %v1681
    %v1885 = vunpack.c.l.b16 %v1682
    %v1886 = vunpack.c.h.b16 %v1682
    %v1887 = vpack.c.b16 %v1761, %v1759
    %v1888 = vpack.c.b16 %v1762, %v1760
    %v1889 = vpack.c.b16 %v1765, %v1763
    %v1890 = vpack.c.b16 %v1766, %v1764
    %v1891 = vpack.c.b16 %v1769, %v1767
    %v1892 = vpack.c.b16 %v1770, %v1768
    %v1893 = vpack.c.b16 %v1773, %v1771
    %v1894 = vpack.c.b16 %v1774, %v1772
    %v1895 = vpack.c.b16 %v1777, %v1775
    %v1896 = vpack.c.b16 %v1778, %v1776
    %v1897 = vpack.c.b16 %v1781, %v1779
    %v1898 = vpack.c.b16 %v1782, %v1780
    %v1899 = vpack.c.b16 %v1785, %v1783
    %v1900 = vpack.c.b16 %v1786, %v1784
    %v1901 = vpack.c.b16 %v1789, %v1787
    %v1902 = vpack.c.b16 %v1790, %v1788
    %v1903 = vpack.c.b16 %v1793, %v1791
    %v1904 = vpack.c.b16 %v1794, %v1792
    %v1905 = vpack.c.b16 %v1797, %v1795
    %v1906 = vpack.c.b16 %v1798, %v1796
    %v1907 = vpack.c.b16 %v1801, %v1799
    %v1908 = vpack.c.b16 %v1802, %v1800
    %v1909 = vpack.c.b16 %v1805, %v1803
    %v1910 = vpack.c.b16 %v1806, %v1804
    %v1911 = vpack.c.b16 %v1809, %v1807
    %v1912 = vpack.c.b16 %v1810, %v1808
    %v1913 = vpack.c.b16 %v1813, %v1811
    %v1914 = vpack.c.b16 %v1814, %v1812
    %v1915 = vpack.c.b16 %v1817, %v1815
    %v1916 = vpack.c.b16 %v1818, %v1816
    %v1917 = vpack.c.b16 %v1821, %v1819
    %v1918 = vpack.c.b16 %v1822, %v1820
    %v1919 = vpack.c.b16 %v1825, %v1823
    %v1920 = vpack.c.b16 %v1826, %v1824
    %v1921 = vpack.c.b16 %v1829, %v1827
    %v1922 = vpack.c.b16 %v1830, %v1828
    %v1923 = vpack.c.b16 %v1833, %v1831
    %v1924 = vpack.c.b16 %v1834, %v1832
    %v1925 = vpack.c.b16 %v1837, %v1835
    %v1926 = vpack.c.b16 %v1838, %v1836
    %v1927 = vpack.c.b16 %v1841, %v1839
    %v1928 = vpack.c.b16 %v1842, %v1840
    %v1929 = vpack.c.b16 %v1845, %v1843
    %v1930 = vpack.c.b16 %v1846, %v1844
    %v1931 = vpack.c.b16 %v1849, %v1847
    %v1932 = vpack.c.b16 %v1850, %v1848
    %v1933 = vpack.c.b16 %v1853, %v1851
    %v1934 = vpack.c.b16 %v1854, %v1852
    %v1935 = vpack.c.b16 %v1857, %v1855
    %v1936 = vpack.c.b16 %v1858, %v1856
    %v1937 = vpack.c.b16 %v1861, %v1859
    %v1938 = vpack.c.b16 %v1862, %v1860
    %v1939 = vpack.c.b16 %v1865, %v1863
    %v1940 = vpack.c.b16 %v1866, %v1864
    %v1941 = vpack.c.b16 %v1869, %v1867
    %v1942 = vpack.c.b16 %v1870, %v1868
    %v1943 = vpack.c.b16 %v1873, %v1871
    %v1944 = vpack.c.b16 %v1874, %v1872
    %v1945 = vpack.c.b16 %v1877, %v1875
    %v1946 = vpack.c.b16 %v1878, %v1876
    %v1947 = vpack.c.b16 %v1881, %v1879
    %v1948 = vpack.c.b16 %v1882, %v1880
    %v1949 = vpack.c.b16 %v1885, %v1883
    %v1950 = vpack.c.b16 %v1886, %v1884
    %2015 = vmatprep.subr.bf16.mxu0 %v1888
    %2016 = vmatpush1.bf16.msra.mxu0 %v1887
    %2017 = vmatprep.subr.bf16.mxu0 %v1890
    %2018 = vmatpush1.bf16.msra.mxu0 %v1889
    %2019 = vmatprep.subr.bf16.mxu0 %v1892
    %2020 = vmatpush1.bf16.msra.mxu0 %v1891
    %2021 = vmatprep.subr.bf16.mxu0 %v1894
    %2022 = vmatpush1.bf16.msra.mxu0 %v1893
    %2023 = vmatprep.subr.bf16.mxu0 %v1896
    %2024 = vmatpush1.bf16.msra.mxu0 %v1895
    %2025 = vmatprep.subr.bf16.mxu0 %v1898
    %2026 = vmatpush1.bf16.msra.mxu0 %v1897
    %2027 = vmatprep.subr.bf16.mxu0 %v1900
    %2028 = vmatpush1.bf16.msra.mxu0 %v1899
    %2029 = vmatprep.subr.bf16.mxu0 %v1902
    %2030 = vmatpush1.bf16.msra.mxu0 %v1901
    %2031 = vmatprep.subr.bf16.mxu0 %v1904
    %2032 = vmatpush1.bf16.msra.mxu0 %v1903
    %2033 = vmatprep.subr.bf16.mxu0 %v1906
    %2034 = vmatpush1.bf16.msra.mxu0 %v1905
    %2035 = vmatprep.subr.bf16.mxu0 %v1908
    %2036 = vmatpush1.bf16.msra.mxu0 %v1907
    %2037 = vmatprep.subr.bf16.mxu0 %v1910
    %2038 = vmatpush1.bf16.msra.mxu0 %v1909
    %2039 = vmatprep.subr.bf16.mxu0 %v1912
    %2040 = vmatpush1.bf16.msra.mxu0 %v1911
    %2041 = vmatprep.subr.bf16.mxu0 %v1914
    %2042 = vmatpush1.bf16.msra.mxu0 %v1913
    %2043 = vmatprep.subr.bf16.mxu0 %v1916
    %2044 = vmatpush1.bf16.msra.mxu0 %v1915
    %2045 = vmatprep.subr.bf16.mxu0 %v1918
    %2046 = vmatpush1.bf16.msra.mxu0 %v1917
    %2047 = vmatprep.mubr.bf16.mxu0 %v1616
    %2048 = vmatmul.mubr.bf16.gmra.mrb[0].mxu0 %v1615
    %v2049 = vpop.f32.mrb[0].mxu0
    %v2050 = vadd.f32 %v1688, %v2049
    %v2051 = vpop.f32.mrb[0].mxu0
    %v2052 = vadd.f32 %v1692, %v2051
    %v2053 = vpop.f32.mrb[0].mxu0
    %v2054 = vadd.f32 %v1688, %v2053
    %v2055 = vpop.f32.mrb[0].mxu0
    %v2056 = vadd.f32 %v1692, %v2055
    %2057 = vdwg.mxu0
    %2058 = vmatprep.subr.bf16.mxu0 %v1920
    %2059 = vmatpush1.bf16.msra.mxu0 %v1919
    %2060 = vmatprep.subr.bf16.mxu0 %v1922
    %2061 = vmatpush1.bf16.msra.mxu0 %v1921
    %2062 = vmatprep.subr.bf16.mxu0 %v1924
    %2063 = vmatpush1.bf16.msra.mxu0 %v1923
    %2064 = vmatprep.subr.bf16.mxu0 %v1926
    %2065 = vmatpush1.bf16.msra.mxu0 %v1925
    %2066 = vmatprep.subr.bf16.mxu0 %v1928
    %2067 = vmatpush1.bf16.msra.mxu0 %v1927
    %2068 = vmatprep.subr.bf16.mxu0 %v1930
    %2069 = vmatpush1.bf16.msra.mxu0 %v1929
    %2070 = vmatprep.subr.bf16.mxu0 %v1932
    %2071 = vmatpush1.bf16.msra.mxu0 %v1931
    %2072 = vmatprep.subr.bf16.mxu0 %v1934
    %2073 = vmatpush1.bf16.msra.mxu0 %v1933
    %2074 = vmatprep.subr.bf16.mxu0 %v1936
    %2075 = vmatpush1.bf16.msra.mxu0 %v1935
    %2076 = vmatprep.subr.bf16.mxu0 %v1938
    %2077 = vmatpush1.bf16.msra.mxu0 %v1937
    %2078 = vmatprep.subr.bf16.mxu0 %v1940
    %2079 = vmatpush1.bf16.msra.mxu0 %v1939
    %2080 = vmatprep.subr.bf16.mxu0 %v1942
    %2081 = vmatpush1.bf16.msra.mxu0 %v1941
    %2082 = vmatprep.subr.bf16.mxu0 %v1944
    %2083 = vmatpush1.bf16.msra.mxu0 %v1943
    %2084 = vmatprep.subr.bf16.mxu0 %v1946
    %2085 = vmatpush1.bf16.msra.mxu0 %v1945
    %2086 = vmatprep.subr.bf16.mxu0 %v1948
    %2087 = vmatpush1.bf16.msra.mxu0 %v1947
    %2088 = vmatprep.subr.bf16.mxu0 %v1950
    %2089 = vmatpush1.bf16.msra.mxu0 %v1949
    %2090 = vmatprep.mubr.bf16.mxu0 %v1618
    %2091 = vmatmul.mubr.bf16.gmra.mrb[0].mxu0 %v1617
    %v2092 = vpop.f32.mrb[0].mxu0
    %v2093 = vadd.f32 %v2050, %v2092
    %v2094 = vpop.f32.mrb[0].mxu0
    %v2095 = vadd.f32 %v2052, %v2094
    %v2096 = vpop.f32.mrb[0].mxu0
    %v2097 = vadd.f32 %v2054, %v2096
    %v2098 = vpop.f32.mrb[0].mxu0
    %v2099 = vadd.f32 %v2056, %v2098
    %2100 = vdwg.mxu0
    %2101 = vst [vmem:[#allocation4] sm:$0xff] %v2093
    %2102 = vst [vmem:[#allocation4 + $0x8] sm:$0xff] %v2095
    %2103 = vst [vmem:[#allocation4 + $0x10] sm:$0xff] %v2097
    %2104 = vst [vmem:[#allocation4 + $0x18] sm:$0xff] %v2099
    %v2105 = vld [vmem:[%s1] sm:$0xff]
    %v2106 = vld [vmem:[%s1 + $0x8] sm:$0xff]
    %v2107 = vmul.f32 %v2095, 0.5
    %v2108 = vmul.f32 %v2099, 0.5
    %v2109 = vmul.f32 %v2107, 1.442695
    %v2110 = vpow.pop %v2109
    %v2111 = vmul.f32 %v2108, 1.442695
    %v2112 = vpow.pop %v2111
    %v2113 = vmul.f32 %v2105, %v2110
    %v2114 = vmul.f32 %v2106, %v2112
    %v2115 = vadd.f32 %v2093, %v2113
    %v2116 = vadd.f32 %v2097, %v2114
    %v2117 = vpack.c.bf16 %v2116, %v2115
    %v2118 = vld [vmem:[%s6] sm:$0xff]
    %v2119 = vld [vmem:[%s6 + $0x8] sm:$0xff]
    %v2120 = vld [vmem:[%s6 + $0x10] sm:$0xff]
    %v2121 = vld [vmem:[%s6 + $0x18] sm:$0xff]
    %v2122 = vld [vmem:[%s6 + $0x20] sm:$0xff]
    %v2123 = vld [vmem:[%s6 + $0x28] sm:$0xff]
    %v2124 = vld [vmem:[%s6 + $0x30] sm:$0xff]
    %v2125 = vld [vmem:[%s6 + $0x38] sm:$0xff]
    %v2126 = vld [vmem:[%s6 + $0x40] sm:$0xff]
    %v2127 = vld [vmem:[%s6 + $0x48] sm:$0xff]
    %v2128 = vld [vmem:[%s6 + $0x50] sm:$0xff]
    %v2129 = vld [vmem:[%s6 + $0x58] sm:$0xff]
    %v2130 = vld [vmem:[%s6 + $0x60] sm:$0xff]
    %v2131 = vld [vmem:[%s6 + $0x68] sm:$0xff]
    %v2132 = vld [vmem:[%s6 + $0x70] sm:$0xff]
    %v2133 = vld [vmem:[%s6 + $0x78] sm:$0xff]
    %v2134 = vld [vmem:[%s6 + $0x80] sm:$0xff]
    %v2135 = vld [vmem:[%s6 + $0x88] sm:$0xff]
    %v2136 = vld [vmem:[%s6 + $0x90] sm:$0xff]
    %v2137 = vld [vmem:[%s6 + $0x98] sm:$0xff]
    %v2138 = vld [vmem:[%s6 + $0xa0] sm:$0xff]
    %v2139 = vld [vmem:[%s6 + $0xa8] sm:$0xff]
    %v2140 = vld [vmem:[%s6 + $0xb0] sm:$0xff]
    %v2141 = vld [vmem:[%s6 + $0xb8] sm:$0xff]
    %v2142 = vld [vmem:[%s6 + $0xc0] sm:$0xff]
    %v2143 = vld [vmem:[%s6 + $0xc8] sm:$0xff]
    %v2144 = vld [vmem:[%s6 + $0xd0] sm:$0xff]
    %v2145 = vld [vmem:[%s6 + $0xd8] sm:$0xff]
    %v2146 = vld [vmem:[%s6 + $0xe0] sm:$0xff]
    %v2147 = vld [vmem:[%s6 + $0xe8] sm:$0xff]
    %v2148 = vld [vmem:[%s6 + $0xf0] sm:$0xff]
    %v2149 = vld [vmem:[%s6 + $0xf8] sm:$0xff]
    %v2150 = vld [vmem:[%s7] sm:$0xf]
    %v2152 = vlaneseq
    %v2153 = vshrl.u32 %v2152, 7
    %v2154 = vsub.s32 0, %v2153
    %v2155 = vrot.slane %v2150, %v2154
    %v2156 = vlaneseq
    %v2157 = vshrl.u32 %v2156, 7
    %v2158 = vsub.s32 1, %v2157
    %v2159 = vrot.slane %v2150, %v2158
    %v2160 = vlaneseq
    %v2161 = vshrl.u32 %v2160, 7
    %v2162 = vsub.s32 2, %v2161
    %v2163 = vrot.slane %v2150, %v2162
    %v2164 = vlaneseq
    %v2165 = vshrl.u32 %v2164, 7
    %v2166 = vsub.s32 3, %v2165
    %v2167 = vrot.slane %v2150, %v2166
    %v2204 = vunpack.c.l.b16 %v2118
    %v2205 = vunpack.c.h.b16 %v2118
    %v2206 = vunpack.c.l.b16 %v2119
    %v2207 = vunpack.c.h.b16 %v2119
    %v2208 = vunpack.c.l.b16 %v2120
    %v2209 = vunpack.c.h.b16 %v2120
    %v2210 = vunpack.c.l.b16 %v2121
    %v2211 = vunpack.c.h.b16 %v2121
    %v2212 = vunpack.c.l.b16 %v2122
    %v2213 = vunpack.c.h.b16 %v2122
    %v2214 = vunpack.c.l.b16 %v2123
    %v2215 = vunpack.c.h.b16 %v2123
    %v2216 = vunpack.c.l.b16 %v2124
    %v2217 = vunpack.c.h.b16 %v2124
    %v2218 = vunpack.c.l.b16 %v2125
    %v2219 = vunpack.c.h.b16 %v2125
    %v2220 = vunpack.c.l.b16 %v2126
    %v2221 = vunpack.c.h.b16 %v2126
    %v2222 = vunpack.c.l.b16 %v2127
    %v2223 = vunpack.c.h.b16 %v2127
    %v2224 = vunpack.c.l.b16 %v2128
    %v2225 = vunpack.c.h.b16 %v2128
    %v2226 = vunpack.c.l.b16 %v2129
    %v2227 = vunpack.c.h.b16 %v2129
    %v2228 = vunpack.c.l.b16 %v2130
    %v2229 = vunpack.c.h.b16 %v2130
    %v2230 = vunpack.c.l.b16 %v2131
    %v2231 = vunpack.c.h.b16 %v2131
    %v2232 = vunpack.c.l.b16 %v2132
    %v2233 = vunpack.c.h.b16 %v2132
    %v2234 = vunpack.c.l.b16 %v2133
    %v2235 = vunpack.c.h.b16 %v2133
    %v2236 = vunpack.c.l.b16 %v2134
    %v2237 = vunpack.c.h.b16 %v2134
    %v2238 = vunpack.c.l.b16 %v2135
    %v2239 = vunpack.c.h.b16 %v2135
    %v2240 = vunpack.c.l.b16 %v2136
    %v2241 = vunpack.c.h.b16 %v2136
    %v2242 = vunpack.c.l.b16 %v2137
    %v2243 = vunpack.c.h.b16 %v2137
    %v2244 = vunpack.c.l.b16 %v2138
    %v2245 = vunpack.c.h.b16 %v2138
    %v2246 = vunpack.c.l.b16 %v2139
    %v2247 = vunpack.c.h.b16 %v2139
    %v2248 = vunpack.c.l.b16 %v2140
    %v2249 = vunpack.c.h.b16 %v2140
    %v2250 = vunpack.c.l.b16 %v2141
    %v2251 = vunpack.c.h.b16 %v2141
    %v2252 = vunpack.c.l.b16 %v2142
    %v2253 = vunpack.c.h.b16 %v2142
    %v2254 = vunpack.c.l.b16 %v2143
    %v2255 = vunpack.c.h.b16 %v2143
    %v2256 = vunpack.c.l.b16 %v2144
    %v2257 = vunpack.c.h.b16 %v2144
    %v2258 = vunpack.c.l.b16 %v2145
    %v2259 = vunpack.c.h.b16 %v2145
    %v2260 = vunpack.c.l.b16 %v2146
    %v2261 = vunpack.c.h.b16 %v2146
    %v2262 = vunpack.c.l.b16 %v2147
    %v2263 = vunpack.c.h.b16 %v2147
    %v2264 = vunpack.c.l.b16 %v2148
    %v2265 = vunpack.c.h.b16 %v2148
    %v2266 = vunpack.c.l.b16 %v2149
    %v2267 = vunpack.c.h.b16 %v2149
    %v2268 = vpack.c.b16 %v2208, %v2204
    %v2269 = vpack.c.b16 %v2209, %v2205
    %v2270 = vpack.c.b16 %v2210, %v2206
    %v2271 = vpack.c.b16 %v2211, %v2207
    %v2272 = vpack.c.b16 %v2216, %v2212
    %v2273 = vpack.c.b16 %v2217, %v2213
    %v2274 = vpack.c.b16 %v2218, %v2214
    %v2275 = vpack.c.b16 %v2219, %v2215
    %v2276 = vpack.c.b16 %v2224, %v2220
    %v2277 = vpack.c.b16 %v2225, %v2221
    %v2278 = vpack.c.b16 %v2226, %v2222
    %v2279 = vpack.c.b16 %v2227, %v2223
    %v2280 = vpack.c.b16 %v2232, %v2228
    %v2281 = vpack.c.b16 %v2233, %v2229
    %v2282 = vpack.c.b16 %v2234, %v2230
    %v2283 = vpack.c.b16 %v2235, %v2231
    %v2284 = vpack.c.b16 %v2240, %v2236
    %v2285 = vpack.c.b16 %v2241, %v2237
    %v2286 = vpack.c.b16 %v2242, %v2238
    %v2287 = vpack.c.b16 %v2243, %v2239
    %v2288 = vpack.c.b16 %v2248, %v2244
    %v2289 = vpack.c.b16 %v2249, %v2245
    %v2290 = vpack.c.b16 %v2250, %v2246
    %v2291 = vpack.c.b16 %v2251, %v2247
    %v2292 = vpack.c.b16 %v2256, %v2252
    %v2293 = vpack.c.b16 %v2257, %v2253
    %v2294 = vpack.c.b16 %v2258, %v2254
    %v2295 = vpack.c.b16 %v2259, %v2255
    %v2296 = vpack.c.b16 %v2264, %v2260
    %v2297 = vpack.c.b16 %v2265, %v2261
    %v2298 = vpack.c.b16 %v2266, %v2262
    %v2299 = vpack.c.b16 %v2267, %v2263
    %2332 = vmatprep.subr.bf16.mxu0 %v2269
    %2333 = vmatpush1.bf16.msra.mxu0 %v2268
    %2334 = vmatprep.subr.bf16.mxu0 %v2273
    %2335 = vmatpush1.bf16.msra.mxu0 %v2272
    %2336 = vmatprep.subr.bf16.mxu0 %v2277
    %2337 = vmatpush1.bf16.msra.mxu0 %v2276
    %2338 = vmatprep.subr.bf16.mxu0 %v2281
    %2339 = vmatpush1.bf16.msra.mxu0 %v2280
    %2340 = vmatprep.subr.bf16.mxu0 %v2285
    %2341 = vmatpush1.bf16.msra.mxu0 %v2284
    %2342 = vmatprep.subr.bf16.mxu0 %v2289
    %2343 = vmatpush1.bf16.msra.mxu0 %v2288
    %2344 = vmatprep.subr.bf16.mxu0 %v2293
    %2345 = vmatpush1.bf16.msra.mxu0 %v2292
    %2346 = vmatprep.subr.bf16.mxu0 %v2297
    %2347 = vmatpush1.bf16.msra.mxu0 %v2296
    %2348 = vmatprep.subr.bf16.mxu0 0
    %2349 = vmatpush1.bf16.msra.mxu0 0
    %2350 = vmatprep.subr.bf16.mxu0 0
    %2351 = vmatpush1.bf16.msra.mxu0 0
    %2352 = vmatprep.subr.bf16.mxu0 0
    %2353 = vmatpush1.bf16.msra.mxu0 0
    %2354 = vmatprep.subr.bf16.mxu0 0
    %2355 = vmatpush1.bf16.msra.mxu0 0
    %2356 = vmatprep.subr.bf16.mxu0 0
    %2357 = vmatpush1.bf16.msra.mxu0 0
    %2358 = vmatprep.subr.bf16.mxu0 0
    %2359 = vmatpush1.bf16.msra.mxu0 0
    %2360 = vmatprep.subr.bf16.mxu0 0
    %2361 = vmatpush1.bf16.msra.mxu0 0
    %2362 = vmatprep.subr.bf16.mxu0 0
    %2363 = vmatpush1.bf16.msra.mxu0 0
    %2364 = vmatprep.mubr.bf16.mxu0 0
    %2365 = vmatmul.mubr.bf16.gmra.mrb[0].mxu0 %v2117
    %v2366 = vpop.f32.mrb[0].mxu0
    %v2367 = vadd.f32 %v2155, %v2366
    %v2368 = vpop.f32.mrb[0].mxu0
    %v2369 = vadd.f32 %v2159, %v2368
    %v2370 = vpop.f32.mrb[0].mxu0
    %v2371 = vadd.f32 %v2155, %v2370
    %v2372 = vpop.f32.mrb[0].mxu0
    %v2373 = vadd.f32 %v2159, %v2372
    %2374 = vdwg.mxu0
    %2375 = vmatprep.subr.bf16.mxu0 %v2271
    %2376 = vmatpush1.bf16.msra.mxu0 %v2270
    %2377 = vmatprep.subr.bf16.mxu0 %v2275
    %2378 = vmatpush1.bf16.msra.mxu0 %v2274
    %2379 = vmatprep.subr.bf16.mxu0 %v2279
    %2380 = vmatpush1.bf16.msra.mxu0 %v2278
    %2381 = vmatprep.subr.bf16.mxu0 %v2283
    %2382 = vmatpush1.bf16.msra.mxu0 %v2282
    %2383 = vmatprep.subr.bf16.mxu0 %v2287
    %2384 = vmatpush1.bf16.msra.mxu0 %v2286
    %2385 = vmatprep.subr.bf16.mxu0 %v2291
    %2386 = vmatpush1.bf16.msra.mxu0 %v2290
    %2387 = vmatprep.subr.bf16.mxu0 %v2295
    %2388 = vmatpush1.bf16.msra.mxu0 %v2294
    %2389 = vmatprep.subr.bf16.mxu0 %v2299
    %2390 = vmatpush1.bf16.msra.mxu0 %v2298
    %2391 = vmatprep.subr.bf16.mxu0 0
    %2392 = vmatpush1.bf16.msra.mxu0 0
    %2393 = vmatprep.subr.bf16.mxu0 0
    %2394 = vmatpush1.bf16.msra.mxu0 0
    %2395 = vmatprep.subr.bf16.mxu0 0
    %2396 = vmatpush1.bf16.msra.mxu0 0
    %2397 = vmatprep.subr.bf16.mxu0 0
    %2398 = vmatpush1.bf16.msra.mxu0 0
    %2399 = vmatprep.subr.bf16.mxu0 0
    %2400 = vmatpush1.bf16.msra.mxu0 0
    %2401 = vmatprep.subr.bf16.mxu0 0
    %2402 = vmatpush1.bf16.msra.mxu0 0
    %2403 = vmatprep.subr.bf16.mxu0 0
    %2404 = vmatpush1.bf16.msra.mxu0 0
    %2405 = vmatprep.subr.bf16.mxu0 0
    %2406 = vmatpush1.bf16.msra.mxu0 0
    %2407 = vmatprep.mubr.bf16.mxu0 0
    %2408 = vmatmul.mubr.bf16.gmra.mrb[0].mxu0 %v2117
    %v2409 = vpop.f32.mrb[0].mxu0
    %v2410 = vadd.f32 %v2163, %v2409
    %v2411 = vpop.f32.mrb[0].mxu0
    %v2412 = vadd.f32 %v2167, %v2411
    %v2413 = vpop.f32.mrb[0].mxu0
    %v2414 = vadd.f32 %v2163, %v2413
    %v2415 = vpop.f32.mrb[0].mxu0
    %v2416 = vadd.f32 %v2167, %v2415
    %2417 = vdwg.mxu0
    %v2418 = vmax.f32 %v2367, 0.0
    %v2419 = vmax.f32 %v2369, 0.0
    %v2420 = vmax.f32 %v2410, 0.0
    %v2421 = vmax.f32 %v2412, 0.0
    %v2422 = vmax.f32 %v2371, 0.0
    %v2423 = vmax.f32 %v2373, 0.0
    %v2424 = vmax.f32 %v2414, 0.0
    %v2425 = vmax.f32 %v2416, 0.0
    %v2426 = vpack.c.bf16 %v2422, %v2418
    %v2427 = vpack.c.bf16 %v2423, %v2419
    %v2428 = vpack.c.bf16 %v2424, %v2420
    %v2429 = vpack.c.bf16 %v2425, %v2421
    %v2430 = vld [vmem:[%s8] sm:$0xff]
    %v2431 = vld [vmem:[%s8 + $0x8] sm:$0xff]
    %v2432 = vld [vmem:[%s8 + $0x10] sm:$0xff]
    %v2433 = vld [vmem:[%s8 + $0x18] sm:$0xf]
    %v2434 = vld [vmem:[%s8 + $0x1c] sm:$0xff]
    %v2435 = vld [vmem:[%s8 + $0x24] sm:$0xff]
    %v2436 = vld [vmem:[%s8 + $0x2c] sm:$0xff]
    %v2437 = vld [vmem:[%s8 + $0x34] sm:$0xf]
    %v2438 = vld [vmem:[%s8 + $0x38] sm:$0xff]
    %v2439 = vld [vmem:[%s8 + $0x40] sm:$0xff]
    %v2440 = vld [vmem:[%s8 + $0x48] sm:$0xff]
    %v2441 = vld [vmem:[%s8 + $0x50] sm:$0xf]
    %v2442 = vld [vmem:[%s8 + $0x54] sm:$0xff]
    %v2443 = vld [vmem:[%s8 + $0x5c] sm:$0xff]
    %v2444 = vld [vmem:[%s8 + $0x64] sm:$0xff]
    %v2445 = vld [vmem:[%s8 + $0x6c] sm:$0xf]
    %v2446 = vld [vmem:[%s8 + $0x70] sm:$0xff]
    %v2447 = vld [vmem:[%s8 + $0x78] sm:$0xff]
    %v2448 = vld [vmem:[%s8 + $0x80] sm:$0xff]
    %v2449 = vld [vmem:[%s8 + $0x88] sm:$0xf]
    %v2450 = vld [vmem:[%s8 + $0x8c] sm:$0xff]
    %v2451 = vld [vmem:[%s8 + $0x94] sm:$0xff]
    %v2452 = vld [vmem:[%s8 + $0x9c] sm:$0xff]
    %v2453 = vld [vmem:[%s8 + $0xa4] sm:$0xf]
    %v2454 = vld [vmem:[%s8 + $0xa8] sm:$0xff]
    %v2455 = vld [vmem:[%s8 + $0xb0] sm:$0xff]
    %v2456 = vld [vmem:[%s8 + $0xb8] sm:$0xff]
    %v2457 = vld [vmem:[%s8 + $0xc0] sm:$0xf]
    %v2458 = vld [vmem:[%s8 + $0xc4] sm:$0xff]
    %v2459 = vld [vmem:[%s8 + $0xcc] sm:$0xff]
    %v2460 = vld [vmem:[%s8 + $0xd4] sm:$0xff]
    %v2461 = vld [vmem:[%s8 + $0xdc] sm:$0xf]
    %v2462 = vld [vmem:[%s8 + $0xe0] sm:$0xff]
    %v2463 = vld [vmem:[%s8 + $0xe8] sm:$0xff]
    %v2464 = vld [vmem:[%s8 + $0xf0] sm:$0xff]
    %v2465 = vld [vmem:[%s8 + $0xf8] sm:$0xf]
    %v2466 = vld [vmem:[%s8 + $0xfc] sm:$0xff]
    %v2467 = vld [vmem:[%s8 + $0x104] sm:$0xff]
    %v2468 = vld [vmem:[%s8 + $0x10c] sm:$0xff]
    %v2469 = vld [vmem:[%s8 + $0x114] sm:$0xf]
    %v2470 = vld [vmem:[%s8 + $0x118] sm:$0xff]
    %v2471 = vld [vmem:[%s8 + $0x120] sm:$0xff]
    %v2472 = vld [vmem:[%s8 + $0x128] sm:$0xff]
    %v2473 = vld [vmem:[%s8 + $0x130] sm:$0xf]
    %v2474 = vld [vmem:[%s8 + $0x134] sm:$0xff]
    %v2475 = vld [vmem:[%s8 + $0x13c] sm:$0xff]
    %v2476 = vld [vmem:[%s8 + $0x144] sm:$0xff]
    %v2477 = vld [vmem:[%s8 + $0x14c] sm:$0xf]
    %v2478 = vld [vmem:[%s8 + $0x150] sm:$0xff]
    %v2479 = vld [vmem:[%s8 + $0x158] sm:$0xff]
    %v2480 = vld [vmem:[%s8 + $0x160] sm:$0xff]
    %v2481 = vld [vmem:[%s8 + $0x168] sm:$0xf]
    %v2482 = vld [vmem:[%s8 + $0x16c] sm:$0xff]
    %v2483 = vld [vmem:[%s8 + $0x174] sm:$0xff]
    %v2484 = vld [vmem:[%s8 + $0x17c] sm:$0xff]
    %v2485 = vld [vmem:[%s8 + $0x184] sm:$0xf]
    %v2486 = vld [vmem:[%s8 + $0x188] sm:$0xff]
    %v2487 = vld [vmem:[%s8 + $0x190] sm:$0xff]
    %v2488 = vld [vmem:[%s8 + $0x198] sm:$0xff]
    %v2489 = vld [vmem:[%s8 + $0x1a0] sm:$0xf]
    %v2490 = vld [vmem:[%s8 + $0x1a4] sm:$0xff]
    %v2491 = vld [vmem:[%s8 + $0x1ac] sm:$0xff]
    %v2492 = vld [vmem:[%s8 + $0x1b4] sm:$0xff]
    %v2493 = vld [vmem:[%s8 + $0x1bc] sm:$0xf]
    %v2494 = vld [vmem:[%s8 + $0x1c0] sm:$0xff]
    %v2495 = vld [vmem:[%s8 + $0x1c8] sm:$0xff]
    %v2496 = vld [vmem:[%s8 + $0x1d0] sm:$0xff]
    %v2497 = vld [vmem:[%s8 + $0x1d8] sm:$0xf]
    %v2498 = vld [vmem:[%s8 + $0x1dc] sm:$0xff]
    %v2499 = vld [vmem:[%s8 + $0x1e4] sm:$0xff]
    %v2500 = vld [vmem:[%s8 + $0x1ec] sm:$0xff]
    %v2501 = vld [vmem:[%s8 + $0x1f4] sm:$0xf]
    %v2502 = vld [vmem:[%s8 + $0x1f8] sm:$0xff]
    %v2503 = vld [vmem:[%s8 + $0x200] sm:$0xff]
    %v2504 = vld [vmem:[%s8 + $0x208] sm:$0xff]
    %v2505 = vld [vmem:[%s8 + $0x210] sm:$0xf]
    %v2506 = vld [vmem:[%s8 + $0x214] sm:$0xff]
    %v2507 = vld [vmem:[%s8 + $0x21c] sm:$0xff]
    %v2508 = vld [vmem:[%s8 + $0x224] sm:$0xff]
    %v2509 = vld [vmem:[%s8 + $0x22c] sm:$0xf]
    %v2510 = vld [vmem:[%s8 + $0x230] sm:$0xff]
    %v2511 = vld [vmem:[%s8 + $0x238] sm:$0xff]
    %v2512 = vld [vmem:[%s8 + $0x240] sm:$0xff]
    %v2513 = vld [vmem:[%s8 + $0x248] sm:$0xf]
    %v2514 = vld [vmem:[%s8 + $0x24c] sm:$0xff]
    %v2515 = vld [vmem:[%s8 + $0x254] sm:$0xff]
    %v2516 = vld [vmem:[%s8 + $0x25c] sm:$0xff]
    %v2517 = vld [vmem:[%s8 + $0x264] sm:$0xf]
    %v2518 = vld [vmem:[%s8 + $0x268] sm:$0xff]
    %v2519 = vld [vmem:[%s8 + $0x270] sm:$0xff]
    %v2520 = vld [vmem:[%s8 + $0x278] sm:$0xff]
    %v2521 = vld [vmem:[%s8 + $0x280] sm:$0xf]
    %v2522 = vld [vmem:[%s8 + $0x284] sm:$0xff]
    %v2523 = vld [vmem:[%s8 + $0x28c] sm:$0xff]
    %v2524 = vld [vmem:[%s8 + $0x294] sm:$0xff]
    %v2525 = vld [vmem:[%s8 + $0x29c] sm:$0xf]
    %v2526 = vld [vmem:[%s8 + $0x2a0] sm:$0xff]
    %v2527 = vld [vmem:[%s8 + $0x2a8] sm:$0xff]
    %v2528 = vld [vmem:[%s8 + $0x2b0] sm:$0xff]
    %v2529 = vld [vmem:[%s8 + $0x2b8] sm:$0xf]
    %v2530 = vld [vmem:[%s8 + $0x2bc] sm:$0xff]
    %v2531 = vld [vmem:[%s8 + $0x2c4] sm:$0xff]
    %v2532 = vld [vmem:[%s8 + $0x2cc] sm:$0xff]
    %v2533 = vld [vmem:[%s8 + $0x2d4] sm:$0xf]
    %v2534 = vld [vmem:[%s8 + $0x2d8] sm:$0xff]
    %v2535 = vld [vmem:[%s8 + $0x2e0] sm:$0xff]
    %v2536 = vld [vmem:[%s8 + $0x2e8] sm:$0xff]
    %v2537 = vld [vmem:[%s8 + $0x2f0] sm:$0xf]
    %v2538 = vld [vmem:[%s8 + $0x2f4] sm:$0xff]
    %v2539 = vld [vmem:[%s8 + $0x2fc] sm:$0xff]
    %v2540 = vld [vmem:[%s8 + $0x304] sm:$0xff]
    %v2541 = vld [vmem:[%s8 + $0x30c] sm:$0xf]
    %v2542 = vld [vmem:[%s8 + $0x310] sm:$0xff]
    %v2543 = vld [vmem:[%s8 + $0x318] sm:$0xff]
    %v2544 = vld [vmem:[%s8 + $0x320] sm:$0xff]
    %v2545 = vld [vmem:[%s8 + $0x328] sm:$0xf]
    %v2546 = vld [vmem:[%s8 + $0x32c] sm:$0xff]
    %v2547 = vld [vmem:[%s8 + $0x334] sm:$0xff]
    %v2548 = vld [vmem:[%s8 + $0x33c] sm:$0xff]
    %v2549 = vld [vmem:[%s8 + $0x344] sm:$0xf]
    %v2550 = vld [vmem:[%s8 + $0x348] sm:$0xff]
    %v2551 = vld [vmem:[%s8 + $0x350] sm:$0xff]
    %v2552 = vld [vmem:[%s8 + $0x358] sm:$0xff]
    %v2553 = vld [vmem:[%s8 + $0x360] sm:$0xf]
    %v2554 = vld [vmem:[%s8 + $0x364] sm:$0xff]
    %v2555 = vld [vmem:[%s8 + $0x36c] sm:$0xff]
    %v2556 = vld [vmem:[%s8 + $0x374] sm:$0xff]
    %v2557 = vld [vmem:[%s8 + $0x37c] sm:$0xf]
    %v2558 = vld [vmem:[%s8 + $0x380] sm:$0xff]
    %v2559 = vld [vmem:[%s8 + $0x388] sm:$0xff]
    %v2560 = vld [vmem:[%s8 + $0x390] sm:$0xff]
    %v2561 = vld [vmem:[%s8 + $0x398] sm:$0xf]
    %v2562 = vld [vmem:[%s8 + $0x39c] sm:$0xff]
    %v2563 = vld [vmem:[%s8 + $0x3a4] sm:$0xff]
    %v2564 = vld [vmem:[%s8 + $0x3ac] sm:$0xff]
    %v2565 = vld [vmem:[%s8 + $0x3b4] sm:$0xf]
    %v2566 = vld [vmem:[%s8 + $0x3b8] sm:$0xff]
    %v2567 = vld [vmem:[%s8 + $0x3c0] sm:$0xff]
    %v2568 = vld [vmem:[%s8 + $0x3c8] sm:$0xff]
    %v2569 = vld [vmem:[%s8 + $0x3d0] sm:$0xf]
    %v2570 = vld [vmem:[%s8 + $0x3d4] sm:$0xff]
    %v2571 = vld [vmem:[%s8 + $0x3dc] sm:$0xff]
    %v2572 = vld [vmem:[%s8 + $0x3e4] sm:$0xff]
    %v2573 = vld [vmem:[%s8 + $0x3ec] sm:$0xf]
    %v2574 = vld [vmem:[%s8 + $0x3f0] sm:$0xff]
    %v2575 = vld [vmem:[%s8 + $0x3f8] sm:$0xff]
    %v2576 = vld [vmem:[%s8 + $0x400] sm:$0xff]
    %v2577 = vld [vmem:[%s8 + $0x408] sm:$0xf]
    %v2578 = vld [vmem:[%s8 + $0x40c] sm:$0xff]
    %v2579 = vld [vmem:[%s8 + $0x414] sm:$0xff]
    %v2580 = vld [vmem:[%s8 + $0x41c] sm:$0xff]
    %v2581 = vld [vmem:[%s8 + $0x424] sm:$0xf]
    %v2582 = vld [vmem:[%s8 + $0x428] sm:$0xff]
    %v2583 = vld [vmem:[%s8 + $0x430] sm:$0xff]
    %v2584 = vld [vmem:[%s8 + $0x438] sm:$0xff]
    %v2585 = vld [vmem:[%s8 + $0x440] sm:$0xf]
    %v2586 = vld [vmem:[%s8 + $0x444] sm:$0xff]
    %v2587 = vld [vmem:[%s8 + $0x44c] sm:$0xff]
    %v2588 = vld [vmem:[%s8 + $0x454] sm:$0xff]
    %v2589 = vld [vmem:[%s8 + $0x45c] sm:$0xf]
    %v2590 = vld [vmem:[%s8 + $0x460] sm:$0xff]
    %v2591 = vld [vmem:[%s8 + $0x468] sm:$0xff]
    %v2592 = vld [vmem:[%s8 + $0x470] sm:$0xff]
    %v2593 = vld [vmem:[%s8 + $0x478] sm:$0xf]
    %v2594 = vld [vmem:[%s8 + $0x47c] sm:$0xff]
    %v2595 = vld [vmem:[%s8 + $0x484] sm:$0xff]
    %v2596 = vld [vmem:[%s8 + $0x48c] sm:$0xff]
    %v2597 = vld [vmem:[%s8 + $0x494] sm:$0xf]
    %v2598 = vld [vmem:[%s8 + $0x498] sm:$0xff]
    %v2599 = vld [vmem:[%s8 + $0x4a0] sm:$0xff]
    %v2600 = vld [vmem:[%s8 + $0x4a8] sm:$0xff]
    %v2601 = vld [vmem:[%s8 + $0x4b0] sm:$0xf]
    %v2602 = vld [vmem:[%s8 + $0x4b4] sm:$0xff]
    %v2603 = vld [vmem:[%s8 + $0x4bc] sm:$0xff]
    %v2604 = vld [vmem:[%s8 + $0x4c4] sm:$0xff]
    %v2605 = vld [vmem:[%s8 + $0x4cc] sm:$0xf]
    %v2606 = vld [vmem:[%s8 + $0x4d0] sm:$0xff]
    %v2607 = vld [vmem:[%s8 + $0x4d8] sm:$0xff]
    %v2608 = vld [vmem:[%s8 + $0x4e0] sm:$0xff]
    %v2609 = vld [vmem:[%s8 + $0x4e8] sm:$0xf]
    %v2610 = vld [vmem:[%s8 + $0x4ec] sm:$0xff]
    %v2611 = vld [vmem:[%s8 + $0x4f4] sm:$0xff]
    %v2612 = vld [vmem:[%s8 + $0x4fc] sm:$0xff]
    %v2613 = vld [vmem:[%s8 + $0x504] sm:$0xf]
    %v2614 = vld [vmem:[%s8 + $0x508] sm:$0xff]
    %v2615 = vld [vmem:[%s8 + $0x510] sm:$0xff]
    %v2616 = vld [vmem:[%s8 + $0x518] sm:$0xff]
    %v2617 = vld [vmem:[%s8 + $0x520] sm:$0xf]
    %v2618 = vld [vmem:[%s8 + $0x524] sm:$0xff]
    %v2619 = vld [vmem:[%s8 + $0x52c] sm:$0xff]
    %v2620 = vld [vmem:[%s8 + $0x534] sm:$0xff]
    %v2621 = vld [vmem:[%s8 + $0x53c] sm:$0xf]
    %v2622 = vld [vmem:[%s8 + $0x540] sm:$0xff]
    %v2623 = vld [vmem:[%s8 + $0x548] sm:$0xff]
    %v2624 = vld [vmem:[%s8 + $0x550] sm:$0xff]
    %v2625 = vld [vmem:[%s8 + $0x558] sm:$0xf]
    %v2626 = vld [vmem:[%s8 + $0x55c] sm:$0xff]
    %v2627 = vld [vmem:[%s8 + $0x564] sm:$0xff]
    %v2628 = vld [vmem:[%s8 + $0x56c] sm:$0xff]
    %v2629 = vld [vmem:[%s8 + $0x574] sm:$0xf]
    %v2630 = vld [vmem:[%s8 + $0x578] sm:$0xff]
    %v2631 = vld [vmem:[%s8 + $0x580] sm:$0xff]
    %v2632 = vld [vmem:[%s8 + $0x588] sm:$0xff]
    %v2633 = vld [vmem:[%s8 + $0x590] sm:$0xf]
    %v2634 = vld [vmem:[%s8 + $0x594] sm:$0xff]
    %v2635 = vld [vmem:[%s8 + $0x59c] sm:$0xff]
    %v2636 = vld [vmem:[%s8 + $0x5a4] sm:$0xff]
    %v2637 = vld [vmem:[%s8 + $0x5ac] sm:$0xf]
    %v2638 = vld [vmem:[%s8 + $0x5b0] sm:$0xff]
    %v2639 = vld [vmem:[%s8 + $0x5b8] sm:$0xff]
    %v2640 = vld [vmem:[%s8 + $0x5c0] sm:$0xff]
    %v2641 = vld [vmem:[%s8 + $0x5c8] sm:$0xf]
    %v2642 = vld [vmem:[%s8 + $0x5cc] sm:$0xff]
    %v2643 = vld [vmem:[%s8 + $0x5d4] sm:$0xff]
    %v2644 = vld [vmem:[%s8 + $0x5dc] sm:$0xff]
    %v2645 = vld [vmem:[%s8 + $0x5e4] sm:$0xf]
    %v2646 = vld [vmem:[%s8 + $0x5e8] sm:$0xff]
    %v2647 = vld [vmem:[%s8 + $0x5f0] sm:$0xff]
    %v2648 = vld [vmem:[%s8 + $0x5f8] sm:$0xff]
    %v2649 = vld [vmem:[%s8 + $0x600] sm:$0xf]
    %v2650 = vld [vmem:[%s8 + $0x604] sm:$0xff]
    %v2651 = vld [vmem:[%s8 + $0x60c] sm:$0xff]
    %v2652 = vld [vmem:[%s8 + $0x614] sm:$0xff]
    %v2653 = vld [vmem:[%s8 + $0x61c] sm:$0xf]
    %v2654 = vld [vmem:[%s8 + $0x620] sm:$0xff]
    %v2655 = vld [vmem:[%s8 + $0x628] sm:$0xff]
    %v2656 = vld [vmem:[%s8 + $0x630] sm:$0xff]
    %v2657 = vld [vmem:[%s8 + $0x638] sm:$0xf]
    %v2658 = vld [vmem:[%s8 + $0x63c] sm:$0xff]
    %v2659 = vld [vmem:[%s8 + $0x644] sm:$0xff]
    %v2660 = vld [vmem:[%s8 + $0x64c] sm:$0xff]
    %v2661 = vld [vmem:[%s8 + $0x654] sm:$0xf]
    %v2662 = vld [vmem:[%s8 + $0x658] sm:$0xff]
    %v2663 = vld [vmem:[%s8 + $0x660] sm:$0xff]
    %v2664 = vld [vmem:[%s8 + $0x668] sm:$0xff]
    %v2665 = vld [vmem:[%s8 + $0x670] sm:$0xf]
    %v2666 = vld [vmem:[%s8 + $0x674] sm:$0xff]
    %v2667 = vld [vmem:[%s8 + $0x67c] sm:$0xff]
    %v2668 = vld [vmem:[%s8 + $0x684] sm:$0xff]
    %v2669 = vld [vmem:[%s8 + $0x68c] sm:$0xf]
    %v2670 = vld [vmem:[%s8 + $0x690] sm:$0xff]
    %v2671 = vld [vmem:[%s8 + $0x698] sm:$0xff]
    %v2672 = vld [vmem:[%s8 + $0x6a0] sm:$0xff]
    %v2673 = vld [vmem:[%s8 + $0x6a8] sm:$0xf]
    %v2674 = vld [vmem:[%s8 + $0x6ac] sm:$0xff]
    %v2675 = vld [vmem:[%s8 + $0x6b4] sm:$0xff]
    %v2676 = vld [vmem:[%s8 + $0x6bc] sm:$0xff]
    %v2677 = vld [vmem:[%s8 + $0x6c4] sm:$0xf]
    %v2678 = vld [vmem:[%s8 + $0x6c8] sm:$0xff]
    %v2679 = vld [vmem:[%s8 + $0x6d0] sm:$0xff]
    %v2680 = vld [vmem:[%s8 + $0x6d8] sm:$0xff]
    %v2681 = vld [vmem:[%s8 + $0x6e0] sm:$0xf]
    %v2682 = vld [vmem:[%s8 + $0x6e4] sm:$0xff]
    %v2683 = vld [vmem:[%s8 + $0x6ec] sm:$0xff]
    %v2684 = vld [vmem:[%s8 + $0x6f4] sm:$0xff]
    %v2685 = vld [vmem:[%s8 + $0x6fc] sm:$0xf]
    %v2686 = vld [vmem:[%s9] sm:$0x7f]
    %v2688 = vlaneseq
    %v2689 = vshrl.u32 %v2688, 7
    %v2690 = vsub.s32 0, %v2689
    %v2691 = vrot.slane %v2686, %v2690
    %v2692 = vlaneseq
    %v2693 = vshrl.u32 %v2692, 7
    %v2694 = vsub.s32 1, %v2693
    %v2695 = vrot.slane %v2686, %v2694
    %v2696 = vlaneseq
    %v2697 = vshrl.u32 %v2696, 7
    %v2698 = vsub.s32 2, %v2697
    %v2699 = vrot.slane %v2686, %v2698
    %v2700 = vlaneseq
    %v2701 = vshrl.u32 %v2700, 7
    %v2702 = vsub.s32 3, %v2701
    %v2703 = vrot.slane %v2686, %v2702
    %v2704 = vlaneseq
    %v2705 = vshrl.u32 %v2704, 7
    %v2706 = vsub.s32 4, %v2705
    %v2707 = vrot.slane %v2686, %v2706
    %v2708 = vlaneseq
    %v2709 = vshrl.u32 %v2708, 7
    %v2710 = vsub.s32 5, %v2709
    %v2711 = vrot.slane %v2686, %v2710
    %v2712 = vlaneseq
    %v2713 = vshrl.u32 %v2712, 7
    %v2714 = vsub.s32 6, %v2713
    %v2715 = vrot.slane %v2686, %v2714
    %v2979 = vunpack.c.l.b16 %v2430
    %v2980 = vunpack.c.h.b16 %v2430
    %v2981 = vunpack.c.l.b16 %v2431
    %v2982 = vunpack.c.h.b16 %v2431
    %v2983 = vunpack.c.l.b16 %v2432
    %v2984 = vunpack.c.h.b16 %v2432
    %v2985 = vunpack.c.l.b16 %v2433
    %v2986 = vunpack.c.l.b16 %v2434
    %v2987 = vunpack.c.h.b16 %v2434
    %v2988 = vunpack.c.l.b16 %v2435
    %v2989 = vunpack.c.h.b16 %v2435
    %v2990 = vunpack.c.l.b16 %v2436
    %v2991 = vunpack.c.h.b16 %v2436
    %v2992 = vunpack.c.l.b16 %v2437
    %v2993 = vunpack.c.l.b16 %v2438
    %v2994 = vunpack.c.h.b16 %v2438
    %v2995 = vunpack.c.l.b16 %v2439
    %v2996 = vunpack.c.h.b16 %v2439
    %v2997 = vunpack.c.l.b16 %v2440
    %v2998 = vunpack.c.h.b16 %v2440
    %v2999 = vunpack.c.l.b16 %v2441
    %v3000 = vunpack.c.l.b16 %v2442
    %v3001 = vunpack.c.h.b16 %v2442
    %v3002 = vunpack.c.l.b16 %v2443
    %v3003 = vunpack.c.h.b16 %v2443
    %v3004 = vunpack.c.l.b16 %v2444
    %v3005 = vunpack.c.h.b16 %v2444
    %v3006 = vunpack.c.l.b16 %v2445
    %v3007 = vunpack.c.l.b16 %v2446
    %v3008 = vunpack.c.h.b16 %v2446
    %v3009 = vunpack.c.l.b16 %v2447
    %v3010 = vunpack.c.h.b16 %v2447
    %v3011 = vunpack.c.l.b16 %v2448
    %v3012 = vunpack.c.h.b16 %v2448
    %v3013 = vunpack.c.l.b16 %v2449
    %v3014 = vunpack.c.l.b16 %v2450
    %v3015 = vunpack.c.h.b16 %v2450
    %v3016 = vunpack.c.l.b16 %v2451
    %v3017 = vunpack.c.h.b16 %v2451
    %v3018 = vunpack.c.l.b16 %v2452
    %v3019 = vunpack.c.h.b16 %v2452
    %v3020 = vunpack.c.l.b16 %v2453
    %v3021 = vunpack.c.l.b16 %v2454
    %v3022 = vunpack.c.h.b16 %v2454
    %v3023 = vunpack.c.l.b16 %v2455
    %v3024 = vunpack.c.h.b16 %v2455
    %v3025 = vunpack.c.l.b16 %v2456
    %v3026 = vunpack.c.h.b16 %v2456
    %v3027 = vunpack.c.l.b16 %v2457
    %v3028 = vunpack.c.l.b16 %v2458
    %v3029 = vunpack.c.h.b16 %v2458
    %v3030 = vunpack.c.l.b16 %v2459
    %v3031 = vunpack.c.h.b16 %v2459
    %v3032 = vunpack.c.l.b16 %v2460
    %v3033 = vunpack.c.h.b16 %v2460
    %v3034 = vunpack.c.l.b16 %v2461
    %v3035 = vunpack.c.l.b16 %v2462
    %v3036 = vunpack.c.h.b16 %v2462
    %v3037 = vunpack.c.l.b16 %v2463
    %v3038 = vunpack.c.h.b16 %v2463
    %v3039 = vunpack.c.l.b16 %v2464
    %v3040 = vunpack.c.h.b16 %v2464
    %v3041 = vunpack.c.l.b16 %v2465
    %v3042 = vunpack.c.l.b16 %v2466
    %v3043 = vunpack.c.h.b16 %v2466
    %v3044 = vunpack.c.l.b16 %v2467
    %v3045 = vunpack.c.h.b16 %v2467
    %v3046 = vunpack.c.l.b16 %v2468
    %v3047 = vunpack.c.h.b16 %v2468
    %v3048 = vunpack.c.l.b16 %v2469
    %v3049 = vunpack.c.l.b16 %v2470
    %v3050 = vunpack.c.h.b16 %v2470
    %v3051 = vunpack.c.l.b16 %v2471
    %v3052 = vunpack.c.h.b16 %v2471
    %v3053 = vunpack.c.l.b16 %v2472
    %v3054 = vunpack.c.h.b16 %v2472
    %v3055 = vunpack.c.l.b16 %v2473
    %v3056 = vunpack.c.l.b16 %v2474
    %v3057 = vunpack.c.h.b16 %v2474
    %v3058 = vunpack.c.l.b16 %v2475
    %v3059 = vunpack.c.h.b16 %v2475
    %v3060 = vunpack.c.l.b16 %v2476
    %v3061 = vunpack.c.h.b16 %v2476
    %v3062 = vunpack.c.l.b16 %v2477
    %v3063 = vunpack.c.l.b16 %v2478
    %v3064 = vunpack.c.h.b16 %v2478
    %v3065 = vunpack.c.l.b16 %v2479
    %v3066 = vunpack.c.h.b16 %v2479
    %v3067 = vunpack.c.l.b16 %v2480
    %v3068 = vunpack.c.h.b16 %v2480
    %v3069 = vunpack.c.l.b16 %v2481
    %v3070 = vunpack.c.l.b16 %v2482
    %v3071 = vunpack.c.h.b16 %v2482
    %v3072 = vunpack.c.l.b16 %v2483
    %v3073 = vunpack.c.h.b16 %v2483
    %v3074 = vunpack.c.l.b16 %v2484
    %v3075 = vunpack.c.h.b16 %v2484
    %v3076 = vunpack.c.l.b16 %v2485
    %v3077 = vunpack.c.l.b16 %v2486
    %v3078 = vunpack.c.h.b16 %v2486
    %v3079 = vunpack.c.l.b16 %v2487
    %v3080 = vunpack.c.h.b16 %v2487
    %v3081 = vunpack.c.l.b16 %v2488
    %v3082 = vunpack.c.h.b16 %v2488
    %v3083 = vunpack.c.l.b16 %v2489
    %v3084 = vunpack.c.l.b16 %v2490
    %v3085 = vunpack.c.h.b16 %v2490
    %v3086 = vunpack.c.l.b16 %v2491
    %v3087 = vunpack.c.h.b16 %v2491
    %v3088 = vunpack.c.l.b16 %v2492
    %v3089 = vunpack.c.h.b16 %v2492
    %v3090 = vunpack.c.l.b16 %v2493
    %v3091 = vunpack.c.l.b16 %v2494
    %v3092 = vunpack.c.h.b16 %v2494
    %v3093 = vunpack.c.l.b16 %v2495
    %v3094 = vunpack.c.h.b16 %v2495
    %v3095 = vunpack.c.l.b16 %v2496
    %v3096 = vunpack.c.h.b16 %v2496
    %v3097 = vunpack.c.l.b16 %v2497
    %v3098 = vunpack.c.l.b16 %v2498
    %v3099 = vunpack.c.h.b16 %v2498
    %v3100 = vunpack.c.l.b16 %v2499
    %v3101 = vunpack.c.h.b16 %v2499
    %v3102 = vunpack.c.l.b16 %v2500
    %v3103 = vunpack.c.h.b16 %v2500
    %v3104 = vunpack.c.l.b16 %v2501
    %v3105 = vunpack.c.l.b16 %v2502
    %v3106 = vunpack.c.h.b16 %v2502
    %v3107 = vunpack.c.l.b16 %v2503
    %v3108 = vunpack.c.h.b16 %v2503
    %v3109 = vunpack.c.l.b16 %v2504
    %v3110 = vunpack.c.h.b16 %v2504
    %v3111 = vunpack.c.l.b16 %v2505
    %v3112 = vunpack.c.l.b16 %v2506
    %v3113 = vunpack.c.h.b16 %v2506
    %v3114 = vunpack.c.l.b16 %v2507
    %v3115 = vunpack.c.h.b16 %v2507
    %v3116 = vunpack.c.l.b16 %v2508
    %v3117 = vunpack.c.h.b16 %v2508
    %v3118 = vunpack.c.l.b16 %v2509
    %v3119 = vunpack.c.l.b16 %v2510
    %v3120 = vunpack.c.h.b16 %v2510
    %v3121 = vunpack.c.l.b16 %v2511
    %v3122 = vunpack.c.h.b16 %v2511
    %v3123 = vunpack.c.l.b16 %v2512
    %v3124 = vunpack.c.h.b16 %v2512
    %v3125 = vunpack.c.l.b16 %v2513
    %v3126 = vunpack.c.l.b16 %v2514
    %v3127 = vunpack.c.h.b16 %v2514
    %v3128 = vunpack.c.l.b16 %v2515
    %v3129 = vunpack.c.h.b16 %v2515
    %v3130 = vunpack.c.l.b16 %v2516
    %v3131 = vunpack.c.h.b16 %v2516
    %v3132 = vunpack.c.l.b16 %v2517
    %v3133 = vunpack.c.l.b16 %v2518
    %v3134 = vunpack.c.h.b16 %v2518
    %v3135 = vunpack.c.l.b16 %v2519
    %v3136 = vunpack.c.h.b16 %v2519
    %v3137 = vunpack.c.l.b16 %v2520
    %v3138 = vunpack.c.h.b16 %v2520
    %v3139 = vunpack.c.l.b16 %v2521
    %v3140 = vunpack.c.l.b16 %v2522
    %v3141 = vunpack.c.h.b16 %v2522
    %v3142 = vunpack.c.l.b16 %v2523
    %v3143 = vunpack.c.h.b16 %v2523
    %v3144 = vunpack.c.l.b16 %v2524
    %v3145 = vunpack.c.h.b16 %v2524
    %v3146 = vunpack.c.l.b16 %v2525
    %v3147 = vunpack.c.l.b16 %v2526
    %v3148 = vunpack.c.h.b16 %v2526
    %v3149 = vunpack.c.l.b16 %v2527
    %v3150 = vunpack.c.h.b16 %v2527
    %v3151 = vunpack.c.l.b16 %v2528
    %v3152 = vunpack.c.h.b16 %v2528
    %v3153 = vunpack.c.l.b16 %v2529
    %v3154 = vunpack.c.l.b16 %v2530
    %v3155 = vunpack.c.h.b16 %v2530
    %v3156 = vunpack.c.l.b16 %v2531
    %v3157 = vunpack.c.h.b16 %v2531
    %v3158 = vunpack.c.l.b16 %v2532
    %v3159 = vunpack.c.h.b16 %v2532
    %v3160 = vunpack.c.l.b16 %v2533
    %v3161 = vunpack.c.l.b16 %v2534
    %v3162 = vunpack.c.h.b16 %v2534
    %v3163 = vunpack.c.l.b16 %v2535
    %v3164 = vunpack.c.h.b16 %v2535
    %v3165 = vunpack.c.l.b16 %v2536
    %v3166 = vunpack.c.h.b16 %v2536
    %v3167 = vunpack.c.l.b16 %v2537
    %v3168 = vunpack.c.l.b16 %v2538
    %v3169 = vunpack.c.h.b16 %v2538
    %v3170 = vunpack.c.l.b16 %v2539
    %v3171 = vunpack.c.h.b16 %v2539
    %v3172 = vunpack.c.l.b16 %v2540
    %v3173 = vunpack.c.h.b16 %v2540
    %v3174 = vunpack.c.l.b16 %v2541
    %v3175 = vunpack.c.l.b16 %v2542
    %v3176 = vunpack.c.h.b16 %v2542
    %v3177 = vunpack.c.l.b16 %v2543
    %v3178 = vunpack.c.h.b16 %v2543
    %v3179 = vunpack.c.l.b16 %v2544
    %v3180 = vunpack.c.h.b16 %v2544
    %v3181 = vunpack.c.l.b16 %v2545
    %v3182 = vunpack.c.l.b16 %v2546
    %v3183 = vunpack.c.h.b16 %v2546
    %v3184 = vunpack.c.l.b16 %v2547
    %v3185 = vunpack.c.h.b16 %v2547
    %v3186 = vunpack.c.l.b16 %v2548
    %v3187 = vunpack.c.h.b16 %v2548
    %v3188 = vunpack.c.l.b16 %v2549
    %v3189 = vunpack.c.l.b16 %v2550
    %v3190 = vunpack.c.h.b16 %v2550
    %v3191 = vunpack.c.l.b16 %v2551
    %v3192 = vunpack.c.h.b16 %v2551
    %v3193 = vunpack.c.l.b16 %v2552
    %v3194 = vunpack.c.h.b16 %v2552
    %v3195 = vunpack.c.l.b16 %v2553
    %v3196 = vunpack.c.l.b16 %v2554
    %v3197 = vunpack.c.h.b16 %v2554
    %v3198 = vunpack.c.l.b16 %v2555
    %v3199 = vunpack.c.h.b16 %v2555
    %v3200 = vunpack.c.l.b16 %v2556
    %v3201 = vunpack.c.h.b16 %v2556
    %v3202 = vunpack.c.l.b16 %v2557
    %v3203 = vunpack.c.l.b16 %v2558
    %v3204 = vunpack.c.h.b16 %v2558
    %v3205 = vunpack.c.l.b16 %v2559
    %v3206 = vunpack.c.h.b16 %v2559
    %v3207 = vunpack.c.l.b16 %v2560
    %v3208 = vunpack.c.h.b16 %v2560
    %v3209 = vunpack.c.l.b16 %v2561
    %v3210 = vunpack.c.l.b16 %v2562
    %v3211 = vunpack.c.h.b16 %v2562
    %v3212 = vunpack.c.l.b16 %v2563
    %v3213 = vunpack.c.h.b16 %v2563
    %v3214 = vunpack.c.l.b16 %v2564
    %v3215 = vunpack.c.h.b16 %v2564
    %v3216 = vunpack.c.l.b16 %v2565
    %v3217 = vunpack.c.l.b16 %v2566
    %v3218 = vunpack.c.h.b16 %v2566
    %v3219 = vunpack.c.l.b16 %v2567
    %v3220 = vunpack.c.h.b16 %v2567
    %v3221 = vunpack.c.l.b16 %v2568
    %v3222 = vunpack.c.h.b16 %v2568
    %v3223 = vunpack.c.l.b16 %v2569
    %v3224 = vunpack.c.l.b16 %v2570
    %v3225 = vunpack.c.h.b16 %v2570
    %v3226 = vunpack.c.l.b16 %v2571
    %v3227 = vunpack.c.h.b16 %v2571
    %v3228 = vunpack.c.l.b16 %v2572
    %v3229 = vunpack.c.h.b16 %v2572
    %v3230 = vunpack.c.l.b16 %v2573
    %v3231 = vunpack.c.l.b16 %v2574
    %v3232 = vunpack.c.h.b16 %v2574
    %v3233 = vunpack.c.l.b16 %v2575
    %v3234 = vunpack.c.h.b16 %v2575
    %v3235 = vunpack.c.l.b16 %v2576
    %v3236 = vunpack.c.h.b16 %v2576
    %v3237 = vunpack.c.l.b16 %v2577
    %v3238 = vunpack.c.l.b16 %v2578
    %v3239 = vunpack.c.h.b16 %v2578
    %v3240 = vunpack.c.l.b16 %v2579
    %v3241 = vunpack.c.h.b16 %v2579
    %v3242 = vunpack.c.l.b16 %v2580
    %v3243 = vunpack.c.h.b16 %v2580
    %v3244 = vunpack.c.l.b16 %v2581
    %v3245 = vunpack.c.l.b16 %v2582
    %v3246 = vunpack.c.h.b16 %v2582
    %v3247 = vunpack.c.l.b16 %v2583
    %v3248 = vunpack.c.h.b16 %v2583
    %v3249 = vunpack.c.l.b16 %v2584
    %v3250 = vunpack.c.h.b16 %v2584
    %v3251 = vunpack.c.l.b16 %v2585
    %v3252 = vunpack.c.l.b16 %v2586
    %v3253 = vunpack.c.h.b16 %v2586
    %v3254 = vunpack.c.l.b16 %v2587
    %v3255 = vunpack.c.h.b16 %v2587
    %v3256 = vunpack.c.l.b16 %v2588
    %v3257 = vunpack.c.h.b16 %v2588
    %v3258 = vunpack.c.l.b16 %v2589
    %v3259 = vunpack.c.l.b16 %v2590
    %v3260 = vunpack.c.h.b16 %v2590
    %v3261 = vunpack.c.l.b16 %v2591
    %v3262 = vunpack.c.h.b16 %v2591
    %v3263 = vunpack.c.l.b16 %v2592
    %v3264 = vunpack.c.h.b16 %v2592
    %v3265 = vunpack.c.l.b16 %v2593
    %v3266 = vunpack.c.l.b16 %v2594
    %v3267 = vunpack.c.h.b16 %v2594
    %v3268 = vunpack.c.l.b16 %v2595
    %v3269 = vunpack.c.h.b16 %v2595
    %v3270 = vunpack.c.l.b16 %v2596
    %v3271 = vunpack.c.h.b16 %v2596
    %v3272 = vunpack.c.l.b16 %v2597
    %v3273 = vunpack.c.l.b16 %v2598
    %v3274 = vunpack.c.h.b16 %v2598
    %v3275 = vunpack.c.l.b16 %v2599
    %v3276 = vunpack.c.h.b16 %v2599
    %v3277 = vunpack.c.l.b16 %v2600
    %v3278 = vunpack.c.h.b16 %v2600
    %v3279 = vunpack.c.l.b16 %v2601
    %v3280 = vunpack.c.l.b16 %v2602
    %v3281 = vunpack.c.h.b16 %v2602
    %v3282 = vunpack.c.l.b16 %v2603
    %v3283 = vunpack.c.h.b16 %v2603
    %v3284 = vunpack.c.l.b16 %v2604
    %v3285 = vunpack.c.h.b16 %v2604
    %v3286 = vunpack.c.l.b16 %v2605
    %v3287 = vunpack.c.l.b16 %v2606
    %v3288 = vunpack.c.h.b16 %v2606
    %v3289 = vunpack.c.l.b16 %v2607
    %v3290 = vunpack.c.h.b16 %v2607
    %v3291 = vunpack.c.l.b16 %v2608
    %v3292 = vunpack.c.h.b16 %v2608
    %v3293 = vunpack.c.l.b16 %v2609
    %v3294 = vunpack.c.l.b16 %v2610
    %v3295 = vunpack.c.h.b16 %v2610
    %v3296 = vunpack.c.l.b16 %v2611
    %v3297 = vunpack.c.h.b16 %v2611
    %v3298 = vunpack.c.l.b16 %v2612
    %v3299 = vunpack.c.h.b16 %v2612
    %v3300 = vunpack.c.l.b16 %v2613
    %v3301 = vunpack.c.l.b16 %v2614
    %v3302 = vunpack.c.h.b16 %v2614
    %v3303 = vunpack.c.l.b16 %v2615
    %v3304 = vunpack.c.h.b16 %v2615
    %v3305 = vunpack.c.l.b16 %v2616
    %v3306 = vunpack.c.h.b16 %v2616
    %v3307 = vunpack.c.l.b16 %v2617
    %v3308 = vunpack.c.l.b16 %v2618
    %v3309 = vunpack.c.h.b16 %v2618
    %v3310 = vunpack.c.l.b16 %v2619
    %v3311 = vunpack.c.h.b16 %v2619
    %v3312 = vunpack.c.l.b16 %v2620
    %v3313 = vunpack.c.h.b16 %v2620
    %v3314 = vunpack.c.l.b16 %v2621
    %v3315 = vunpack.c.l.b16 %v2622
    %v3316 = vunpack.c.h.b16 %v2622
    %v3317 = vunpack.c.l.b16 %v2623
    %v3318 = vunpack.c.h.b16 %v2623
    %v3319 = vunpack.c.l.b16 %v2624
    %v3320 = vunpack.c.h.b16 %v2624
    %v3321 = vunpack.c.l.b16 %v2625
    %v3322 = vunpack.c.l.b16 %v2626
    %v3323 = vunpack.c.h.b16 %v2626
    %v3324 = vunpack.c.l.b16 %v2627
    %v3325 = vunpack.c.h.b16 %v2627
    %v3326 = vunpack.c.l.b16 %v2628
    %v3327 = vunpack.c.h.b16 %v2628
    %v3328 = vunpack.c.l.b16 %v2629
    %v3329 = vunpack.c.l.b16 %v2630
    %v3330 = vunpack.c.h.b16 %v2630
    %v3331 = vunpack.c.l.b16 %v2631
    %v3332 = vunpack.c.h.b16 %v2631
    %v3333 = vunpack.c.l.b16 %v2632
    %v3334 = vunpack.c.h.b16 %v2632
    %v3335 = vunpack.c.l.b16 %v2633
    %v3336 = vunpack.c.l.b16 %v2634
    %v3337 = vunpack.c.h.b16 %v2634
    %v3338 = vunpack.c.l.b16 %v2635
    %v3339 = vunpack.c.h.b16 %v2635
    %v3340 = vunpack.c.l.b16 %v2636
    %v3341 = vunpack.c.h.b16 %v2636
    %v3342 = vunpack.c.l.b16 %v2637
    %v3343 = vunpack.c.l.b16 %v2638
    %v3344 = vunpack.c.h.b16 %v2638
    %v3345 = vunpack.c.l.b16 %v2639
    %v3346 = vunpack.c.h.b16 %v2639
    %v3347 = vunpack.c.l.b16 %v2640
    %v3348 = vunpack.c.h.b16 %v2640
    %v3349 = vunpack.c.l.b16 %v2641
    %v3350 = vunpack.c.l.b16 %v2642
    %v3351 = vunpack.c.h.b16 %v2642
    %v3352 = vunpack.c.l.b16 %v2643
    %v3353 = vunpack.c.h.b16 %v2643
    %v3354 = vunpack.c.l.b16 %v2644
    %v3355 = vunpack.c.h.b16 %v2644
    %v3356 = vunpack.c.l.b16 %v2645
    %v3357 = vunpack.c.l.b16 %v2646
    %v3358 = vunpack.c.h.b16 %v2646
    %v3359 = vunpack.c.l.b16 %v2647
    %v3360 = vunpack.c.h.b16 %v2647
    %v3361 = vunpack.c.l.b16 %v2648
    %v3362 = vunpack.c.h.b16 %v2648
    %v3363 = vunpack.c.l.b16 %v2649
    %v3364 = vunpack.c.l.b16 %v2650
    %v3365 = vunpack.c.h.b16 %v2650
    %v3366 = vunpack.c.l.b16 %v2651
    %v3367 = vunpack.c.h.b16 %v2651
    %v3368 = vunpack.c.l.b16 %v2652
    %v3369 = vunpack.c.h.b16 %v2652
    %v3370 = vunpack.c.l.b16 %v2653
    %v3371 = vunpack.c.l.b16 %v2654
    %v3372 = vunpack.c.h.b16 %v2654
    %v3373 = vunpack.c.l.b16 %v2655
    %v3374 = vunpack.c.h.b16 %v2655
    %v3375 = vunpack.c.l.b16 %v2656
    %v3376 = vunpack.c.h.b16 %v2656
    %v3377 = vunpack.c.l.b16 %v2657
    %v3378 = vunpack.c.l.b16 %v2658
    %v3379 = vunpack.c.h.b16 %v2658
    %v3380 = vunpack.c.l.b16 %v2659
    %v3381 = vunpack.c.h.b16 %v2659
    %v3382 = vunpack.c.l.b16 %v2660
    %v3383 = vunpack.c.h.b16 %v2660
    %v3384 = vunpack.c.l.b16 %v2661
    %v3385 = vunpack.c.l.b16 %v2662
    %v3386 = vunpack.c.h.b16 %v2662
    %v3387 = vunpack.c.l.b16 %v2663
    %v3388 = vunpack.c.h.b16 %v2663
    %v3389 = vunpack.c.l.b16 %v2664
    %v3390 = vunpack.c.h.b16 %v2664
    %v3391 = vunpack.c.l.b16 %v2665
    %v3392 = vunpack.c.l.b16 %v2666
    %v3393 = vunpack.c.h.b16 %v2666
    %v3394 = vunpack.c.l.b16 %v2667
    %v3395 = vunpack.c.h.b16 %v2667
    %v3396 = vunpack.c.l.b16 %v2668
    %v3397 = vunpack.c.h.b16 %v2668
    %v3398 = vunpack.c.l.b16 %v2669
    %v3399 = vunpack.c.l.b16 %v2670
    %v3400 = vunpack.c.h.b16 %v2670
    %v3401 = vunpack.c.l.b16 %v2671
    %v3402 = vunpack.c.h.b16 %v2671
    %v3403 = vunpack.c.l.b16 %v2672
    %v3404 = vunpack.c.h.b16 %v2672
    %v3405 = vunpack.c.l.b16 %v2673
    %v3406 = vunpack.c.l.b16 %v2674
    %v3407 = vunpack.c.h.b16 %v2674
    %v3408 = vunpack.c.l.b16 %v2675
    %v3409 = vunpack.c.h.b16 %v2675
    %v3410 = vunpack.c.l.b16 %v2676
    %v3411 = vunpack.c.h.b16 %v2676
    %v3412 = vunpack.c.l.b16 %v2677
    %v3413 = vunpack.c.l.b16 %v2678
    %v3414 = vunpack.c.h.b16 %v2678
    %v3415 = vunpack.c.l.b16 %v2679
    %v3416 = vunpack.c.h.b16 %v2679
    %v3417 = vunpack.c.l.b16 %v2680
    %v3418 = vunpack.c.h.b16 %v2680
    %v3419 = vunpack.c.l.b16 %v2681
    %v3420 = vunpack.c.l.b16 %v2682
    %v3421 = vunpack.c.h.b16 %v2682
    %v3422 = vunpack.c.l.b16 %v2683
    %v3423 = vunpack.c.h.b16 %v2683
    %v3424 = vunpack.c.l.b16 %v2684
    %v3425 = vunpack.c.h.b16 %v2684
    %v3426 = vunpack.c.l.b16 %v2685
    %v3427 = vpack.c.b16 %v2986, %v2979
    %v3428 = vpack.c.b16 %v2987, %v2980
    %v3429 = vpack.c.b16 %v2988, %v2981
    %v3430 = vpack.c.b16 %v2989, %v2982
    %v3431 = vpack.c.b16 %v2990, %v2983
    %v3432 = vpack.c.b16 %v2991, %v2984
    %v3433 = vpack.c.b16 %v2992, %v2985
    %v3434 = vpack.c.b16 %v3000, %v2993
    %v3435 = vpack.c.b16 %v3001, %v2994
    %v3436 = vpack.c.b16 %v3002, %v2995
    %v3437 = vpack.c.b16 %v3003, %v2996
    %v3438 = vpack.c.b16 %v3004, %v2997
    %v3439 = vpack.c.b16 %v3005, %v2998
    %v3440 = vpack.c.b16 %v3006, %v2999
    %v3441 = vpack.c.b16 %v3014, %v3007
    %v3442 = vpack.c.b16 %v3015, %v3008
    %v3443 = vpack.c.b16 %v3016, %v3009
    %v3444 = vpack.c.b16 %v3017, %v3010
    %v3445 = vpack.c.b16 %v3018, %v3011
    %v3446 = vpack.c.b16 %v3019, %v3012
    %v3447 = vpack.c.b16 %v3020, %v3013
    %v3448 = vpack.c.b16 %v3028, %v3021
    %v3449 = vpack.c.b16 %v3029, %v3022
    %v3450 = vpack.c.b16 %v3030, %v3023
    %v3451 = vpack.c.b16 %v3031, %v3024
    %v3452 = vpack.c.b16 %v3032, %v3025
    %v3453 = vpack.c.b16 %v3033, %v3026
    %v3454 = vpack.c.b16 %v3034, %v3027
    %v3455 = vpack.c.b16 %v3042, %v3035
    %v3456 = vpack.c.b16 %v3043, %v3036
    %v3457 = vpack.c.b16 %v3044, %v3037
    %v3458 = vpack.c.b16 %v3045, %v3038
    %v3459 = vpack.c.b16 %v3046, %v3039
    %v3460 = vpack.c.b16 %v3047, %v3040
    %v3461 = vpack.c.b16 %v3048, %v3041
    %v3462 = vpack.c.b16 %v3056, %v3049
    %v3463 = vpack.c.b16 %v3057, %v3050
    %v3464 = vpack.c.b16 %v3058, %v3051
    %v3465 = vpack.c.b16 %v3059, %v3052
    %v3466 = vpack.c.b16 %v3060, %v3053
    %v3467 = vpack.c.b16 %v3061, %v3054
    %v3468 = vpack.c.b16 %v3062, %v3055
    %v3469 = vpack.c.b16 %v3070, %v3063
    %v3470 = vpack.c.b16 %v3071, %v3064
    %v3471 = vpack.c.b16 %v3072, %v3065
    %v3472 = vpack.c.b16 %v3073, %v3066
    %v3473 = vpack.c.b16 %v3074, %v3067
    %v3474 = vpack.c.b16 %v3075, %v3068
    %v3475 = vpack.c.b16 %v3076, %v3069
    %v3476 = vpack.c.b16 %v3084, %v3077
    %v3477 = vpack.c.b16 %v3085, %v3078
    %v3478 = vpack.c.b16 %v3086, %v3079
    %v3479 = vpack.c.b16 %v3087, %v3080
    %v3480 = vpack.c.b16 %v3088, %v3081
    %v3481 = vpack.c.b16 %v3089, %v3082
    %v3482 = vpack.c.b16 %v3090, %v3083
    %v3483 = vpack.c.b16 %v3098, %v3091
    %v3484 = vpack.c.b16 %v3099, %v3092
    %v3485 = vpack.c.b16 %v3100, %v3093
    %v3486 = vpack.c.b16 %v3101, %v3094
    %v3487 = vpack.c.b16 %v3102, %v3095
    %v3488 = vpack.c.b16 %v3103, %v3096
    %v3489 = vpack.c.b16 %v3104, %v3097
    %v3490 = vpack.c.b16 %v3112, %v3105
    %v3491 = vpack.c.b16 %v3113, %v3106
    %v3492 = vpack.c.b16 %v3114, %v3107
    %v3493 = vpack.c.b16 %v3115, %v3108
    %v3494 = vpack.c.b16 %v3116, %v3109
    %v3495 = vpack.c.b16 %v3117, %v3110
    %v3496 = vpack.c.b16 %v3118, %v3111
    %v3497 = vpack.c.b16 %v3126, %v3119
    %v3498 = vpack.c.b16 %v3127, %v3120
    %v3499 = vpack.c.b16 %v3128, %v3121
    %v3500 = vpack.c.b16 %v3129, %v3122
    %v3501 = vpack.c.b16 %v3130, %v3123
    %v3502 = vpack.c.b16 %v3131, %v3124
    %v3503 = vpack.c.b16 %v3132, %v3125
    %v3504 = vpack.c.b16 %v3140, %v3133
    %v3505 = vpack.c.b16 %v3141, %v3134
    %v3506 = vpack.c.b16 %v3142, %v3135
    %v3507 = vpack.c.b16 %v3143, %v3136
    %v3508 = vpack.c.b16 %v3144, %v3137
    %v3509 = vpack.c.b16 %v3145, %v3138
    %v3510 = vpack.c.b16 %v3146, %v3139
    %v3511 = vpack.c.b16 %v3154, %v3147
    %v3512 = vpack.c.b16 %v3155, %v3148
    %v3513 = vpack.c.b16 %v3156, %v3149
    %v3514 = vpack.c.b16 %v3157, %v3150
    %v3515 = vpack.c.b16 %v3158, %v3151
    %v3516 = vpack.c.b16 %v3159, %v3152
    %v3517 = vpack.c.b16 %v3160, %v3153
    %v3518 = vpack.c.b16 %v3168, %v3161
    %v3519 = vpack.c.b16 %v3169, %v3162
    %v3520 = vpack.c.b16 %v3170, %v3163
    %v3521 = vpack.c.b16 %v3171, %v3164
    %v3522 = vpack.c.b16 %v3172, %v3165
    %v3523 = vpack.c.b16 %v3173, %v3166
    %v3524 = vpack.c.b16 %v3174, %v3167
    %v3525 = vpack.c.b16 %v3182, %v3175
    %v3526 = vpack.c.b16 %v3183, %v3176
    %v3527 = vpack.c.b16 %v3184, %v3177
    %v3528 = vpack.c.b16 %v3185, %v3178
    %v3529 = vpack.c.b16 %v3186, %v3179
    %v3530 = vpack.c.b16 %v3187, %v3180
    %v3531 = vpack.c.b16 %v3188, %v3181
    %v3532 = vpack.c.b16 %v3196, %v3189
    %v3533 = vpack.c.b16 %v3197, %v3190
    %v3534 = vpack.c.b16 %v3198, %v3191
    %v3535 = vpack.c.b16 %v3199, %v3192
    %v3536 = vpack.c.b16 %v3200, %v3193
    %v3537 = vpack.c.b16 %v3201, %v3194
    %v3538 = vpack.c.b16 %v3202, %v3195
    %v3539 = vpack.c.b16 %v3210, %v3203
    %v3540 = vpack.c.b16 %v3211, %v3204
    %v3541 = vpack.c.b16 %v3212, %v3205
    %v3542 = vpack.c.b16 %v3213, %v3206
    %v3543 = vpack.c.b16 %v3214, %v3207
    %v3544 = vpack.c.b16 %v3215, %v3208
    %v3545 = vpack.c.b16 %v3216, %v3209
    %v3546 = vpack.c.b16 %v3224, %v3217
    %v3547 = vpack.c.b16 %v3225, %v3218
    %v3548 = vpack.c.b16 %v3226, %v3219
    %v3549 = vpack.c.b16 %v3227, %v3220
    %v3550 = vpack.c.b16 %v3228, %v3221
    %v3551 = vpack.c.b16 %v3229, %v3222
    %v3552 = vpack.c.b16 %v3230, %v3223
    %v3553 = vpack.c.b16 %v3238, %v3231
    %v3554 = vpack.c.b16 %v3239, %v3232
    %v3555 = vpack.c.b16 %v3240, %v3233
    %v3556 = vpack.c.b16 %v3241, %v3234
    %v3557 = vpack.c.b16 %v3242, %v3235
    %v3558 = vpack.c.b16 %v3243, %v3236
    %v3559 = vpack.c.b16 %v3244, %v3237
    %v3560 = vpack.c.b16 %v3252, %v3245
    %v3561 = vpack.c.b16 %v3253, %v3246
    %v3562 = vpack.c.b16 %v3254, %v3247
    %v3563 = vpack.c.b16 %v3255, %v3248
    %v3564 = vpack.c.b16 %v3256, %v3249
    %v3565 = vpack.c.b16 %v3257, %v3250
    %v3566 = vpack.c.b16 %v3258, %v3251
    %v3567 = vpack.c.b16 %v3266, %v3259
    %v3568 = vpack.c.b16 %v3267, %v3260
    %v3569 = vpack.c.b16 %v3268, %v3261
    %v3570 = vpack.c.b16 %v3269, %v3262
    %v3571 = vpack.c.b16 %v3270, %v3263
    %v3572 = vpack.c.b16 %v3271, %v3264
    %v3573 = vpack.c.b16 %v3272, %v3265
    %v3574 = vpack.c.b16 %v3280, %v3273
    %v3575 = vpack.c.b16 %v3281, %v3274
    %v3576 = vpack.c.b16 %v3282, %v3275
    %v3577 = vpack.c.b16 %v3283, %v3276
    %v3578 = vpack.c.b16 %v3284, %v3277
    %v3579 = vpack.c.b16 %v3285, %v3278
    %v3580 = vpack.c.b16 %v3286, %v3279
    %v3581 = vpack.c.b16 %v3294, %v3287
    %v3582 = vpack.c.b16 %v3295, %v3288
    %v3583 = vpack.c.b16 %v3296, %v3289
    %v3584 = vpack.c.b16 %v3297, %v3290
    %v3585 = vpack.c.b16 %v3298, %v3291
    %v3586 = vpack.c.b16 %v3299, %v3292
    %v3587 = vpack.c.b16 %v3300, %v3293
    %v3588 = vpack.c.b16 %v3308, %v3301
    %v3589 = vpack.c.b16 %v3309, %v3302
    %v3590 = vpack.c.b16 %v3310, %v3303
    %v3591 = vpack.c.b16 %v3311, %v3304
    %v3592 = vpack.c.b16 %v3312, %v3305
    %v3593 = vpack.c.b16 %v3313, %v3306
    %v3594 = vpack.c.b16 %v3314, %v3307
    %v3595 = vpack.c.b16 %v3322, %v3315
    %v3596 = vpack.c.b16 %v3323, %v3316
    %v3597 = vpack.c.b16 %v3324, %v3317
    %v3598 = vpack.c.b16 %v3325, %v3318
    %v3599 = vpack.c.b16 %v3326, %v3319
    %v3600 = vpack.c.b16 %v3327, %v3320
    %v3601 = vpack.c.b16 %v3328, %v3321
    %v3602 = vpack.c.b16 %v3336, %v3329
    %v3603 = vpack.c.b16 %v3337, %v3330
    %v3604 = vpack.c.b16 %v3338, %v3331
    %v3605 = vpack.c.b16 %v3339, %v3332
    %v3606 = vpack.c.b16 %v3340, %v3333
    %v3607 = vpack.c.b16 %v3341, %v3334
    %v3608 = vpack.c.b16 %v3342, %v3335
    %v3609 = vpack.c.b16 %v3350, %v3343
    %v3610 = vpack.c.b16 %v3351, %v3344
    %v3611 = vpack.c.b16 %v3352, %v3345
    %v3612 = vpack.c.b16 %v3353, %v3346
    %v3613 = vpack.c.b16 %v3354, %v3347
    %v3614 = vpack.c.b16 %v3355, %v3348
    %v3615 = vpack.c.b16 %v3356, %v3349
    %v3616 = vpack.c.b16 %v3364, %v3357
    %v3617 = vpack.c.b16 %v3365, %v3358
    %v3618 = vpack.c.b16 %v3366, %v3359
    %v3619 = vpack.c.b16 %v3367, %v3360
    %v3620 = vpack.c.b16 %v3368, %v3361
    %v3621 = vpack.c.b16 %v3369, %v3362
    %v3622 = vpack.c.b16 %v3370, %v3363
    %v3623 = vpack.c.b16 %v3378, %v3371
    %v3624 = vpack.c.b16 %v3379, %v3372
    %v3625 = vpack.c.b16 %v3380, %v3373
    %v3626 = vpack.c.b16 %v3381, %v3374
    %v3627 = vpack.c.b16 %v3382, %v3375
    %v3628 = vpack.c.b16 %v3383, %v3376
    %v3629 = vpack.c.b16 %v3384, %v3377
    %v3630 = vpack.c.b16 %v3392, %v3385
    %v3631 = vpack.c.b16 %v3393, %v3386
    %v3632 = vpack.c.b16 %v3394, %v3387
    %v3633 = vpack.c.b16 %v3395, %v3388
    %v3634 = vpack.c.b16 %v3396, %v3389
    %v3635 = vpack.c.b16 %v3397, %v3390
    %v3636 = vpack.c.b16 %v3398, %v3391
    %v3637 = vpack.c.b16 %v3406, %v3399
    %v3638 = vpack.c.b16 %v3407, %v3400
    %v3639 = vpack.c.b16 %v3408, %v3401
    %v3640 = vpack.c.b16 %v3409, %v3402
    %v3641 = vpack.c.b16 %v3410, %v3403
    %v3642 = vpack.c.b16 %v3411, %v3404
    %v3643 = vpack.c.b16 %v3412, %v3405
    %v3644 = vpack.c.b16 %v3420, %v3413
    %v3645 = vpack.c.b16 %v3421, %v3414
    %v3646 = vpack.c.b16 %v3422, %v3415
    %v3647 = vpack.c.b16 %v3423, %v3416
    %v3648 = vpack.c.b16 %v3424, %v3417
    %v3649 = vpack.c.b16 %v3425, %v3418
    %v3650 = vpack.c.b16 %v3426, %v3419
    %3875 = vmatprep.subr.bf16.mxu0 %v3428
    %3876 = vmatpush1.bf16.msra.mxu0 %v3427
    %3877 = vmatprep.subr.bf16.mxu0 %v3435
    %3878 = vmatpush1.bf16.msra.mxu0 %v3434
    %3879 = vmatprep.subr.bf16.mxu0 %v3442
    %3880 = vmatpush1.bf16.msra.mxu0 %v3441
    %3881 = vmatprep.subr.bf16.mxu0 %v3449
    %3882 = vmatpush1.bf16.msra.mxu0 %v3448
    %3883 = vmatprep.subr.bf16.mxu0 %v3456
    %3884 = vmatpush1.bf16.msra.mxu0 %v3455
    %3885 = vmatprep.subr.bf16.mxu0 %v3463
    %3886 = vmatpush1.bf16.msra.mxu0 %v3462
    %3887 = vmatprep.subr.bf16.mxu0 %v3470
    %3888 = vmatpush1.bf16.msra.mxu0 %v3469
    %3889 = vmatprep.subr.bf16.mxu0 %v3477
    %3890 = vmatpush1.bf16.msra.mxu0 %v3476
    %3891 = vmatprep.subr.bf16.mxu0 %v3484
    %3892 = vmatpush1.bf16.msra.mxu0 %v3483
    %3893 = vmatprep.subr.bf16.mxu0 %v3491
    %3894 = vmatpush1.bf16.msra.mxu0 %v3490
    %3895 = vmatprep.subr.bf16.mxu0 %v3498
    %3896 = vmatpush1.bf16.msra.mxu0 %v3497
    %3897 = vmatprep.subr.bf16.mxu0 %v3505
    %3898 = vmatpush1.bf16.msra.mxu0 %v3504
    %3899 = vmatprep.subr.bf16.mxu0 %v3512
    %3900 = vmatpush1.bf16.msra.mxu0 %v3511
    %3901 = vmatprep.subr.bf16.mxu0 %v3519
    %3902 = vmatpush1.bf16.msra.mxu0 %v3518
    %3903 = vmatprep.subr.bf16.mxu0 %v3526
    %3904 = vmatpush1.bf16.msra.mxu0 %v3525
    %3905 = vmatprep.subr.bf16.mxu0 %v3533
    %3906 = vmatpush1.bf16.msra.mxu0 %v3532
    %3907 = vmatprep.mubr.bf16.mxu0 %v2427
    %3908 = vmatmul.mubr.bf16.gmra.mrb[0].mxu0 %v2426
    %v3909 = vpop.f32.mrb[0].mxu0
    %v3910 = vadd.f32 %v2691, %v3909
    %v3911 = vpop.f32.mrb[0].mxu0
    %v3912 = vadd.f32 %v2695, %v3911
    %v3913 = vpop.f32.mrb[0].mxu0
    %v3914 = vadd.f32 %v2691, %v3913
    %v3915 = vpop.f32.mrb[0].mxu0
    %v3916 = vadd.f32 %v2695, %v3915
    %3917 = vdwg.mxu0
    %3918 = vmatprep.subr.bf16.mxu0 %v3540
    %3919 = vmatpush1.bf16.msra.mxu0 %v3539
    %3920 = vmatprep.subr.bf16.mxu0 %v3547
    %3921 = vmatpush1.bf16.msra.mxu0 %v3546
    %3922 = vmatprep.subr.bf16.mxu0 %v3554
    %3923 = vmatpush1.bf16.msra.mxu0 %v3553
    %3924 = vmatprep.subr.bf16.mxu0 %v3561
    %3925 = vmatpush1.bf16.msra.mxu0 %v3560
    %3926 = vmatprep.subr.bf16.mxu0 %v3568
    %3927 = vmatpush1.bf16.msra.mxu0 %v3567
    %3928 = vmatprep.subr.bf16.mxu0 %v3575
    %3929 = vmatpush1.bf16.msra.mxu0 %v3574
    %3930 = vmatprep.subr.bf16.mxu0 %v3582
    %3931 = vmatpush1.bf16.msra.mxu0 %v3581
    %3932 = vmatprep.subr.bf16.mxu0 %v3589
    %3933 = vmatpush1.bf16.msra.mxu0 %v3588
    %3934 = vmatprep.subr.bf16.mxu0 %v3596
    %3935 = vmatpush1.bf16.msra.mxu0 %v3595
    %3936 = vmatprep.subr.bf16.mxu0 %v3603
    %3937 = vmatpush1.bf16.msra.mxu0 %v3602
    %3938 = vmatprep.subr.bf16.mxu0 %v3610
    %3939 = vmatpush1.bf16.msra.mxu0 %v3609
    %3940 = vmatprep.subr.bf16.mxu0 %v3617
    %3941 = vmatpush1.bf16.msra.mxu0 %v3616
    %3942 = vmatprep.subr.bf16.mxu0 %v3624
    %3943 = vmatpush1.bf16.msra.mxu0 %v3623
    %3944 = vmatprep.subr.bf16.mxu0 %v3631
    %3945 = vmatpush1.bf16.msra.mxu0 %v3630
    %3946 = vmatprep.subr.bf16.mxu0 %v3638
    %3947 = vmatpush1.bf16.msra.mxu0 %v3637
    %3948 = vmatprep.subr.bf16.mxu0 %v3645
    %3949 = vmatpush1.bf16.msra.mxu0 %v3644
    %3950 = vmatprep.mubr.bf16.mxu0 %v2429
    %3951 = vmatmul.mubr.bf16.gmra.mrb[0].mxu0 %v2428
    %v3952 = vpop.f32.mrb[0].mxu0
    %v3953 = vadd.f32 %v3910, %v3952
    %v3954 = vpop.f32.mrb[0].mxu0
    %v3955 = vadd.f32 %v3912, %v3954
    %v3956 = vpop.f32.mrb[0].mxu0
    %v3957 = vadd.f32 %v3914, %v3956
    %v3958 = vpop.f32.mrb[0].mxu0
    %v3959 = vadd.f32 %v3916, %v3958
    %3960 = vdwg.mxu0
    %3961 = vmatprep.subr.bf16.mxu0 %v3430
    %3962 = vmatpush1.bf16.msra.mxu0 %v3429
    %3963 = vmatprep.subr.bf16.mxu0 %v3437
    %3964 = vmatpush1.bf16.msra.mxu0 %v3436
    %3965 = vmatprep.subr.bf16.mxu0 %v3444
    %3966 = vmatpush1.bf16.msra.mxu0 %v3443
    %3967 = vmatprep.subr.bf16.mxu0 %v3451
    %3968 = vmatpush1.bf16.msra.mxu0 %v3450
    %3969 = vmatprep.subr.bf16.mxu0 %v3458
    %3970 = vmatpush1.bf16.msra.mxu0 %v3457
    %3971 = vmatprep.subr.bf16.mxu0 %v3465
    %3972 = vmatpush1.bf16.msra.mxu0 %v3464
    %3973 = vmatprep.subr.bf16.mxu0 %v3472
    %3974 = vmatpush1.bf16.msra.mxu0 %v3471
    %3975 = vmatprep.subr.bf16.mxu0 %v3479
    %3976 = vmatpush1.bf16.msra.mxu0 %v3478
    %3977 = vmatprep.subr.bf16.mxu0 %v3486
    %3978 = vmatpush1.bf16.msra.mxu0 %v3485
    %3979 = vmatprep.subr.bf16.mxu0 %v3493
    %3980 = vmatpush1.bf16.msra.mxu0 %v3492
    %3981 = vmatprep.subr.bf16.mxu0 %v3500
    %3982 = vmatpush1.bf16.msra.mxu0 %v3499
    %3983 = vmatprep.subr.bf16.mxu0 %v3507
    %3984 = vmatpush1.bf16.msra.mxu0 %v3506
    %3985 = vmatprep.subr.bf16.mxu0 %v3514
    %3986 = vmatpush1.bf16.msra.mxu0 %v3513
    %3987 = vmatprep.subr.bf16.mxu0 %v3521
    %3988 = vmatpush1.bf16.msra.mxu0 %v3520
    %3989 = vmatprep.subr.bf16.mxu0 %v3528
    %3990 = vmatpush1.bf16.msra.mxu0 %v3527
    %3991 = vmatprep.subr.bf16.mxu0 %v3535
    %3992 = vmatpush1.bf16.msra.mxu0 %v3534
    %3993 = vmatprep.mubr.bf16.mxu0 %v2427
    %3994 = vmatmul.mubr.bf16.gmra.mrb[0].mxu0 %v2426
    %v3995 = vpop.f32.mrb[0].mxu0
    %v3996 = vadd.f32 %v2699, %v3995
    %v3997 = vpop.f32.mrb[0].mxu0
    %v3998 = vadd.f32 %v2703, %v3997
    %v3999 = vpop.f32.mrb[0].mxu0
    %v4000 = vadd.f32 %v2699, %v3999
    %v4001 = vpop.f32.mrb[0].mxu0
    %v4002 = vadd.f32 %v2703, %v4001
    %4003 = vdwg.mxu0
    %4004 = vmatprep.subr.bf16.mxu0 %v3542
    %4005 = vmatpush1.bf16.msra.mxu0 %v3541
    %4006 = vmatprep.subr.bf16.mxu0 %v3549
    %4007 = vmatpush1.bf16.msra.mxu0 %v3548
    %4008 = vmatprep.subr.bf16.mxu0 %v3556
    %4009 = vmatpush1.bf16.msra.mxu0 %v3555
    %4010 = vmatprep.subr.bf16.mxu0 %v3563
    %4011 = vmatpush1.bf16.msra.mxu0 %v3562
    %4012 = vmatprep.subr.bf16.mxu0 %v3570
    %4013 = vmatpush1.bf16.msra.mxu0 %v3569
    %4014 = vmatprep.subr.bf16.mxu0 %v3577
    %4015 = vmatpush1.bf16.msra.mxu0 %v3576
    %4016 = vmatprep.subr.bf16.mxu0 %v3584
    %4017 = vmatpush1.bf16.msra.mxu0 %v3583
    %4018 = vmatprep.subr.bf16.mxu0 %v3591
    %4019 = vmatpush1.bf16.msra.mxu0 %v3590
    %4020 = vmatprep.subr.bf16.mxu0 %v3598
    %4021 = vmatpush1.bf16.msra.mxu0 %v3597
    %4022 = vmatprep.subr.bf16.mxu0 %v3605
    %4023 = vmatpush1.bf16.msra.mxu0 %v3604
    %4024 = vmatprep.subr.bf16.mxu0 %v3612
    %4025 = vmatpush1.bf16.msra.mxu0 %v3611
    %4026 = vmatprep.subr.bf16.mxu0 %v3619
    %4027 = vmatpush1.bf16.msra.mxu0 %v3618
    %4028 = vmatprep.subr.bf16.mxu0 %v3626
    %4029 = vmatpush1.bf16.msra.mxu0 %v3625
    %4030 = vmatprep.subr.bf16.mxu0 %v3633
    %4031 = vmatpush1.bf16.msra.mxu0 %v3632
    %4032 = vmatprep.subr.bf16.mxu0 %v3640
    %4033 = vmatpush1.bf16.msra.mxu0 %v3639
    %4034 = vmatprep.subr.bf16.mxu0 %v3647
    %4035 = vmatpush1.bf16.msra.mxu0 %v3646
    %4036 = vmatprep.mubr.bf16.mxu0 %v2429
    %4037 = vmatmul.mubr.bf16.gmra.mrb[0].mxu0 %v2428
    %v4038 = vpop.f32.mrb[0].mxu0
    %v4039 = vadd.f32 %v3996, %v4038
    %v4040 = vpop.f32.mrb[0].mxu0
    %v4041 = vadd.f32 %v3998, %v4040
    %v4042 = vpop.f32.mrb[0].mxu0
    %v4043 = vadd.f32 %v4000, %v4042
    %v4044 = vpop.f32.mrb[0].mxu0
    %v4045 = vadd.f32 %v4002, %v4044
    %4046 = vdwg.mxu0
    %4047 = vmatprep.subr.bf16.mxu0 %v3432
    %4048 = vmatpush1.bf16.msra.mxu0 %v3431
    %4049 = vmatprep.subr.bf16.mxu0 %v3439
    %4050 = vmatpush1.bf16.msra.mxu0 %v3438
    %4051 = vmatprep.subr.bf16.mxu0 %v3446
    %4052 = vmatpush1.bf16.msra.mxu0 %v3445
    %4053 = vmatprep.subr.bf16.mxu0 %v3453
    %4054 = vmatpush1.bf16.msra.mxu0 %v3452
    %4055 = vmatprep.subr.bf16.mxu0 %v3460
    %4056 = vmatpush1.bf16.msra.mxu0 %v3459
    %4057 = vmatprep.subr.bf16.mxu0 %v3467
    %4058 = vmatpush1.bf16.msra.mxu0 %v3466
    %4059 = vmatprep.subr.bf16.mxu0 %v3474
    %4060 = vmatpush1.bf16.msra.mxu0 %v3473
    %4061 = vmatprep.subr.bf16.mxu0 %v3481
    %4062 = vmatpush1.bf16.msra.mxu0 %v3480
    %4063 = vmatprep.subr.bf16.mxu0 %v3488
    %4064 = vmatpush1.bf16.msra.mxu0 %v3487
    %4065 = vmatprep.subr.bf16.mxu0 %v3495
    %4066 = vmatpush1.bf16.msra.mxu0 %v3494
    %4067 = vmatprep.subr.bf16.mxu0 %v3502
    %4068 = vmatpush1.bf16.msra.mxu0 %v3501
    %4069 = vmatprep.subr.bf16.mxu0 %v3509
    %4070 = vmatpush1.bf16.msra.mxu0 %v3508
    %4071 = vmatprep.subr.bf16.mxu0 %v3516
    %4072 = vmatpush1.bf16.msra.mxu0 %v3515
    %4073 = vmatprep.subr.bf16.mxu0 %v3523
    %4074 = vmatpush1.bf16.msra.mxu0 %v3522
    %4075 = vmatprep.subr.bf16.mxu0 %v3530
    %4076 = vmatpush1.bf16.msra.mxu0 %v3529
    %4077 = vmatprep.subr.bf16.mxu0 %v3537
    %4078 = vmatpush1.bf16.msra.mxu0 %v3536
    %4079 = vmatprep.mubr.bf16.mxu0 %v2427
    %4080 = vmatmul.mubr.bf16.gmra.mrb[0].mxu0 %v2426
    %v4081 = vpop.f32.mrb[0].mxu0
    %v4082 = vadd.f32 %v2707, %v4081
    %v4083 = vpop.f32.mrb[0].mxu0
    %v4084 = vadd.f32 %v2711, %v4083
    %v4085 = vpop.f32.mrb[0].mxu0
    %v4086 = vadd.f32 %v2707, %v4085
    %v4087 = vpop.f32.mrb[0].mxu0
    %v4088 = vadd.f32 %v2711, %v4087
    %4089 = vdwg.mxu0
    %4090 = vmatprep.subr.bf16.mxu0 %v3544
    %4091 = vmatpush1.bf16.msra.mxu0 %v3543
    %4092 = vmatprep.subr.bf16.mxu0 %v3551
    %4093 = vmatpush1.bf16.msra.mxu0 %v3550
    %4094 = vmatprep.subr.bf16.mxu0 %v3558
    %4095 = vmatpush1.bf16.msra.mxu0 %v3557
    %4096 = vmatprep.subr.bf16.mxu0 %v3565
    %4097 = vmatpush1.bf16.msra.mxu0 %v3564
    %4098 = vmatprep.subr.bf16.mxu0 %v3572
    %4099 = vmatpush1.bf16.msra.mxu0 %v3571
    %4100 = vmatprep.subr.bf16.mxu0 %v3579
    %4101 = vmatpush1.bf16.msra.mxu0 %v3578
    %4102 = vmatprep.subr.bf16.mxu0 %v3586
    %4103 = vmatpush1.bf16.msra.mxu0 %v3585
    %4104 = vmatprep.subr.bf16.mxu0 %v3593
    %4105 = vmatpush1.bf16.msra.mxu0 %v3592
    %4106 = vmatprep.subr.bf16.mxu0 %v3600
    %4107 = vmatpush1.bf16.msra.mxu0 %v3599
    %4108 = vmatprep.subr.bf16.mxu0 %v3607
    %4109 = vmatpush1.bf16.msra.mxu0 %v3606
    %4110 = vmatprep.subr.bf16.mxu0 %v3614
    %4111 = vmatpush1.bf16.msra.mxu0 %v3613
    %4112 = vmatprep.subr.bf16.mxu0 %v3621
    %4113 = vmatpush1.bf16.msra.mxu0 %v3620
    %4114 = vmatprep.subr.bf16.mxu0 %v3628
    %4115 = vmatpush1.bf16.msra.mxu0 %v3627
    %4116 = vmatprep.subr.bf16.mxu0 %v3635
    %4117 = vmatpush1.bf16.msra.mxu0 %v3634
    %4118 = vmatprep.subr.bf16.mxu0 %v3642
    %4119 = vmatpush1.bf16.msra.mxu0 %v3641
    %4120 = vmatprep.subr.bf16.mxu0 %v3649
    %4121 = vmatpush1.bf16.msra.mxu0 %v3648
    %4122 = vmatprep.mubr.bf16.mxu0 %v2429
    %4123 = vmatmul.mubr.bf16.gmra.mrb[0].mxu0 %v2428
    %v4124 = vpop.f32.mrb[0].mxu0
    %v4125 = vadd.f32 %v4082, %v4124
    %v4126 = vpop.f32.mrb[0].mxu0
    %v4127 = vadd.f32 %v4084, %v4126
    %v4128 = vpop.f32.mrb[0].mxu0
    %v4129 = vadd.f32 %v4086, %v4128
    %v4130 = vpop.f32.mrb[0].mxu0
    %v4131 = vadd.f32 %v4088, %v4130
    %4132 = vdwg.mxu0
    %4133 = vmatprep.subr.bf16.mxu0 0
    %4134 = vmatpush1.bf16.msra.mxu0 %v3433
    %4135 = vmatprep.subr.bf16.mxu0 0
    %4136 = vmatpush1.bf16.msra.mxu0 %v3440
    %4137 = vmatprep.subr.bf16.mxu0 0
    %4138 = vmatpush1.bf16.msra.mxu0 %v3447
    %4139 = vmatprep.subr.bf16.mxu0 0
    %4140 = vmatpush1.bf16.msra.mxu0 %v3454
    %4141 = vmatprep.subr.bf16.mxu0 0
    %4142 = vmatpush1.bf16.msra.mxu0 %v3461
    %4143 = vmatprep.subr.bf16.mxu0 0
    %4144 = vmatpush1.bf16.msra.mxu0 %v3468
    %4145 = vmatprep.subr.bf16.mxu0 0
    %4146 = vmatpush1.bf16.msra.mxu0 %v3475
    %4147 = vmatprep.subr.bf16.mxu0 0
    %4148 = vmatpush1.bf16.msra.mxu0 %v3482
    %4149 = vmatprep.subr.bf16.mxu0 0
    %4150 = vmatpush1.bf16.msra.mxu0 %v3489
    %4151 = vmatprep.subr.bf16.mxu0 0
    %4152 = vmatpush1.bf16.msra.mxu0 %v3496
    %4153 = vmatprep.subr.bf16.mxu0 0
    %4154 = vmatpush1.bf16.msra.mxu0 %v3503
    %4155 = vmatprep.subr.bf16.mxu0 0
    %4156 = vmatpush1.bf16.msra.mxu0 %v3510
    %4157 = vmatprep.subr.bf16.mxu0 0
    %4158 = vmatpush1.bf16.msra.mxu0 %v3517
    %4159 = vmatprep.subr.bf16.mxu0 0
    %4160 = vmatpush1.bf16.msra.mxu0 %v3524
    %4161 = vmatprep.subr.bf16.mxu0 0
    %4162 = vmatpush1.bf16.msra.mxu0 %v3531
    %4163 = vmatprep.subr.bf16.mxu0 0
    %4164 = vmatpush1.bf16.msra.mxu0 %v3538
    %4165 = vmatprep.mubr.bf16.mxu0 %v2427
    %4166 = vmatmul.mubr.bf16.gmra.mrb[0].mxu0 %v2426
    %v4167 = vpop.f32.mrb[0].mxu0
    %v4168 = vadd.f32 %v2715, %v4167
    %v4169 = vpop.f32.mrb[0].mxu0
    %v4170 = vpop.f32.mrb[0].mxu0
    %v4171 = vadd.f32 %v2715, %v4170
    %v4172 = vpop.f32.mrb[0].mxu0
    %4173 = vdwg.mxu0
    %4174 = vmatprep.subr.bf16.mxu0 0
    %4175 = vmatpush1.bf16.msra.mxu0 %v3545
    %4176 = vmatprep.subr.bf16.mxu0 0
    %4177 = vmatpush1.bf16.msra.mxu0 %v3552
    %4178 = vmatprep.subr.bf16.mxu0 0
    %4179 = vmatpush1.bf16.msra.mxu0 %v3559
    %4180 = vmatprep.subr.bf16.mxu0 0
    %4181 = vmatpush1.bf16.msra.mxu0 %v3566
    %4182 = vmatprep.subr.bf16.mxu0 0
    %4183 = vmatpush1.bf16.msra.mxu0 %v3573
    %4184 = vmatprep.subr.bf16.mxu0 0
    %4185 = vmatpush1.bf16.msra.mxu0 %v3580
    %4186 = vmatprep.subr.bf16.mxu0 0
    %4187 = vmatpush1.bf16.msra.mxu0 %v3587
    %4188 = vmatprep.subr.bf16.mxu0 0
    %4189 = vmatpush1.bf16.msra.mxu0 %v3594
    %4190 = vmatprep.subr.bf16.mxu0 0
    %4191 = vmatpush1.bf16.msra.mxu0 %v3601
    %4192 = vmatprep.subr.bf16.mxu0 0
    %4193 = vmatpush1.bf16.msra.mxu0 %v3608
    %4194 = vmatprep.subr.bf16.mxu0 0
    %4195 = vmatpush1.bf16.msra.mxu0 %v3615
    %4196 = vmatprep.subr.bf16.mxu0 0
    %4197 = vmatpush1.bf16.msra.mxu0 %v3622
    %4198 = vmatprep.subr.bf16.mxu0 0
    %4199 = vmatpush1.bf16.msra.mxu0 %v3629
    %4200 = vmatprep.subr.bf16.mxu0 0
    %4201 = vmatpush1.bf16.msra.mxu0 %v3636
    %4202 = vmatprep.subr.bf16.mxu0 0
    %4203 = vmatpush1.bf16.msra.mxu0 %v3643
    %4204 = vmatprep.subr.bf16.mxu0 0
    %4205 = vmatpush1.bf16.msra.mxu0 %v3650
    %4206 = vmatprep.mubr.bf16.mxu0 %v2429
    %4207 = vmatmul.mubr.bf16.gmra.mrb[0].mxu0 %v2428
    %v4208 = vpop.f32.mrb[0].mxu0
    %v4209 = vadd.f32 %v4168, %v4208
    %v4210 = vpop.f32.mrb[0].mxu0
    %v4211 = vpop.f32.mrb[0].mxu0
    %v4212 = vadd.f32 %v4171, %v4211
    %v4213 = vpop.f32.mrb[0].mxu0
    %4214 = vdwg.mxu0
    %v4215 = vxor.u32 %v3953, 2147483648
    %v4216 = vxor.u32 %v3955, 2147483648
    %v4217 = vxor.u32 %v4039, 2147483648
    %v4218 = vxor.u32 %v4041, 2147483648
    %v4219 = vxor.u32 %v4125, 2147483648
    %v4220 = vxor.u32 %v4127, 2147483648
    %v4221 = vxor.u32 %v4209, 2147483648
    %v4222 = vxor.u32 %v3957, 2147483648
    %v4223 = vxor.u32 %v3959, 2147483648
    %v4224 = vxor.u32 %v4043, 2147483648
    %v4225 = vxor.u32 %v4045, 2147483648
    %v4226 = vxor.u32 %v4129, 2147483648
    %v4227 = vxor.u32 %v4131, 2147483648
    %v4228 = vxor.u32 %v4212, 2147483648
    %v4229 = vmul.f32 %v4215, 1.442695
    %v4230 = vpow.pop %v4229
    %v4231 = vmul.f32 %v4216, 1.442695
    %v4232 = vpow.pop %v4231
    %v4233 = vmul.f32 %v4217, 1.442695
    %v4234 = vpow.pop %v4233
    %v4235 = vmul.f32 %v4218, 1.442695
    %v4236 = vpow.pop %v4235
    %v4237 = vmul.f32 %v4219, 1.442695
    %v4238 = vpow.pop %v4237
    %v4239 = vmul.f32 %v4220, 1.442695
    %v4240 = vpow.pop %v4239
    %v4241 = vmul.f32 %v4221, 1.442695
    %v4242 = vpow.pop %v4241
    %v4243 = vmul.f32 %v4222, 1.442695
    %v4244 = vpow.pop %v4243
    %v4245 = vmul.f32 %v4223, 1.442695
    %v4246 = vpow.pop %v4245
    %v4247 = vmul.f32 %v4224, 1.442695
    %v4248 = vpow.pop %v4247
    %v4249 = vmul.f32 %v4225, 1.442695
    %v4250 = vpow.pop %v4249
    %v4251 = vmul.f32 %v4226, 1.442695
    %v4252 = vpow.pop %v4251
    %v4253 = vmul.f32 %v4227, 1.442695
    %v4254 = vpow.pop %v4253
    %v4255 = vmul.f32 %v4228, 1.442695
    %v4256 = vpow.pop %v4255
    %v4257 = vadd.f32 %v4230, 1.0
    %v4258 = vadd.f32 %v4232, 1.0
    %v4259 = vadd.f32 %v4234, 1.0
    %v4260 = vadd.f32 %v4236, 1.0
    %v4261 = vadd.f32 %v4238, 1.0
    %v4262 = vadd.f32 %v4240, 1.0
    %v4263 = vadd.f32 %v4242, 1.0
    %v4264 = vadd.f32 %v4244, 1.0
    %v4265 = vadd.f32 %v4246, 1.0
    %v4266 = vadd.f32 %v4248, 1.0
    %v4267 = vadd.f32 %v4250, 1.0
    %v4268 = vadd.f32 %v4252, 1.0
    %v4269 = vadd.f32 %v4254, 1.0
    %v4270 = vadd.f32 %v4256, 1.0
    %v4271 = vrcp.pop %v4257
    %v4272 = vmul.f32 1.0, %v4271
    %v4273 = vrcp.pop %v4258
    %v4274 = vmul.f32 1.0, %v4273
    %v4275 = vrcp.pop %v4259
    %v4276 = vmul.f32 1.0, %v4275
    %v4277 = vrcp.pop %v4260
    %v4278 = vmul.f32 1.0, %v4277
    %v4279 = vrcp.pop %v4261
    %v4280 = vmul.f32 1.0, %v4279
    %v4281 = vrcp.pop %v4262
    %v4282 = vmul.f32 1.0, %v4281
    %v4283 = vrcp.pop %v4263
    %v4284 = vmul.f32 1.0, %v4283
    %v4285 = vrcp.pop %v4264
    %v4286 = vmul.f32 1.0, %v4285
    %v4287 = vrcp.pop %v4265
    %v4288 = vmul.f32 1.0, %v4287
    %v4289 = vrcp.pop %v4266
    %v4290 = vmul.f32 1.0, %v4289
    %v4291 = vrcp.pop %v4267
    %v4292 = vmul.f32 1.0, %v4291
    %v4293 = vrcp.pop %v4268
    %v4294 = vmul.f32 1.0, %v4293
    %v4295 = vrcp.pop %v4269
    %v4296 = vmul.f32 1.0, %v4295
    %v4297 = vrcp.pop %v4270
    %v4298 = vmul.f32 1.0, %v4297
    %4299 = vst [vmem:[#allocation2] sm:$0xff] %v4272
    %4300 = vst [vmem:[#allocation2 + $0x8] sm:$0xff] %v4274
    %4301 = vst [vmem:[#allocation2 + $0x10] sm:$0xff] %v4276
    %4302 = vst [vmem:[#allocation2 + $0x18] sm:$0xff] %v4278
    %4303 = vst [vmem:[#allocation2 + $0x20] sm:$0xff] %v4280
    %4304 = vst [vmem:[#allocation2 + $0x28] sm:$0xff] %v4282
    %4305 = vst.msk [vmem:[#allocation2 + $0x30] sm:$0xff] %vm1259, %v4284
    %4306 = vst [vmem:[#allocation2 + $0x38] sm:$0xff] %v4286
    %4307 = vst [vmem:[#allocation2 + $0x40] sm:$0xff] %v4288
    %4308 = vst [vmem:[#allocation2 + $0x48] sm:$0xff] %v4290
    %4309 = vst [vmem:[#allocation2 + $0x50] sm:$0xff] %v4292
    %4310 = vst [vmem:[#allocation2 + $0x58] sm:$0xff] %v4294
    %4311 = vst [vmem:[#allocation2 + $0x60] sm:$0xff] %v4296
    %4312 = vst.msk [vmem:[#allocation2 + $0x68] sm:$0xff] %vm1259, %v4298
    // Predicated region
    $region42: #{tpu_custom_call.1} parent=1 // pred_check
      _
    $region43: #{tpu_custom_call.1} parent=1 // pred_check_branch
      %4314 = sbr.rel (0) target = $region45
    $region44: #{tpu_custom_call.1} parent=1 // pred_region
      %s4316 = ssub.s32 1792, 1792
      %4317 = vsyncadd [#allocation3], %s4316
      %s4318 = sshll.u32 [#allocation2], 4
      %s4319 = int_to_ptr.vmem [resolvable:$true] %s4318
      %4324 = dma.vmem_to_hbm [thread:$0]  %s4319, 1792, %s10, [#allocation3], 896, 896, 56
    $region45: #{tpu_custom_call.1} parent=1 // pred_fallthru
      _
    // Predicated region
    $region46: #{tpu_custom_call.1} parent=1 // pred_check
      _
    $region47: #{tpu_custom_call.1} parent=1 // pred_check_branch
      %4326 = sbr.rel (0) target = $region49
    $region48: #{tpu_custom_call.1} parent=1 // pred_region
      %s4328 = ssub.s32 512, 512
      %4329 = vsyncadd [#allocation5], %s4328
      %s4330 = sshll.u32 [#allocation4], 4
      %s4331 = int_to_ptr.vmem [resolvable:$true] %s4330
      %4336 = dma.vmem_to_hbm [thread:$0]  %s4331, 512, %s11, [#allocation5], 256, 256, 16
    $region49: #{tpu_custom_call.1} parent=1 // pred_fallthru
      _
    // Predicated region
    $region50: #{tpu_custom_call.1} parent=1 // pred_check
      _
    $region51: #{tpu_custom_call.1} parent=1 // pred_check_branch
      %4338 = sbr.rel (0) target = $region53
    $region52: #{tpu_custom_call.1} parent=1 // pred_region
      %4339 = dma.done [#allocation3], 1792
    $region53: #{tpu_custom_call.1} parent=1 // pred_fallthru
      _
    // Predicated region
    $region54: #{tpu_custom_call.1} parent=1 // pred_check
      _
    $region55: #{tpu_custom_call.1} parent=1 // pred_check_branch
      %4341 = sbr.rel (0) target = $region57
    $region56: #{tpu_custom_call.1} parent=1 // pred_region
      %4342 = dma.done [#allocation5], 512
    $region57: #{tpu_custom_call.1} parent=1 // pred_fallthru
      _
    %4343 = vsyncpa [#allocation3], 1
    %4344 = vsyncpa [#allocation5], 1

</llo_original>
